<compile_context>
chip_gen: v6e
topology: v6e:2x2x1
jax: 0.10.0
libtpu: 0.0.40
codegen_flags: <defaults>
</compile_context>

<pallas_src>
import functools
import math

import jax
import jax.numpy as jnp
from jax import lax
from jax.experimental import pallas as pl
from jax.experimental.pallas import tpu as pltpu

PAD_ID = 1
ACT_DTYPE = jnp.bfloat16
VMEM_LIMIT = 48 * 1024 * 1024  # fits v7x's 64 MiB physical VMEM with headroom


def _pick_tile(dim, target, align):
    """Largest tile <= target that divides dim and is a multiple of align.

    Falls back to the full dim (always a legal block shape)."""
    if dim <= target:
        return dim
    t = (min(target, dim) // align) * align
    while t >= align:
        if dim % t == 0:
            return t
        t -= align
    return dim


def _erf(x):
    # Abramowitz & Stegun 7.1.26, |error| <= 1.5e-7 -> exact-erf GELU to bf16
    # precision without relying on an erf lowering in Mosaic (exp/abs/where only).
    p = 0.3275911
    a1, a2, a3, a4, a5 = (0.254829592, -0.284496736, 1.421413741,
                          -1.453152027, 1.061405429)
    ax = jnp.abs(x)
    t = 1.0 / (1.0 + p * ax)
    poly = ((((a5 * t + a4) * t + a3) * t + a2) * t + a1) * t
    y = 1.0 - poly * jnp.exp(-ax * ax)
    return jnp.where(x >= 0.0, y, -y)


def _gelu_exact(x):
    return 0.5 * x * (1.0 + _erf(x * 0.7071067811865476))


# ----------------------------- dense (resident-weight matmul) ----------------

def _dense_kernel(x_ref, w_ref, b_ref, o_ref, *, activation):
    y = jnp.dot(x_ref[...], w_ref[...], preferred_element_type=jnp.float32)
    y = y + b_ref[...]
    if activation == "gelu":
        y = _gelu_exact(y)           # exact (erf) GELU, matches HF RoBERTa
    o_ref[...] = y.astype(o_ref.dtype)


def dense(x, w, b, activation="none", tm=512):
    """x:(M,K) @ w:(K,N) + b:(N,) -> (M,N), weight fully VMEM-resident.

    tk=K / tn=N: the (K,N) weight and (1,N) bias block indices are constant
    across the (M//tm,) grid, so Pallas DMAs them from HBM exactly once and
    no K-accumulator scratch / init+finalize phases are needed.
    """
    M, K = x.shape
    N = w.shape[1]
    tm = _pick_tile(M, tm, 8)
    grid = (M // tm,)
    cost = pl.CostEstimate(
        flops=2 * M * N * K,
        transcendentals=(M * N if activation == "gelu" else 0),
        bytes_accessed=int(x.size) * x.dtype.itemsize
        + int(w.size) * w.dtype.itemsize
        + 4 * N
        + M * N * jnp.dtype(ACT_DTYPE).itemsize,
    )
    return pl.pallas_call(
        functools.partial(_dense_kernel, activation=activation),
        out_shape=jax.ShapeDtypeStruct((M, N), ACT_DTYPE),
        grid=grid,
        in_specs=[
            pl.BlockSpec((tm, K), lambda i: (i, 0)),
            pl.BlockSpec((K, N), lambda i: (0, 0)),   # resident weight
            pl.BlockSpec((1, N), lambda i: (0, 0)),   # resident bias
        ],
        out_specs=pl.BlockSpec((tm, N), lambda i: (i, 0)),
        compiler_params=pltpu.CompilerParams(
            dimension_semantics=("parallel",),
            vmem_limit_bytes=VMEM_LIMIT),
        cost_estimate=cost,
    )(x, w, b.reshape(1, N))


# --------------------- dense + residual + LayerNorm (fused) ------------------

def _dense_res_ln_kernel(x_ref, w_ref, b_ref, r_ref, g_ref, beta_ref, o_ref, *, eps):
    y = jnp.dot(x_ref[...], w_ref[...], preferred_element_type=jnp.float32)
    y = y + b_ref[...] + r_ref[...].astype(jnp.float32)
    mean = jnp.mean(y, axis=-1, keepdims=True)
    var = jnp.mean((y - mean) ** 2, axis=-1, keepdims=True)
    inv = lax.rsqrt(var + eps)
    o_ref[...] = ((y - mean) * inv * g_ref[...] + beta_ref[...]).astype(o_ref.dtype)


def dense_res_ln(x, w, b, residual, g, beta, eps=1e-5, tm=512):
    """Fused (x @ w + b) + residual -> LayerNorm, weight VMEM-resident.

    Requires tn = N = full row width (true for the wo / w2 projections where
    N == H); saves a full (M, H) bf16 activation write+read to HBM per call.
    """
    M, K = x.shape
    N = w.shape[1]
    tm = _pick_tile(M, tm, 8)
    grid = (M // tm,)
    cost = pl.CostEstimate(
        flops=2 * M * N * K + 10 * M * N,
        transcendentals=M,
        bytes_accessed=int(x.size) * x.dtype.itemsize
        + int(w.size) * w.dtype.itemsize
        + int(residual.size) * residual.dtype.itemsize
        + 12 * N
        + M * N * jnp.dtype(ACT_DTYPE).itemsize,
    )
    return pl.pallas_call(
        functools.partial(_dense_res_ln_kernel, eps=eps),
        out_shape=jax.ShapeDtypeStruct((M, N), ACT_DTYPE),
        grid=grid,
        in_specs=[
            pl.BlockSpec((tm, K), lambda i: (i, 0)),
            pl.BlockSpec((K, N), lambda i: (0, 0)),   # resident weight
            pl.BlockSpec((1, N), lambda i: (0, 0)),   # resident bias
            pl.BlockSpec((tm, N), lambda i: (i, 0)),  # residual stream
            pl.BlockSpec((1, N), lambda i: (0, 0)),   # LN gamma
            pl.BlockSpec((1, N), lambda i: (0, 0)),   # LN beta
        ],
        out_specs=pl.BlockSpec((tm, N), lambda i: (i, 0)),
        compiler_params=pltpu.CompilerParams(
            dimension_semantics=("parallel",),
            vmem_limit_bytes=VMEM_LIMIT),
        cost_estimate=cost,
    )(x, w, b.reshape(1, N), residual, g.reshape(1, N), beta.reshape(1, N))


# ----------------------------- layernorm (embeddings) ------------------------

def _layernorm_kernel(x_ref, g_ref, b_ref, o_ref, *, eps):
    x = x_ref[...].astype(jnp.float32)
    mean = jnp.mean(x, axis=-1, keepdims=True)
    var = jnp.mean((x - mean) ** 2, axis=-1, keepdims=True)
    inv = lax.rsqrt(var + eps)
    o_ref[...] = ((x - mean) * inv * g_ref[...] + b_ref[...]).astype(o_ref.dtype)


def layernorm(x, g, b, eps=1e-5, tm=512):
    """Row-tiled LayerNorm over (M, H).  Only used for the embedding LN; the
    per-layer LayerNorms are fused into the wo/w2 projection epilogues."""
    M, H = x.shape
    tm = _pick_tile(M, tm, 8)
    return pl.pallas_call(
        functools.partial(_layernorm_kernel, eps=eps),
        out_shape=jax.ShapeDtypeStruct((M, H), ACT_DTYPE),
        grid=(M // tm,),
        in_specs=[pl.BlockSpec((tm, H), lambda i: (i, 0)),
                  pl.BlockSpec((1, H), lambda i: (0, 0)),
                  pl.BlockSpec((1, H), lambda i: (0, 0))],
        out_specs=pl.BlockSpec((tm, H), lambda i: (i, 0)),
        compiler_params=pltpu.CompilerParams(
            dimension_semantics=("parallel",),
            vmem_limit_bytes=VMEM_LIMIT),
    )(x, g.reshape(1, H), b.reshape(1, H))


# ----------------------------- attention -------------------------------------

def _attn_kernel(q_ref, k_ref, v_ref, bias_ref, o_ref, *, n_heads, scale):
    q = q_ref[0]        # (L, H) lane-dense slab holding all heads of one item
    k = k_ref[0]        # (L, H)
    v = v_ref[0]        # (L, H)
    bias = bias_ref[0]  # (1, L) additive key mask, f32
    Dh = q.shape[-1] // n_heads
    outs = []
    for h in range(n_heads):                 # static unroll: all heads / step
        sl = slice(h * Dh, (h + 1) * Dh)
        qh, kh, vh = q[:, sl], k[:, sl], v[:, sl]
        # Contract the last dims directly (no explicit XLU transpose of K).
        s = lax.dot_general(qh, kh, (((1,), (1,)), ((), ())),
                            preferred_element_type=jnp.float32)
        s = s * scale + bias
        m = jnp.max(s, axis=-1, keepdims=True)
        p = jnp.exp(s - m)
        p = p / jnp.sum(p, axis=-1, keepdims=True)   # exact softmax rows
        outs.append(jnp.dot(p.astype(vh.dtype), vh,
                            preferred_element_type=jnp.float32))
    # Single full-width (lane-dense) store of all head outputs.
    o_ref[0] = jnp.concatenate(outs, axis=-1).astype(o_ref.dtype)


def attention(qkv, mask_bias, *, n_heads):
    """qkv: (B, L, 3H) packed Q|K|V; mask_bias: (B, 1, L) additive f32 bias.

    One grid step per batch element processes ALL heads; Q/K/V/output blocks
    are full-width (1, L, H) slabs (lane-dense even when Dh=64), so per-step
    fixed cost is amortized over n_heads * L * L * Dh FLOPs and no per-head
    (L, Dh<128) HBM blocks are needed.
    TODO(synk): for long sequences (L >= ~1024) switch to a flash-style
    online-softmax with a KV grid axis to bound the (L, L) f32 score tiles.
    """
    B, L, H3 = qkv.shape
    H = H3 // 3
    Dh = H // n_heads
    scale = 1.0 / math.sqrt(Dh)
    cost = pl.CostEstimate(
        flops=4 * B * L * L * H,
        transcendentals=B * n_heads * L * L,
        bytes_accessed=int(qkv.size) * qkv.dtype.itemsize
        + int(mask_bias.size) * 4
        + B * L * H * jnp.dtype(ACT_DTYPE).itemsize,
    )
    return pl.pallas_call(
        functools.partial(_attn_kernel, n_heads=n_heads, scale=scale),
        out_shape=jax.ShapeDtypeStruct((B, L, H), ACT_DTYPE),
        grid=(B,),
        in_specs=[
            pl.BlockSpec((1, L, H), lambda b: (b, 0, 0)),   # Q slab
            pl.BlockSpec((1, L, H), lambda b: (b, 0, 1)),   # K slab
            pl.BlockSpec((1, L, H), lambda b: (b, 0, 2)),   # V slab
            pl.BlockSpec((1, 1, L), lambda b: (b, 0, 0)),   # rank-1 key mask
        ],
        out_specs=pl.BlockSpec((1, L, H), lambda b: (b, 0, 0)),
        compiler_params=pltpu.CompilerParams(
            dimension_semantics=("parallel",),
            vmem_limit_bytes=VMEM_LIMIT),
        cost_estimate=cost,
    )(qkv, qkv, qkv, mask_bias)


# ----------------------------- pool + L2 normalize ---------------------------

def _pool_norm_kernel(h_ref, m_ref, o_ref):
    h = h_ref[...].astype(jnp.float32)   # (tb, L, H)
    m = m_ref[...]                       # (tb, L, 1) f32 mask
    s = jnp.sum(h * m, axis=1)           # masked sum over sequence
    cnt = jnp.maximum(jnp.sum(m, axis=1), 1.0)   # guard all-pad rows
    pooled = s / cnt
    norm = jnp.sqrt(jnp.sum(pooled * pooled, axis=-1, keepdims=True))
    o_ref[...] = pooled / jnp.maximum(norm, 1e-12)   # F.normalize(p=2, dim=1)


def pool_and_normalize(hidden, mask_f, tb=8):
    # Runs once per forward; kept simple (review: low priority).
    B, L, H = hidden.shape
    tb = _pick_tile(B, tb, 8)
    grid = (B // tb,)
    return pl.pallas_call(
        _pool_norm_kernel,
        out_shape=jax.ShapeDtypeStruct((B, H), jnp.float32),
        grid=grid,
        in_specs=[
            pl.BlockSpec((tb, L, H), lambda i: (i, 0, 0)),
            pl.BlockSpec((tb, L, 1), lambda i: (i, 0, 0)),
        ],
        out_specs=pl.BlockSpec((tb, H), lambda i: (i, 0)),
        compiler_params=pltpu.CompilerParams(
            dimension_semantics=("parallel",),
            vmem_limit_bytes=VMEM_LIMIT),
    )(hidden, mask_f)


# ----------------------------- encoder (glue) --------------------------------

def transformer_layer(lp, x2, mask_bias, n_heads, B, L, H):
    # x2: (B*L, H) residual stream.
    # Fused QKV projection: one (H, 3H) resident-weight matmul.
    qkv = dense(x2, lp["wqkv"], lp["bqkv"]).reshape(B, L, 3 * H)

    # All heads of one batch element per grid step.
    a = attention(qkv, mask_bias, n_heads=n_heads).reshape(B * L, H)

    # Attention-output projection + residual + LN1 fused -> no HBM round trip.
    x2 = dense_res_ln(a, lp["wo"], lp["bo"], x2, lp["ln1_g"], lp["ln1_b"])

    # FFN up (exact GELU fused), then FFN down + residual + LN2 fused.
    ff = dense(x2, lp["w1"], lp["b1"], activation="gelu")
    x2 = dense_res_ln(ff, lp["w2"], lp["b2"], x2, lp["ln2_g"], lp["ln2_b"])
    return x2


def encoder_forward(params, ids, mask, n_heads):
    B, L = ids.shape
    H = params["word_emb"].shape[1]

    # RoBERTa pad-aware position ids (offset by padding_idx); gathers are glue.
    mask_i = mask.astype(jnp.int32)
    pos_ids = jnp.cumsum(mask_i, axis=1) * mask_i + PAD_ID
    x = params["word_emb"][ids] + params["pos_emb"][pos_ids]
    x2 = layernorm(x.reshape(B * L, H), params["emb_ln_g"], params["emb_ln_b"])

    # Rank-1 additive key mask (B, 1, L): no (B*nH, L, L) materialization.
    mask_bias = jnp.where(mask, 0.0, -1e9).astype(jnp.float32)[:, None, :]

    for lp in params["layers"]:
        x2 = transformer_layer(lp, x2, mask_bias, n_heads, B, L, H)
    return x2.reshape(B, L, H)


def model_forward(params, code_inputs=None, nl_inputs=None, *, n_heads=4):
    ids = code_inputs if code_inputs is not None else nl_inputs
    mask = ids != PAD_ID                                   # ids.ne(1)
    hidden = encoder_forward(params, ids, mask, n_heads)   # encoder(...)[0]
    mask_f = mask.astype(jnp.float32)[:, :, None]          # (B, L, 1)
    return pool_and_normalize(hidden, mask_f)              # masked mean + L2 norm


# ----------------------------- params init -----------------------------------

def init_params(key, vocab, max_len, hidden, ffn, num_layers):
    def normal(k, shape, scale=0.02):
        return (scale * jax.random.normal(k, shape, dtype=jnp.float32)).astype(ACT_DTYPE)

    keys = jax.random.split(key, 2 + num_layers)
    params = {
        "word_emb": normal(keys[0], (vocab, hidden)),
        "pos_emb": normal(keys[1], (max_len + 2, hidden)),  # pad-aware pos ids
        "emb_ln_g": jnp.ones((hidden,), jnp.float32),
        "emb_ln_b": jnp.zeros((hidden,), jnp.float32),
        "layers": [],
    }
    for li in range(num_layers):
        lk = jax.random.split(keys[2 + li], 4)
        params["layers"].append({
            "wqkv": normal(lk[0], (hidden, 3 * hidden)),
            "bqkv": jnp.zeros((3 * hidden,), jnp.float32),
            "wo": normal(lk[1], (hidden, hidden)),
            "bo": jnp.zeros((hidden,), jnp.float32),
            "ln1_g": jnp.ones((hidden,), jnp.float32),
            "ln1_b": jnp.zeros((hidden,), jnp.float32),
            "w1": normal(lk[2], (hidden, ffn)), "b1": jnp.zeros((ffn,), jnp.float32),
            "w2": normal(lk[3], (ffn, hidden)), "b2": jnp.zeros((hidden,), jnp.float32),
            "ln2_g": jnp.ones((hidden,), jnp.float32),
            "ln2_b": jnp.zeros((hidden,), jnp.float32),
        })
    return params


# ----------------------------- main -------------------------------------------

if __name__ == "__main__":
    # Small deterministic config: Dh = H / NH = 128 (lane-aligned in-kernel
    # head slices); the attention kernel also handles Dh=64 via static slices.
    B, L, H, NH, FFN, V = 2, 8, 256, 2, 512, 64
    key = jax.random.PRNGKey(0)
    params = init_params(key, vocab=V, max_len=L, hidden=H, ffn=FFN, num_layers=2)

    ids = jax.random.randint(jax.random.fold_in(key, 123), (B, L), 2, V, dtype=jnp.int32)
    ids = ids.at[0, -2:].set(PAD_ID)  # pad tail of first sequence to exercise masking

    fwd = jax.jit(functools.partial(model_forward, n_heads=NH))
    out = jax.block_until_ready(fwd(params, ids))

    assert out.shape == (B, H)
    assert out.dtype == jnp.float32
    # sanity: rows are L2-normalized
    norms = jnp.sqrt(jnp.sum(out * out, axis=1))
    assert bool(jnp.all(jnp.abs(norms - 1.0) < 1e-3))
    print("KERNEL_OK")
</pallas_src>

<mosaic_0001>
module attributes {stable_mosaic.version = 11 : i64} {
  func.func @_layernorm_kernel(%arg0: i32, %arg1: memref<16x256xbf16, #tpu.memory_space<vmem>>, %arg2: memref<1x256xf32, #tpu.memory_space<vmem>>, %arg3: memref<1x256xf32, #tpu.memory_space<vmem>>, %arg4: memref<16x256xbf16, #tpu.memory_space<vmem>>) attributes {dimension_semantics = [#tpu.dimension_semantics<parallel>], iteration_bounds = array<i64: 1>, scalar_prefetch = 0 : i64, scratch_operands = 0 : i64, tpu.core_type = #tpu.core_type<tc>, window_params = [{transform_indices = @transform_0, window_bounds = array<i64: 16, 256>}, {pipeline_mode = #tpu.pipeline_mode<synchronous>, transform_indices = @transform_1, window_bounds = array<i64: 1, 256>}, {pipeline_mode = #tpu.pipeline_mode<synchronous>, transform_indices = @transform_2, window_bounds = array<i64: 1, 256>}, {transform_indices = @transform_3, window_bounds = array<i64: 16, 256>}]} {
    %c0 = arith.constant 0 : index
    %c0_0 = arith.constant 0 : index
    %0 = vector.load %arg1[%c0, %c0_0] : memref<16x256xbf16, #tpu.memory_space<vmem>>, vector<16x256xbf16>
    %1 = arith.extf %0 : vector<16x256xbf16> to vector<16x256xf32>
    %cst = arith.constant dense<0.000000e+00> : vector<16xf32>
    %2 = vector.multi_reduction <add>, %1, %cst [1] : vector<16x256xf32> to vector<16xf32>
    %3 = vector.shape_cast %2 : vector<16xf32> to vector<16x1xf32>
    %cst_1 = arith.constant 2.560000e+02 : f32
    %4 = vector.broadcast %cst_1 : f32 to vector<16x1xf32>
    %5 = arith.divf %3, %4 : vector<16x1xf32>
    %6 = vector.broadcast %5 : vector<16x1xf32> to vector<16x256xf32>
    %7 = arith.subf %1, %6 : vector<16x256xf32>
    %8 = arith.mulf %7, %7 : vector<16x256xf32>
    %cst_2 = arith.constant dense<0.000000e+00> : vector<16xf32>
    %9 = vector.multi_reduction <add>, %8, %cst_2 [1] : vector<16x256xf32> to vector<16xf32>
    %10 = vector.shape_cast %9 : vector<16xf32> to vector<16x1xf32>
    %cst_3 = arith.constant 2.560000e+02 : f32
    %11 = vector.broadcast %cst_3 : f32 to vector<16x1xf32>
    %12 = arith.divf %10, %11 : vector<16x1xf32>
    %cst_4 = arith.constant 9.99999974E-6 : f32
    %13 = vector.broadcast %cst_4 : f32 to vector<16x1xf32>
    %14 = arith.addf %12, %13 : vector<16x1xf32>
    %15 = math.rsqrt %14 : vector<16x1xf32>
    %16 = vector.broadcast %5 : vector<16x1xf32> to vector<16x256xf32>
    %17 = arith.subf %1, %16 : vector<16x256xf32>
    %18 = vector.broadcast %15 : vector<16x1xf32> to vector<16x256xf32>
    %19 = arith.mulf %17, %18 : vector<16x256xf32>
    %c0_5 = arith.constant 0 : index
    %c0_6 = arith.constant 0 : index
    %20 = vector.load %arg2[%c0_5, %c0_6] : memref<1x256xf32, #tpu.memory_space<vmem>>, vector<1x256xf32>
    %21 = vector.broadcast %20 : vector<1x256xf32> to vector<16x256xf32>
    %22 = arith.mulf %19, %21 : vector<16x256xf32>
    %c0_7 = arith.constant 0 : index
    %c0_8 = arith.constant 0 : index
    %23 = vector.load %arg3[%c0_7, %c0_8] : memref<1x256xf32, #tpu.memory_space<vmem>>, vector<1x256xf32>
    %24 = vector.broadcast %23 : vector<1x256xf32> to vector<16x256xf32>
    %25 = arith.addf %22, %24 : vector<16x256xf32>
    %26 = arith.truncf %25 : vector<16x256xf32> to vector<16x256xbf16>
    %c0_9 = arith.constant 0 : index
    %c0_10 = arith.constant 0 : index
    %27 = vector.load %arg4[%c0_9, %c0_10] : memref<16x256xbf16, #tpu.memory_space<vmem>>, vector<16x256xbf16>
    tpu.vector_store %arg4[%c0_9, %c0_10], %26 {strides = array<i32>} : memref<16x256xbf16, #tpu.memory_space<vmem>>, vector<16x256xbf16>,
    return
  }
  func.func @transform_0(%arg0: i32) -> (i32, i32) {
    %c0_i32 = arith.constant 0 : i32
    %c0_i32_0 = arith.constant 0 : i32
    return %arg0, %c0_i32 : i32, i32
  }
  func.func @transform_1(%arg0: i32) -> (i32, i32) {
    %c0_i32 = arith.constant 0 : i32
    %c0_i32_0 = arith.constant 0 : i32
    %c0_i32_1 = arith.constant 0 : i32
    return %c0_i32, %c0_i32_0 : i32, i32
  }
  func.func @transform_2(%arg0: i32) -> (i32, i32) {
    %c0_i32 = arith.constant 0 : i32
    %c0_i32_0 = arith.constant 0 : i32
    %c0_i32_1 = arith.constant 0 : i32
    return %c0_i32, %c0_i32_0 : i32, i32
  }
  func.func @transform_3(%arg0: i32) -> (i32, i32) {
    %c0_i32 = arith.constant 0 : i32
    %c0_i32_0 = arith.constant 0 : i32
    return %arg0, %c0_i32 : i32, i32
  }
}

module attributes {stable_mosaic.version = 11 : i64} {
  func.func @_dense_kernel(%arg0: i32, %arg1: memref<16x256xbf16, #tpu.memory_space<vmem>>, %arg2: memref<256x768xbf16, #tpu.memory_space<vmem>>, %arg3: memref<1x768xf32, #tpu.memory_space<vmem>>, %arg4: memref<16x768xbf16, #tpu.memory_space<vmem>>) attributes {dimension_semantics = [#tpu.dimension_semantics<parallel>], iteration_bounds = array<i64: 1>, scalar_prefetch = 0 : i64, scratch_operands = 0 : i64, tpu.core_type = #tpu.core_type<tc>, window_params = [{transform_indices = @transform_0, window_bounds = array<i64: 16, 256>}, {pipeline_mode = #tpu.pipeline_mode<synchronous>, transform_indices = @transform_1, window_bounds = array<i64: 256, 768>}, {pipeline_mode = #tpu.pipeline_mode<synchronous>, transform_indices = @transform_2, window_bounds = array<i64: 1, 768>}, {transform_indices = @transform_3, window_bounds = array<i64: 16, 768>}]} {
    %c0 = arith.constant 0 : index
    %c0_0 = arith.constant 0 : index
    %0 = vector.load %arg1[%c0, %c0_0] : memref<16x256xbf16, #tpu.memory_space<vmem>>, vector<16x256xbf16>
    %c0_1 = arith.constant 0 : index
    %c0_2 = arith.constant 0 : index
    %1 = vector.load %arg2[%c0_1, %c0_2] : memref<256x768xbf16, #tpu.memory_space<vmem>>, vector<256x768xbf16>
    %cst = arith.constant dense<0.000000e+00> : vector<16x768xf32>
    %2 = tpu.matmul %0, %1, %cst {dimension_numbers = #tpu.dot_dimension_numbers<[1], [0], [0], [1], [0, 0, 1, 1], [], []>} : vector<16x256xbf16>, vector<256x768xbf16>, vector<16x768xf32> -> vector<16x768xf32>
    %c0_3 = arith.constant 0 : index
    %c0_4 = arith.constant 0 : index
    %3 = vector.load %arg3[%c0_3, %c0_4] : memref<1x768xf32, #tpu.memory_space<vmem>>, vector<1x768xf32>
    %4 = vector.broadcast %3 : vector<1x768xf32> to vector<16x768xf32>
    %5 = arith.addf %2, %4 : vector<16x768xf32>
    %6 = arith.truncf %5 : vector<16x768xf32> to vector<16x768xbf16>
    %c0_5 = arith.constant 0 : index
    %c0_6 = arith.constant 0 : index
    %7 = vector.load %arg4[%c0_5, %c0_6] : memref<16x768xbf16, #tpu.memory_space<vmem>>, vector<16x768xbf16>
    tpu.vector_store %arg4[%c0_5, %c0_6], %6 {strides = array<i32>} : memref<16x768xbf16, #tpu.memory_space<vmem>>, vector<16x768xbf16>,
    return
  }
  func.func @transform_0(%arg0: i32) -> (i32, i32) {
    %c0_i32 = arith.constant 0 : i32
    %c0_i32_0 = arith.constant 0 : i32
    return %arg0, %c0_i32 : i32, i32
  }
  func.func @transform_1(%arg0: i32) -> (i32, i32) {
    %c0_i32 = arith.constant 0 : i32
    %c0_i32_0 = arith.constant 0 : i32
    %c0_i32_1 = arith.constant 0 : i32
    return %c0_i32, %c0_i32_0 : i32, i32
  }
  func.func @transform_2(%arg0: i32) -> (i32, i32) {
    %c0_i32 = arith.constant 0 : i32
    %c0_i32_0 = arith.constant 0 : i32
    %c0_i32_1 = arith.constant 0 : i32
    return %c0_i32, %c0_i32_0 : i32, i32
  }
  func.func @transform_3(%arg0: i32) -> (i32, i32) {
    %c0_i32 = arith.constant 0 : i32
    %c0_i32_0 = arith.constant 0 : i32
    return %arg0, %c0_i32 : i32, i32
  }
}

module attributes {stable_mosaic.version = 11 : i64} {
  func.func @_attn_kernel(%arg0: i32, %arg1: memref<1x8x256xbf16, #tpu.memory_space<vmem>>, %arg2: memref<1x8x256xbf16, #tpu.memory_space<vmem>>, %arg3: memref<1x8x256xbf16, #tpu.memory_space<vmem>>, %arg4: memref<1x1x8xf32, #tpu.memory_space<vmem>>, %arg5: memref<1x8x256xbf16, #tpu.memory_space<vmem>>) attributes {dimension_semantics = [#tpu.dimension_semantics<parallel>], iteration_bounds = array<i64: 2>, scalar_prefetch = 0 : i64, scratch_operands = 0 : i64, tpu.core_type = #tpu.core_type<tc>, window_params = [{transform_indices = @transform_0, window_bounds = array<i64: 1, 8, 256>}, {transform_indices = @transform_1, window_bounds = array<i64: 1, 8, 256>}, {transform_indices = @transform_2, window_bounds = array<i64: 1, 8, 256>}, {transform_indices = @transform_3, window_bounds = array<i64: 1, 1, 8>}, {transform_indices = @transform_4, window_bounds = array<i64: 1, 8, 256>}]} {
    %c0 = arith.constant 0 : index
    %c0_0 = arith.constant 0 : index
    %c0_1 = arith.constant 0 : index
    %0 = vector.load %arg1[%c0, %c0_0, %c0_1] : memref<1x8x256xbf16, #tpu.memory_space<vmem>>, vector<1x8x256xbf16>
    %1 = vector.shape_cast %0 : vector<1x8x256xbf16> to vector<8x256xbf16>
    %c0_2 = arith.constant 0 : index
    %c0_3 = arith.constant 0 : index
    %c0_4 = arith.constant 0 : index
    %2 = vector.load %arg2[%c0_2, %c0_3, %c0_4] : memref<1x8x256xbf16, #tpu.memory_space<vmem>>, vector<1x8x256xbf16>
    %3 = vector.shape_cast %2 : vector<1x8x256xbf16> to vector<8x256xbf16>
    %c0_5 = arith.constant 0 : index
    %c0_6 = arith.constant 0 : index
    %c0_7 = arith.constant 0 : index
    %4 = vector.load %arg3[%c0_5, %c0_6, %c0_7] : memref<1x8x256xbf16, #tpu.memory_space<vmem>>, vector<1x8x256xbf16>
    %5 = vector.shape_cast %4 : vector<1x8x256xbf16> to vector<8x256xbf16>
    %c0_8 = arith.constant 0 : index
    %c0_9 = arith.constant 0 : index
    %c0_10 = arith.constant 0 : index
    %6 = vector.load %arg4[%c0_8, %c0_9, %c0_10] : memref<1x1x8xf32, #tpu.memory_space<vmem>>, vector<1x1x8xf32>
    %7 = vector.shape_cast %6 : vector<1x1x8xf32> to vector<1x8xf32>
    %8 = vector.extract_strided_slice %1 {offsets = [0, 0], sizes = [8, 128], strides = [1, 1]} : vector<8x256xbf16> to vector<8x128xbf16>
    %9 = vector.extract_strided_slice %3 {offsets = [0, 0], sizes = [8, 128], strides = [1, 1]} : vector<8x256xbf16> to vector<8x128xbf16>
    %10 = vector.extract_strided_slice %5 {offsets = [0, 0], sizes = [8, 128], strides = [1, 1]} : vector<8x256xbf16> to vector<8x128xbf16>
    %cst = arith.constant dense<0.000000e+00> : vector<8x8xf32>
    %11 = tpu.matmul %8, %9, %cst {dimension_numbers = #tpu.dot_dimension_numbers<[1], [1], [0], [0], [0, 0, 1, 0], [], []>} : vector<8x128xbf16>, vector<8x128xbf16>, vector<8x8xf32> -> vector<8x8xf32>
    %cst_11 = arith.constant 0.0883883461 : f32
    %12 = vector.broadcast %cst_11 : f32 to vector<8x8xf32>
    %13 = arith.mulf %11, %12 : vector<8x8xf32>
    %14 = vector.broadcast %7 : vector<1x8xf32> to vector<8x8xf32>
    %15 = arith.addf %13, %14 : vector<8x8xf32>
    %cst_12 = arith.constant dense<0xFF800000> : vector<8xf32>
    %16 = vector.multi_reduction <maximumf>, %15, %cst_12 [1] : vector<8x8xf32> to vector<8xf32>
    %17 = vector.shape_cast %16 : vector<8xf32> to vector<8x1xf32>
    %18 = vector.broadcast %17 : vector<8x1xf32> to vector<8x8xf32>
    %19 = arith.subf %15, %18 : vector<8x8xf32>
    %20 = math.exp %19 : vector<8x8xf32>
    %cst_13 = arith.constant dense<0.000000e+00> : vector<8xf32>
    %21 = vector.multi_reduction <add>, %20, %cst_13 [1] : vector<8x8xf32> to vector<8xf32>
    %22 = vector.shape_cast %21 : vector<8xf32> to vector<8x1xf32>
    %23 = vector.broadcast %22 : vector<8x1xf32> to vector<8x8xf32>
    %24 = arith.divf %20, %23 : vector<8x8xf32>
    %25 = arith.truncf %24 : vector<8x8xf32> to vector<8x8xbf16>
    %cst_14 = arith.constant dense<0.000000e+00> : vector<8x128xf32>
    %26 = tpu.matmul %25, %10, %cst_14 {dimension_numbers = #tpu.dot_dimension_numbers<[1], [0], [0], [1], [0, 0, 1, 1], [], []>} : vector<8x8xbf16>, vector<8x128xbf16>, vector<8x128xf32> -> vector<8x128xf32>
    %27 = vector.extract_strided_slice %1 {offsets = [0, 128], sizes = [8, 128], strides = [1, 1]} : vector<8x256xbf16> to vector<8x128xbf16>
    %28 = vector.extract_strided_slice %3 {offsets = [0, 128], sizes = [8, 128], strides = [1, 1]} : vector<8x256xbf16> to vector<8x128xbf16>
    %29 = vector.extract_strided_slice %5 {offsets = [0, 128], sizes = [8, 128], strides = [1, 1]} : vector<8x256xbf16> to vector<8x128xbf16>
    %cst_15 = arith.constant dense<0.000000e+00> : vector<8x8xf32>
    %30 = tpu.matmul %27, %28, %cst_15 {dimension_numbers = #tpu.dot_dimension_numbers<[1], [1], [0], [0], [0, 0, 1, 0], [], []>} : vector<8x128xbf16>, vector<8x128xbf16>, vector<8x8xf32> -> vector<8x8xf32>
    %cst_16 = arith.constant 0.0883883461 : f32
    %31 = vector.broadcast %cst_16 : f32 to vector<8x8xf32>
    %32 = arith.mulf %30, %31 : vector<8x8xf32>
    %33 = vector.broadcast %7 : vector<1x8xf32> to vector<8x8xf32>
    %34 = arith.addf %32, %33 : vector<8x8xf32>
    %cst_17 = arith.constant dense<0xFF800000> : vector<8xf32>
    %35 = vector.multi_reduction <maximumf>, %34, %cst_17 [1] : vector<8x8xf32> to vector<8xf32>
    %36 = vector.shape_cast %35 : vector<8xf32> to vector<8x1xf32>
    %37 = vector.broadcast %36 : vector<8x1xf32> to vector<8x8xf32>
    %38 = arith.subf %34, %37 : vector<8x8xf32>
    %39 = math.exp %38 : vector<8x8xf32>
    %cst_18 = arith.constant dense<0.000000e+00> : vector<8xf32>
    %40 = vector.multi_reduction <add>, %39, %cst_18 [1] : vector<8x8xf32> to vector<8xf32>
    %41 = vector.shape_cast %40 : vector<8xf32> to vector<8x1xf32>
    %42 = vector.broadcast %41 : vector<8x1xf32> to vector<8x8xf32>
    %43 = arith.divf %39, %42 : vector<8x8xf32>
    %44 = arith.truncf %43 : vector<8x8xf32> to vector<8x8xbf16>
    %cst_19 = arith.constant dense<0.000000e+00> : vector<8x128xf32>
    %45 = tpu.matmul %44, %29, %cst_19 {dimension_numbers = #tpu.dot_dimension_numbers<[1], [0], [0], [1], [0, 0, 1, 1], [], []>} : vector<8x8xbf16>, vector<8x128xbf16>, vector<8x128xf32> -> vector<8x128xf32>
    %46 = tpu.concatenate %26, %45 in 1 : vector<8x128xf32>, vector<8x128xf32> -> vector<8x256xf32>
    %47 = arith.truncf %46 : vector<8x256xf32> to vector<8x256xbf16>
    %c0_20 = arith.constant 0 : index
    %c0_21 = arith.constant 0 : index
    %c0_22 = arith.constant 0 : index
    %48 = vector.load %arg5[%c0_20, %c0_21, %c0_22] : memref<1x8x256xbf16, #tpu.memory_space<vmem>>, vector<1x8x256xbf16>
    %49 = vector.shape_cast %48 : vector<1x8x256xbf16> to vector<8x256xbf16>
    %50 = vector.shape_cast %47 : vector<8x256xbf16> to vector<1x8x256xbf16>
    tpu.vector_store %arg5[%c0_20, %c0_21, %c0_22], %50 {strides = array<i32>} : memref<1x8x256xbf16, #tpu.memory_space<vmem>>, vector<1x8x256xbf16>,
    return
  }
  func.func @transform_0(%arg0: i32) -> (i32, i32, i32) {
    %c0_i32 = arith.constant 0 : i32
    %c0_i32_0 = arith.constant 0 : i32
    %c0_i32_1 = arith.constant 0 : i32
    return %arg0, %c0_i32, %c0_i32_0 : i32, i32, i32
  }
  func.func @transform_1(%arg0: i32) -> (i32, i32, i32) {
    %c0_i32 = arith.constant 0 : i32
    %c1_i32 = arith.constant 1 : i32
    %c0_i32_0 = arith.constant 0 : i32
    return %arg0, %c0_i32, %c1_i32 : i32, i32, i32
  }
  func.func @transform_2(%arg0: i32) -> (i32, i32, i32) {
    %c0_i32 = arith.constant 0 : i32
    %c2_i32 = arith.constant 2 : i32
    %c0_i32_0 = arith.constant 0 : i32
    return %arg0, %c0_i32, %c2_i32 : i32, i32, i32
  }
  func.func @transform_3(%arg0: i32) -> (i32, i32, i32) {
    %c0_i32 = arith.constant 0 : i32
    %c0_i32_0 = arith.constant 0 : i32
    %c0_i32_1 = arith.constant 0 : i32
    return %arg0, %c0_i32, %c0_i32_0 : i32, i32, i32
  }
  func.func @transform_4(%arg0: i32) -> (i32, i32, i32) {
    %c0_i32 = arith.constant 0 : i32
    %c0_i32_0 = arith.constant 0 : i32
    %c0_i32_1 = arith.constant 0 : i32
    return %arg0, %c0_i32, %c0_i32_0 : i32, i32, i32
  }
}

module attributes {stable_mosaic.version = 11 : i64} {
  func.func @_dense_res_ln_kernel(%arg0: i32, %arg1: memref<16x256xbf16, #tpu.memory_space<vmem>>, %arg2: memref<256x256xbf16, #tpu.memory_space<vmem>>, %arg3: memref<1x256xf32, #tpu.memory_space<vmem>>, %arg4: memref<16x256xbf16, #tpu.memory_space<vmem>>, %arg5: memref<1x256xf32, #tpu.memory_space<vmem>>, %arg6: memref<1x256xf32, #tpu.memory_space<vmem>>, %arg7: memref<16x256xbf16, #tpu.memory_space<vmem>>) attributes {dimension_semantics = [#tpu.dimension_semantics<parallel>], iteration_bounds = array<i64: 1>, scalar_prefetch = 0 : i64, scratch_operands = 0 : i64, tpu.core_type = #tpu.core_type<tc>, window_params = [{transform_indices = @transform_0, window_bounds = array<i64: 16, 256>}, {pipeline_mode = #tpu.pipeline_mode<synchronous>, transform_indices = @transform_1, window_bounds = array<i64: 256, 256>}, {pipeline_mode = #tpu.pipeline_mode<synchronous>, transform_indices = @transform_2, window_bounds = array<i64: 1, 256>}, {transform_indices = @transform_3, window_bounds = array<i64: 16, 256>}, {pipeline_mode = #tpu.pipeline_mode<synchronous>, transform_indices = @transform_4, window_bounds = array<i64: 1, 256>}, {pipeline_mode = #tpu.pipeline_mode<synchronous>, transform_indices = @transform_5, window_bounds = array<i64: 1, 256>}, {transform_indices = @transform_6, window_bounds = array<i64: 16, 256>}]} {
    %c0 = arith.constant 0 : index
    %c0_0 = arith.constant 0 : index
    %0 = vector.load %arg1[%c0, %c0_0] : memref<16x256xbf16, #tpu.memory_space<vmem>>, vector<16x256xbf16>
    %c0_1 = arith.constant 0 : index
    %c0_2 = arith.constant 0 : index
    %1 = vector.load %arg2[%c0_1, %c0_2] : memref<256x256xbf16, #tpu.memory_space<vmem>>, vector<256x256xbf16>
    %cst = arith.constant dense<0.000000e+00> : vector<16x256xf32>
    %2 = tpu.matmul %0, %1, %cst {dimension_numbers = #tpu.dot_dimension_numbers<[1], [0], [0], [1], [0, 0, 1, 1], [], []>} : vector<16x256xbf16>, vector<256x256xbf16>, vector<16x256xf32> -> vector<16x256xf32>
    %c0_3 = arith.constant 0 : index
    %c0_4 = arith.constant 0 : index
    %3 = vector.load %arg3[%c0_3, %c0_4] : memref<1x256xf32, #tpu.memory_space<vmem>>, vector<1x256xf32>
    %4 = vector.broadcast %3 : vector<1x256xf32> to vector<16x256xf32>
    %5 = arith.addf %2, %4 : vector<16x256xf32>
    %c0_5 = arith.constant 0 : index
    %c0_6 = arith.constant 0 : index
    %6 = vector.load %arg4[%c0_5, %c0_6] : memref<16x256xbf16, #tpu.memory_space<vmem>>, vector<16x256xbf16>
    %7 = arith.extf %6 : vector<16x256xbf16> to vector<16x256xf32>
    %8 = arith.addf %5, %7 : vector<16x256xf32>
    %cst_7 = arith.constant dense<0.000000e+00> : vector<16xf32>
    %9 = vector.multi_reduction <add>, %8, %cst_7 [1] : vector<16x256xf32> to vector<16xf32>
    %10 = vector.shape_cast %9 : vector<16xf32> to vector<16x1xf32>
    %cst_8 = arith.constant 2.560000e+02 : f32
    %11 = vector.broadcast %cst_8 : f32 to vector<16x1xf32>
    %12 = arith.divf %10, %11 : vector<16x1xf32>
    %13 = vector.broadcast %12 : vector<16x1xf32> to vector<16x256xf32>
    %14 = arith.subf %8, %13 : vector<16x256xf32>
    %15 = arith.mulf %14, %14 : vector<16x256xf32>
    %cst_9 = arith.constant dense<0.000000e+00> : vector<16xf32>
    %16 = vector.multi_reduction <add>, %15, %cst_9 [1] : vector<16x256xf32> to vector<16xf32>
    %17 = vector.shape_cast %16 : vector<16xf32> to vector<16x1xf32>
    %cst_10 = arith.constant 2.560000e+02 : f32
    %18 = vector.broadcast %cst_10 : f32 to vector<16x1xf32>
    %19 = arith.divf %17, %18 : vector<16x1xf32>
    %cst_11 = arith.constant 9.99999974E-6 : f32
    %20 = vector.broadcast %cst_11 : f32 to vector<16x1xf32>
    %21 = arith.addf %19, %20 : vector<16x1xf32>
    %22 = math.rsqrt %21 : vector<16x1xf32>
    %23 = vector.broadcast %12 : vector<16x1xf32> to vector<16x256xf32>
    %24 = arith.subf %8, %23 : vector<16x256xf32>
    %25 = vector.broadcast %22 : vector<16x1xf32> to vector<16x256xf32>
    %26 = arith.mulf %24, %25 : vector<16x256xf32>
    %c0_12 = arith.constant 0 : index
    %c0_13 = arith.constant 0 : index
    %27 = vector.load %arg5[%c0_12, %c0_13] : memref<1x256xf32, #tpu.memory_space<vmem>>, vector<1x256xf32>
    %28 = vector.broadcast %27 : vector<1x256xf32> to vector<16x256xf32>
    %29 = arith.mulf %26, %28 : vector<16x256xf32>
    %c0_14 = arith.constant 0 : index
    %c0_15 = arith.constant 0 : index
    %30 = vector.load %arg6[%c0_14, %c0_15] : memref<1x256xf32, #tpu.memory_space<vmem>>, vector<1x256xf32>
    %31 = vector.broadcast %30 : vector<1x256xf32> to vector<16x256xf32>
    %32 = arith.addf %29, %31 : vector<16x256xf32>
    %33 = arith.truncf %32 : vector<16x256xf32> to vector<16x256xbf16>
    %c0_16 = arith.constant 0 : index
    %c0_17 = arith.constant 0 : index
    %34 = vector.load %arg7[%c0_16, %c0_17] : memref<16x256xbf16, #tpu.memory_space<vmem>>, vector<16x256xbf16>
    tpu.vector_store %arg7[%c0_16, %c0_17], %33 {strides = array<i32>} : memref<16x256xbf16, #tpu.memory_space<vmem>>, vector<16x256xbf16>,
    return
  }
  func.func @transform_0(%arg0: i32) -> (i32, i32) {
    %c0_i32 = arith.constant 0 : i32
    %c0_i32_0 = arith.constant 0 : i32
    return %arg0, %c0_i32 : i32, i32
  }
  func.func @transform_1(%arg0: i32) -> (i32, i32) {
    %c0_i32 = arith.constant 0 : i32
    %c0_i32_0 = arith.constant 0 : i32
    %c0_i32_1 = arith.constant 0 : i32
    return %c0_i32, %c0_i32_0 : i32, i32
  }
  func.func @transform_2(%arg0: i32) -> (i32, i32) {
    %c0_i32 = arith.constant 0 : i32
    %c0_i32_0 = arith.constant 0 : i32
    %c0_i32_1 = arith.constant 0 : i32
    return %c0_i32, %c0_i32_0 : i32, i32
  }
  func.func @transform_3(%arg0: i32) -> (i32, i32) {
    %c0_i32 = arith.constant 0 : i32
    %c0_i32_0 = arith.constant 0 : i32
    return %arg0, %c0_i32 : i32, i32
  }
  func.func @transform_4(%arg0: i32) -> (i32, i32) {
    %c0_i32 = arith.constant 0 : i32
    %c0_i32_0 = arith.constant 0 : i32
    %c0_i32_1 = arith.constant 0 : i32
    return %c0_i32, %c0_i32_0 : i32, i32
  }
  func.func @transform_5(%arg0: i32) -> (i32, i32) {
    %c0_i32 = arith.constant 0 : i32
    %c0_i32_0 = arith.constant 0 : i32
    %c0_i32_1 = arith.constant 0 : i32
    return %c0_i32, %c0_i32_0 : i32, i32
  }
  func.func @transform_6(%arg0: i32) -> (i32, i32) {
    %c0_i32 = arith.constant 0 : i32
    %c0_i32_0 = arith.constant 0 : i32
    return %arg0, %c0_i32 : i32, i32
  }
}

module attributes {stable_mosaic.version = 11 : i64} {
  func.func @_dense_kernel(%arg0: i32, %arg1: memref<16x256xbf16, #tpu.memory_space<vmem>>, %arg2: memref<256x512xbf16, #tpu.memory_space<vmem>>, %arg3: memref<1x512xf32, #tpu.memory_space<vmem>>, %arg4: memref<16x512xbf16, #tpu.memory_space<vmem>>) attributes {dimension_semantics = [#tpu.dimension_semantics<parallel>], iteration_bounds = array<i64: 1>, scalar_prefetch = 0 : i64, scratch_operands = 0 : i64, tpu.core_type = #tpu.core_type<tc>, window_params = [{transform_indices = @transform_0, window_bounds = array<i64: 16, 256>}, {pipeline_mode = #tpu.pipeline_mode<synchronous>, transform_indices = @transform_1, window_bounds = array<i64: 256, 512>}, {pipeline_mode = #tpu.pipeline_mode<synchronous>, transform_indices = @transform_2, window_bounds = array<i64: 1, 512>}, {transform_indices = @transform_3, window_bounds = array<i64: 16, 512>}]} {
    %c0 = arith.constant 0 : index
    %c0_0 = arith.constant 0 : index
    %0 = vector.load %arg1[%c0, %c0_0] : memref<16x256xbf16, #tpu.memory_space<vmem>>, vector<16x256xbf16>
    %c0_1 = arith.constant 0 : index
    %c0_2 = arith.constant 0 : index
    %1 = vector.load %arg2[%c0_1, %c0_2] : memref<256x512xbf16, #tpu.memory_space<vmem>>, vector<256x512xbf16>
    %cst = arith.constant dense<0.000000e+00> : vector<16x512xf32>
    %2 = tpu.matmul %0, %1, %cst {dimension_numbers = #tpu.dot_dimension_numbers<[1], [0], [0], [1], [0, 0, 1, 1], [], []>} : vector<16x256xbf16>, vector<256x512xbf16>, vector<16x512xf32> -> vector<16x512xf32>
    %c0_3 = arith.constant 0 : index
    %c0_4 = arith.constant 0 : index
    %3 = vector.load %arg3[%c0_3, %c0_4] : memref<1x512xf32, #tpu.memory_space<vmem>>, vector<1x512xf32>
    %4 = vector.broadcast %3 : vector<1x512xf32> to vector<16x512xf32>
    %5 = arith.addf %2, %4 : vector<16x512xf32>
    %cst_5 = arith.constant 5.000000e-01 : f32
    %6 = vector.broadcast %cst_5 : f32 to vector<16x512xf32>
    %7 = arith.mulf %6, %5 : vector<16x512xf32>
    %cst_6 = arith.constant 0.707106769 : f32
    %8 = vector.broadcast %cst_6 : f32 to vector<16x512xf32>
    %9 = arith.mulf %5, %8 : vector<16x512xf32>
    %10 = math.absf %9 : vector<16x512xf32>
    %cst_7 = arith.constant 0.327591091 : f32
    %11 = vector.broadcast %cst_7 : f32 to vector<16x512xf32>
    %12 = arith.mulf %11, %10 : vector<16x512xf32>
    %cst_8 = arith.constant 1.000000e+00 : f32
    %13 = vector.broadcast %cst_8 : f32 to vector<16x512xf32>
    %14 = arith.addf %13, %12 : vector<16x512xf32>
    %cst_9 = arith.constant 1.000000e+00 : f32
    %15 = vector.broadcast %cst_9 : f32 to vector<16x512xf32>
    %16 = arith.divf %15, %14 : vector<16x512xf32>
    %cst_10 = arith.constant 1.06140542 : f32
    %17 = vector.broadcast %cst_10 : f32 to vector<16x512xf32>
    %18 = arith.mulf %17, %16 : vector<16x512xf32>
    %cst_11 = arith.constant -1.45315206 : f32
    %19 = vector.broadcast %cst_11 : f32 to vector<16x512xf32>
    %20 = arith.addf %18, %19 : vector<16x512xf32>
    %21 = arith.mulf %20, %16 : vector<16x512xf32>
    %cst_12 = arith.constant 1.42141378 : f32
    %22 = vector.broadcast %cst_12 : f32 to vector<16x512xf32>
    %23 = arith.addf %21, %22 : vector<16x512xf32>
    %24 = arith.mulf %23, %16 : vector<16x512xf32>
    %cst_13 = arith.constant -0.284496725 : f32
    %25 = vector.broadcast %cst_13 : f32 to vector<16x512xf32>
    %26 = arith.addf %24, %25 : vector<16x512xf32>
    %27 = arith.mulf %26, %16 : vector<16x512xf32>
    %cst_14 = arith.constant 0.254829586 : f32
    %28 = vector.broadcast %cst_14 : f32 to vector<16x512xf32>
    %29 = arith.addf %27, %28 : vector<16x512xf32>
    %30 = arith.mulf %29, %16 : vector<16x512xf32>
    %cst_15 = arith.constant 0.000000e+00 : f32
    %31 = vector.broadcast %cst_15 : f32 to vector<16x512xf32>
    %32 = arith.subf %31, %10 : vector<16x512xf32>
    %33 = arith.mulf %32, %10 : vector<16x512xf32>
    %34 = math.exp %33 : vector<16x512xf32>
    %35 = arith.mulf %30, %34 : vector<16x512xf32>
    %cst_16 = arith.constant 1.000000e+00 : f32
    %36 = vector.broadcast %cst_16 : f32 to vector<16x512xf32>
    %37 = arith.subf %36, %35 : vector<16x512xf32>
    %cst_17 = arith.constant 0.000000e+00 : f32
    %38 = vector.broadcast %cst_17 : f32 to vector<16x512xf32>
    %39 = arith.cmpf oge, %9, %38 : vector<16x512xf32>
    %cst_18 = arith.constant 0.000000e+00 : f32
    %40 = vector.broadcast %cst_18 : f32 to vector<16x512xf32>
    %41 = arith.subf %40, %37 : vector<16x512xf32>
    %42 = arith.select %39, %37, %41 : vector<16x512xi1>, vector<16x512xf32>
    %cst_19 = arith.constant 1.000000e+00 : f32
    %43 = vector.broadcast %cst_19 : f32 to vector<16x512xf32>
    %44 = arith.addf %43, %42 : vector<16x512xf32>
    %45 = arith.mulf %7, %44 : vector<16x512xf32>
    %46 = arith.truncf %45 : vector<16x512xf32> to vector<16x512xbf16>
    %c0_20 = arith.constant 0 : index
    %c0_21 = arith.constant 0 : index
    %47 = vector.load %arg4[%c0_20, %c0_21] : memref<16x512xbf16, #tpu.memory_space<vmem>>, vector<16x512xbf16>
    tpu.vector_store %arg4[%c0_20, %c0_21], %46 {strides = array<i32>} : memref<16x512xbf16, #tpu.memory_space<vmem>>, vector<16x512xbf16>,
    return
  }
  func.func @transform_0(%arg0: i32) -> (i32, i32) {
    %c0_i32 = arith.constant 0 : i32
    %c0_i32_0 = arith.constant 0 : i32
    return %arg0, %c0_i32 : i32, i32
  }
  func.func @transform_1(%arg0: i32) -> (i32, i32) {
    %c0_i32 = arith.constant 0 : i32
    %c0_i32_0 = arith.constant 0 : i32
    %c0_i32_1 = arith.constant 0 : i32
    return %c0_i32, %c0_i32_0 : i32, i32
  }
  func.func @transform_2(%arg0: i32) -> (i32, i32) {
    %c0_i32 = arith.constant 0 : i32
    %c0_i32_0 = arith.constant 0 : i32
    %c0_i32_1 = arith.constant 0 : i32
    return %c0_i32, %c0_i32_0 : i32, i32
  }
  func.func @transform_3(%arg0: i32) -> (i32, i32) {
    %c0_i32 = arith.constant 0 : i32
    %c0_i32_0 = arith.constant 0 : i32
    return %arg0, %c0_i32 : i32, i32
  }
}

module attributes {stable_mosaic.version = 11 : i64} {
  func.func @_dense_res_ln_kernel(%arg0: i32, %arg1: memref<16x512xbf16, #tpu.memory_space<vmem>>, %arg2: memref<512x256xbf16, #tpu.memory_space<vmem>>, %arg3: memref<1x256xf32, #tpu.memory_space<vmem>>, %arg4: memref<16x256xbf16, #tpu.memory_space<vmem>>, %arg5: memref<1x256xf32, #tpu.memory_space<vmem>>, %arg6: memref<1x256xf32, #tpu.memory_space<vmem>>, %arg7: memref<16x256xbf16, #tpu.memory_space<vmem>>) attributes {dimension_semantics = [#tpu.dimension_semantics<parallel>], iteration_bounds = array<i64: 1>, scalar_prefetch = 0 : i64, scratch_operands = 0 : i64, tpu.core_type = #tpu.core_type<tc>, window_params = [{transform_indices = @transform_0, window_bounds = array<i64: 16, 512>}, {pipeline_mode = #tpu.pipeline_mode<synchronous>, transform_indices = @transform_1, window_bounds = array<i64: 512, 256>}, {pipeline_mode = #tpu.pipeline_mode<synchronous>, transform_indices = @transform_2, window_bounds = array<i64: 1, 256>}, {transform_indices = @transform_3, window_bounds = array<i64: 16, 256>}, {pipeline_mode = #tpu.pipeline_mode<synchronous>, transform_indices = @transform_4, window_bounds = array<i64: 1, 256>}, {pipeline_mode = #tpu.pipeline_mode<synchronous>, transform_indices = @transform_5, window_bounds = array<i64: 1, 256>}, {transform_indices = @transform_6, window_bounds = array<i64: 16, 256>}]} {
    %c0 = arith.constant 0 : index
    %c0_0 = arith.constant 0 : index
    %0 = vector.load %arg1[%c0, %c0_0] : memref<16x512xbf16, #tpu.memory_space<vmem>>, vector<16x512xbf16>
    %c0_1 = arith.constant 0 : index
    %c0_2 = arith.constant 0 : index
    %1 = vector.load %arg2[%c0_1, %c0_2] : memref<512x256xbf16, #tpu.memory_space<vmem>>, vector<512x256xbf16>
    %cst = arith.constant dense<0.000000e+00> : vector<16x256xf32>
    %2 = tpu.matmul %0, %1, %cst {dimension_numbers = #tpu.dot_dimension_numbers<[1], [0], [0], [1], [0, 0, 1, 1], [], []>} : vector<16x512xbf16>, vector<512x256xbf16>, vector<16x256xf32> -> vector<16x256xf32>
    %c0_3 = arith.constant 0 : index
    %c0_4 = arith.constant 0 : index
    %3 = vector.load %arg3[%c0_3, %c0_4] : memref<1x256xf32, #tpu.memory_space<vmem>>, vector<1x256xf32>
    %4 = vector.broadcast %3 : vector<1x256xf32> to vector<16x256xf32>
    %5 = arith.addf %2, %4 : vector<16x256xf32>
    %c0_5 = arith.constant 0 : index
    %c0_6 = arith.constant 0 : index
    %6 = vector.load %arg4[%c0_5, %c0_6] : memref<16x256xbf16, #tpu.memory_space<vmem>>, vector<16x256xbf16>
    %7 = arith.extf %6 : vector<16x256xbf16> to vector<16x256xf32>
    %8 = arith.addf %5, %7 : vector<16x256xf32>
    %cst_7 = arith.constant dense<0.000000e+00> : vector<16xf32>
    %9 = vector.multi_reduction <add>, %8, %cst_7 [1] : vector<16x256xf32> to vector<16xf32>
    %10 = vector.shape_cast %9 : vector<16xf32> to vector<16x1xf32>
    %cst_8 = arith.constant 2.560000e+02 : f32
    %11 = vector.broadcast %cst_8 : f32 to vector<16x1xf32>
    %12 = arith.divf %10, %11 : vector<16x1xf32>
    %13 = vector.broadcast %12 : vector<16x1xf32> to vector<16x256xf32>
    %14 = arith.subf %8, %13 : vector<16x256xf32>
    %15 = arith.mulf %14, %14 : vector<16x256xf32>
    %cst_9 = arith.constant dense<0.000000e+00> : vector<16xf32>
    %16 = vector.multi_reduction <add>, %15, %cst_9 [1] : vector<16x256xf32> to vector<16xf32>
    %17 = vector.shape_cast %16 : vector<16xf32> to vector<16x1xf32>
    %cst_10 = arith.constant 2.560000e+02 : f32
    %18 = vector.broadcast %cst_10 : f32 to vector<16x1xf32>
    %19 = arith.divf %17, %18 : vector<16x1xf32>
    %cst_11 = arith.constant 9.99999974E-6 : f32
    %20 = vector.broadcast %cst_11 : f32 to vector<16x1xf32>
    %21 = arith.addf %19, %20 : vector<16x1xf32>
    %22 = math.rsqrt %21 : vector<16x1xf32>
    %23 = vector.broadcast %12 : vector<16x1xf32> to vector<16x256xf32>
    %24 = arith.subf %8, %23 : vector<16x256xf32>
    %25 = vector.broadcast %22 : vector<16x1xf32> to vector<16x256xf32>
    %26 = arith.mulf %24, %25 : vector<16x256xf32>
    %c0_12 = arith.constant 0 : index
    %c0_13 = arith.constant 0 : index
    %27 = vector.load %arg5[%c0_12, %c0_13] : memref<1x256xf32, #tpu.memory_space<vmem>>, vector<1x256xf32>
    %28 = vector.broadcast %27 : vector<1x256xf32> to vector<16x256xf32>
    %29 = arith.mulf %26, %28 : vector<16x256xf32>
    %c0_14 = arith.constant 0 : index
    %c0_15 = arith.constant 0 : index
    %30 = vector.load %arg6[%c0_14, %c0_15] : memref<1x256xf32, #tpu.memory_space<vmem>>, vector<1x256xf32>
    %31 = vector.broadcast %30 : vector<1x256xf32> to vector<16x256xf32>
    %32 = arith.addf %29, %31 : vector<16x256xf32>
    %33 = arith.truncf %32 : vector<16x256xf32> to vector<16x256xbf16>
    %c0_16 = arith.constant 0 : index
    %c0_17 = arith.constant 0 : index
    %34 = vector.load %arg7[%c0_16, %c0_17] : memref<16x256xbf16, #tpu.memory_space<vmem>>, vector<16x256xbf16>
    tpu.vector_store %arg7[%c0_16, %c0_17], %33 {strides = array<i32>} : memref<16x256xbf16, #tpu.memory_space<vmem>>, vector<16x256xbf16>,
    return
  }
  func.func @transform_0(%arg0: i32) -> (i32, i32) {
    %c0_i32 = arith.constant 0 : i32
    %c0_i32_0 = arith.constant 0 : i32
    return %arg0, %c0_i32 : i32, i32
  }
  func.func @transform_1(%arg0: i32) -> (i32, i32) {
    %c0_i32 = arith.constant 0 : i32
    %c0_i32_0 = arith.constant 0 : i32
    %c0_i32_1 = arith.constant 0 : i32
    return %c0_i32, %c0_i32_0 : i32, i32
  }
  func.func @transform_2(%arg0: i32) -> (i32, i32) {
    %c0_i32 = arith.constant 0 : i32
    %c0_i32_0 = arith.constant 0 : i32
    %c0_i32_1 = arith.constant 0 : i32
    return %c0_i32, %c0_i32_0 : i32, i32
  }
  func.func @transform_3(%arg0: i32) -> (i32, i32) {
    %c0_i32 = arith.constant 0 : i32
    %c0_i32_0 = arith.constant 0 : i32
    return %arg0, %c0_i32 : i32, i32
  }
  func.func @transform_4(%arg0: i32) -> (i32, i32) {
    %c0_i32 = arith.constant 0 : i32
    %c0_i32_0 = arith.constant 0 : i32
    %c0_i32_1 = arith.constant 0 : i32
    return %c0_i32, %c0_i32_0 : i32, i32
  }
  func.func @transform_5(%arg0: i32) -> (i32, i32) {
    %c0_i32 = arith.constant 0 : i32
    %c0_i32_0 = arith.constant 0 : i32
    %c0_i32_1 = arith.constant 0 : i32
    return %c0_i32, %c0_i32_0 : i32, i32
  }
  func.func @transform_6(%arg0: i32) -> (i32, i32) {
    %c0_i32 = arith.constant 0 : i32
    %c0_i32_0 = arith.constant 0 : i32
    return %arg0, %c0_i32 : i32, i32
  }
}

module attributes {stable_mosaic.version = 11 : i64} {
  func.func @_dense_kernel(%arg0: i32, %arg1: memref<16x256xbf16, #tpu.memory_space<vmem>>, %arg2: memref<256x768xbf16, #tpu.memory_space<vmem>>, %arg3: memref<1x768xf32, #tpu.memory_space<vmem>>, %arg4: memref<16x768xbf16, #tpu.memory_space<vmem>>) attributes {dimension_semantics = [#tpu.dimension_semantics<parallel>], iteration_bounds = array<i64: 1>, scalar_prefetch = 0 : i64, scratch_operands = 0 : i64, tpu.core_type = #tpu.core_type<tc>, window_params = [{transform_indices = @transform_0, window_bounds = array<i64: 16, 256>}, {pipeline_mode = #tpu.pipeline_mode<synchronous>, transform_indices = @transform_1, window_bounds = array<i64: 256, 768>}, {pipeline_mode = #tpu.pipeline_mode<synchronous>, transform_indices = @transform_2, window_bounds = array<i64: 1, 768>}, {transform_indices = @transform_3, window_bounds = array<i64: 16, 768>}]} {
    %c0 = arith.constant 0 : index
    %c0_0 = arith.constant 0 : index
    %0 = vector.load %arg1[%c0, %c0_0] : memref<16x256xbf16, #tpu.memory_space<vmem>>, vector<16x256xbf16>
    %c0_1 = arith.constant 0 : index
    %c0_2 = arith.constant 0 : index
    %1 = vector.load %arg2[%c0_1, %c0_2] : memref<256x768xbf16, #tpu.memory_space<vmem>>, vector<256x768xbf16>
    %cst = arith.constant dense<0.000000e+00> : vector<16x768xf32>
    %2 = tpu.matmul %0, %1, %cst {dimension_numbers = #tpu.dot_dimension_numbers<[1], [0], [0], [1], [0, 0, 1, 1], [], []>} : vector<16x256xbf16>, vector<256x768xbf16>, vector<16x768xf32> -> vector<16x768xf32>
    %c0_3 = arith.constant 0 : index
    %c0_4 = arith.constant 0 : index
    %3 = vector.load %arg3[%c0_3, %c0_4] : memref<1x768xf32, #tpu.memory_space<vmem>>, vector<1x768xf32>
    %4 = vector.broadcast %3 : vector<1x768xf32> to vector<16x768xf32>
    %5 = arith.addf %2, %4 : vector<16x768xf32>
    %6 = arith.truncf %5 : vector<16x768xf32> to vector<16x768xbf16>
    %c0_5 = arith.constant 0 : index
    %c0_6 = arith.constant 0 : index
    %7 = vector.load %arg4[%c0_5, %c0_6] : memref<16x768xbf16, #tpu.memory_space<vmem>>, vector<16x768xbf16>
    tpu.vector_store %arg4[%c0_5, %c0_6], %6 {strides = array<i32>} : memref<16x768xbf16, #tpu.memory_space<vmem>>, vector<16x768xbf16>,
    return
  }
  func.func @transform_0(%arg0: i32) -> (i32, i32) {
    %c0_i32 = arith.constant 0 : i32
    %c0_i32_0 = arith.constant 0 : i32
    return %arg0, %c0_i32 : i32, i32
  }
  func.func @transform_1(%arg0: i32) -> (i32, i32) {
    %c0_i32 = arith.constant 0 : i32
    %c0_i32_0 = arith.constant 0 : i32
    %c0_i32_1 = arith.constant 0 : i32
    return %c0_i32, %c0_i32_0 : i32, i32
  }
  func.func @transform_2(%arg0: i32) -> (i32, i32) {
    %c0_i32 = arith.constant 0 : i32
    %c0_i32_0 = arith.constant 0 : i32
    %c0_i32_1 = arith.constant 0 : i32
    return %c0_i32, %c0_i32_0 : i32, i32
  }
  func.func @transform_3(%arg0: i32) -> (i32, i32) {
    %c0_i32 = arith.constant 0 : i32
    %c0_i32_0 = arith.constant 0 : i32
    return %arg0, %c0_i32 : i32, i32
  }
}

module attributes {stable_mosaic.version = 11 : i64} {
  func.func @_pool_norm_kernel(%arg0: i32, %arg1: memref<2x8x256xbf16, #tpu.memory_space<vmem>>, %arg2: memref<2x8x1xf32, #tpu.memory_space<vmem>>, %arg3: memref<2x256xf32, #tpu.memory_space<vmem>>) attributes {dimension_semantics = [#tpu.dimension_semantics<parallel>], iteration_bounds = array<i64: 1>, scalar_prefetch = 0 : i64, scratch_operands = 0 : i64, tpu.core_type = #tpu.core_type<tc>, window_params = [{transform_indices = @transform_0, window_bounds = array<i64: 2, 8, 256>}, {transform_indices = @transform_1, window_bounds = array<i64: 2, 8, 1>}, {transform_indices = @transform_2, window_bounds = array<i64: 2, 256>}]} {
    %c0 = arith.constant 0 : index
    %c0_0 = arith.constant 0 : index
    %c0_1 = arith.constant 0 : index
    %0 = vector.load %arg1[%c0, %c0_0, %c0_1] : memref<2x8x256xbf16, #tpu.memory_space<vmem>>, vector<2x8x256xbf16>
    %1 = arith.extf %0 : vector<2x8x256xbf16> to vector<2x8x256xf32>
    %c0_2 = arith.constant 0 : index
    %c0_3 = arith.constant 0 : index
    %c0_4 = arith.constant 0 : index
    %2 = vector.load %arg2[%c0_2, %c0_3, %c0_4] : memref<2x8x1xf32, #tpu.memory_space<vmem>>, vector<2x8x1xf32>
    %3 = vector.broadcast %2 : vector<2x8x1xf32> to vector<2x8x256xf32>
    %4 = arith.mulf %1, %3 : vector<2x8x256xf32>
    %cst = arith.constant dense<0.000000e+00> : vector<2x256xf32>
    %5 = vector.multi_reduction <add>, %4, %cst [1] : vector<2x8x256xf32> to vector<2x256xf32>
    %cst_5 = arith.constant dense<0.000000e+00> : vector<2x1xf32>
    %6 = vector.multi_reduction <add>, %2, %cst_5 [1] : vector<2x8x1xf32> to vector<2x1xf32>
    %cst_6 = arith.constant 1.000000e+00 : f32
    %7 = vector.broadcast %cst_6 : f32 to vector<2x1xf32>
    %8 = arith.maximumf %6, %7 : vector<2x1xf32>
    %9 = vector.broadcast %8 : vector<2x1xf32> to vector<2x256xf32>
    %10 = arith.divf %5, %9 : vector<2x256xf32>
    %11 = arith.mulf %10, %10 : vector<2x256xf32>
    %cst_7 = arith.constant dense<0.000000e+00> : vector<2xf32>
    %12 = vector.multi_reduction <add>, %11, %cst_7 [1] : vector<2x256xf32> to vector<2xf32>
    %13 = vector.shape_cast %12 : vector<2xf32> to vector<2x1xf32>
    %14 = math.sqrt %13 : vector<2x1xf32>
    %cst_8 = arith.constant 9.99999996E-13 : f32
    %15 = vector.broadcast %cst_8 : f32 to vector<2x1xf32>
    %16 = arith.maximumf %14, %15 : vector<2x1xf32>
    %17 = vector.broadcast %16 : vector<2x1xf32> to vector<2x256xf32>
    %18 = arith.divf %10, %17 : vector<2x256xf32>
    %c0_9 = arith.constant 0 : index
    %c0_10 = arith.constant 0 : index
    %19 = vector.load %arg3[%c0_9, %c0_10] : memref<2x256xf32, #tpu.memory_space<vmem>>, vector<2x256xf32>
    tpu.vector_store %arg3[%c0_9, %c0_10], %18 {strides = array<i32>} : memref<2x256xf32, #tpu.memory_space<vmem>>, vector<2x256xf32>,
    return
  }
  func.func @transform_0(%arg0: i32) -> (i32, i32, i32) {
    %c0_i32 = arith.constant 0 : i32
    %c0_i32_0 = arith.constant 0 : i32
    %c0_i32_1 = arith.constant 0 : i32
    return %arg0, %c0_i32, %c0_i32_0 : i32, i32, i32
  }
  func.func @transform_1(%arg0: i32) -> (i32, i32, i32) {
    %c0_i32 = arith.constant 0 : i32
    %c0_i32_0 = arith.constant 0 : i32
    %c0_i32_1 = arith.constant 0 : i32
    return %arg0, %c0_i32, %c0_i32_0 : i32, i32, i32
  }
  func.func @transform_2(%arg0: i32) -> (i32, i32) {
    %c0_i32 = arith.constant 0 : i32
    %c0_i32_0 = arith.constant 0 : i32
    return %arg0, %c0_i32 : i32, i32
  }
}

</mosaic_0001>

<llo_original>
// kernel: model_forward.12
$region0: #{model_forward.12}
  #allocation0 [shape = 'u32[]', space=smem, size = 0x4, offset = 0x4, fixed_abs, tag = 'smem constant byte address 0x4 - core index']
  #allocation1 [shape = 'u32[144,128]{1,0:T(1,128)}', space=vmem, size = 0x12000, scoped, tag = 'internal scratch']
  %s0 = inlined_call_operand.vmem [shape: bf16[16,256], index: 0, kind: input, shape index: {}]
  %s1 = inlined_call_operand.vmem [shape: f32[1,256], index: 1, kind: input, shape index: {}]
  %s2 = inlined_call_operand.vmem [shape: f32[1,256], index: 2, kind: input, shape index: {}]
  %s3 = inlined_call_operand.vmem [shape: bf16[16,256], index: 3, kind: output, shape index: {}]
  %s4 = sld [smem:[#allocation0]]
  $region22: #{model_forward.12} parent=0
    _
  %s6 = ssub.s32 1, %s4
  %s7 = scalar_select 0, %s6, %s4
  // Predicated region
  $region2: #{model_forward.12} parent=0 // pred_check
    _
  $region3: #{model_forward.12} parent=0 // pred_check_branch
    %9 = sbr.rel (0) target = $region5
  $region4: #{model_forward.12} parent=0 // pred_region
    _
  $region5: #{model_forward.12} parent=0 // pred_fallthru
    _
  // Predicated region
  $region6: #{model_forward.12} parent=0 // pred_check
    _
  $region7: #{model_forward.12} parent=0 // pred_check_branch
    %11 = sbr.rel (0) target = $region9
  $region8: #{model_forward.12} parent=0 // pred_region
    _
  $region9: #{model_forward.12} parent=0 // pred_fallthru
    _
  // Predicated region
  $region10: #{model_forward.12} parent=0 // pred_check
    _
  $region11: #{model_forward.12} parent=0 // pred_check_branch
    %13 = sbr.rel (0) target = $region13
  $region12: #{model_forward.12} parent=0 // pred_region
    _
  $region13: #{model_forward.12} parent=0 // pred_fallthru
    _
  %v14 = vld [vmem:[%s0] sm:$0xff]
  %v15 = vld [vmem:[%s0 + $0x8] sm:$0xff]
  %v16 = vunpack.c.l.bf16 %v14
  %v17 = vunpack.c.h.bf16 %v14
  %v18 = vunpack.c.l.bf16 %v15
  %v19 = vunpack.c.h.bf16 %v15
  %v20 = vadd.f32 %v16, %v17
  %21 = vadd.xlane.f32.xlu0 %v20
  %v22 = vpop.xlane.xlu0 %21
  %v23 = vadd.f32 %v18, %v19
  %24 = vadd.xlane.f32.xlu0 %v23
  %v25 = vpop.xlane.xlu0 %24
  %v26 = vrcp.pop 256.0
  %v27 = vmul.f32 %v22, %v26
  %v28 = vmul.f32 %v25, %v26
  %v29 = vsub.f32 %v16, %v27
  %v30 = vsub.f32 %v17, %v27
  %v31 = vsub.f32 %v18, %v28
  %v32 = vsub.f32 %v19, %v28
  %v33 = vmul.f32 %v29, %v29
  %v34 = vmul.f32 %v30, %v30
  %v35 = vmul.f32 %v31, %v31
  %v36 = vmul.f32 %v32, %v32
  %v37 = vadd.f32 %v33, %v34
  %38 = vadd.xlane.f32.xlu0 %v37
  %v39 = vpop.xlane.xlu0 %38
  %v40 = vadd.f32 %v35, %v36
  %41 = vadd.xlane.f32.xlu0 %v40
  %v42 = vpop.xlane.xlu0 %41
  %v43 = vmul.f32 %v39, %v26
  %v44 = vmul.f32 %v42, %v26
  %v45 = vadd.f32 %v43, 1e-05
  %v46 = vadd.f32 %v44, 1e-05
  %v47 = vrsqrt.pop %v45
  %v48 = vrsqrt.pop %v46
  %v49 = vmul.f32 %v29, %v47
  %v50 = vmul.f32 %v30, %v47
  %v51 = vmul.f32 %v31, %v48
  %v52 = vmul.f32 %v32, %v48
  %v53 = vld [vmem:[%s1] sm:$0x3]
  %v55 = vlaneseq
  %v56 = vshrl.u32 %v55, 7
  %v57 = vsub.s32 0, %v56
  %v58 = vrot.slane %v53, %v57
  %v59 = vlaneseq
  %v60 = vshrl.u32 %v59, 7
  %v61 = vsub.s32 1, %v60
  %v62 = vrot.slane %v53, %v61
  %v65 = vmul.f32 %v49, %v58
  %v66 = vmul.f32 %v50, %v62
  %v67 = vmul.f32 %v51, %v58
  %v68 = vmul.f32 %v52, %v62
  %v69 = vld [vmem:[%s2] sm:$0x3]
  %v71 = vlaneseq
  %v72 = vshrl.u32 %v71, 7
  %v73 = vsub.s32 0, %v72
  %v74 = vrot.slane %v69, %v73
  %v75 = vlaneseq
  %v76 = vshrl.u32 %v75, 7
  %v77 = vsub.s32 1, %v76
  %v78 = vrot.slane %v69, %v77
  %v81 = vadd.f32 %v65, %v74
  %v82 = vadd.f32 %v66, %v78
  %v83 = vadd.f32 %v67, %v74
  %v84 = vadd.f32 %v68, %v78
  %v85 = vpack.c.bf16 %v83, %v81
  %v86 = vpack.c.bf16 %v84, %v82
  %v89 = vunpack.c.l.b16 %v85
  %v90 = vunpack.c.l.b16 %v86
  %v91 = vunpack.c.h.b16 %v85
  %v92 = vunpack.c.h.b16 %v86
  %v93 = vpack.c.b16 %v90, %v89
  %v94 = vpack.c.b16 %v92, %v91
  %97 = vst [vmem:[%s3] sm:$0xff] %v93
  %98 = vst [vmem:[%s3 + $0x8] sm:$0xff] %v94
  // Predicated region
  $region14: #{model_forward.12} parent=0 // pred_check
    _
  $region15: #{model_forward.12} parent=0 // pred_check_branch
    %100 = sbr.rel (0) target = $region17
  $region16: #{model_forward.12} parent=0 // pred_region
    _
  $region17: #{model_forward.12} parent=0 // pred_fallthru
    _
  // Predicated region
  $region18: #{model_forward.12} parent=0 // pred_check
    _
  $region19: #{model_forward.12} parent=0 // pred_check_branch
    %102 = sbr.rel (0) target = $region21
  $region20: #{model_forward.12} parent=0 // pred_region
    _
  $region21: #{model_forward.12} parent=0 // pred_fallthru
    _

// kernel: model_forward.14
$region0: #{model_forward.14}
  #allocation0 [shape = 'u32[]', space=smem, size = 0x4, offset = 0x4, fixed_abs, tag = 'smem constant byte address 0x4 - core index']
  #allocation1 [shape = 'u32[144,128]{1,0:T(1,128)}', space=vmem, size = 0x12000, scoped, tag = 'internal scratch']
  %s0 = inlined_call_operand.vmem [shape: bf16[2,8,768], index: 0, kind: input, shape index: {}, may-alias: {0,1,2}]
  %s1 = inlined_call_operand.vmem [shape: bf16[2,8,768], index: 1, kind: input, shape index: {}, may-alias: {0,1,2}]
  %s2 = inlined_call_operand.vmem [shape: bf16[2,8,768], index: 2, kind: input, shape index: {}, may-alias: {0,1,2}]
  %s3 = inlined_call_operand.vmem [shape: f32[2,1,8], index: 3, kind: input, shape index: {}]
  %s4 = inlined_call_operand.vmem [shape: bf16[2,8,256], index: 4, kind: output, shape index: {}]
  %s5 = sld [smem:[#allocation0]]
  $region49: #{model_forward.14} parent=0
    _
  %s7 = ssub.s32 1, %s5
  %s8 = scalar_select 0, %s7, %s5
  loop: start=0, step=1, limit=4
  $region2: #{model_forward.14} parent=0 // loop_pre_header
    _
  $region3: #{model_forward.14} parent=0 // loop_header
    %s10 = sphi 0, %s14
    %p11 = scmp.ge.s32.totalorder %s10, 4
    %s20 = sphi 0, %s22
    %s23 = sphi 0, %s20
    %s24 = sphi 0, %s23
    %s40 = sphi 0, %s24
    %s46 = sphi 0, %s48
    %s49 = sphi 0, %s46
    %s50 = sphi 0, %s49
    %s66 = sphi 0, %s50
    %s72 = sphi 0, %s74
    %s75 = sphi 0, %s72
    %s76 = sphi 0, %s75
    %s92 = sphi 0, %s76
    %s98 = sphi 0, %s100
    %s101 = sphi 0, %s98
    %s102 = sphi 0, %s101
    %s118 = sphi 0, %s102
    %s124 = sphi 0, %s126
    %s127 = sphi 0, %s124
    %s128 = sphi 0, %s127
    %s144 = sphi 0, %s128
  $region4: #{model_forward.14} parent=0 // loop_header_branch
    %13 = sbr.rel (%p11) target = $region8
  $region5: #{model_forward.14} parent=0 // loop_body
    %s15 = ssub.s32 %s10, 1
    %s16 = ssub.s32 %s10, 2
    %s17 = sadd.s32 %s10, 1
    %s18 = ssub.s32 %s10, %s17
    %p19 = scmp.eq.s32.totalorder %s18, 0
    %s21 = sadd.s32 %s20, 1
    %s22 = scalar_select %p19, %s20, %s21
    %p25 = pneg %p19
    %p26 = scmp.eq.s32.totalorder %s10, 1
    %p27 = por %p25, %p26
    %p28 = scmp.ne.s32.totalorder %s20, %s23
    %p29 = scmp.eq.s32.totalorder %s10, 0
    %p30 = por %p28, %p29
    %p31 = scmp.ne.s32.totalorder %s20, %s23
    %p32 = scmp.eq.s32.totalorder %s15, 1
    %p33 = por %p31, %p32
    %p34 = scmp.ne.s32.totalorder %s23, %s24
    %p35 = scmp.eq.s32.totalorder %s15, 0
    %p36 = por %p34, %p35
    %p37 = scmp.ne.s32.totalorder %s23, %s24
    %p38 = scmp.eq.s32.totalorder %s16, 1
    %p39 = por %p37, %p38
    %p41 = scmp.ne.s32.totalorder %s24, %s40
    %p42 = scmp.eq.s32.totalorder %s16, 0
    %p43 = por %p41, %p42
    %s44 = ssub.s32 %s10, %s17
    %p45 = scmp.eq.s32.totalorder %s44, 0
    %s47 = sadd.s32 %s46, 1
    %s48 = scalar_select %p45, %s46, %s47
    %p51 = pneg %p45
    %p52 = scmp.eq.s32.totalorder %s10, 1
    %p53 = por %p51, %p52
    %p54 = scmp.ne.s32.totalorder %s46, %s49
    %p55 = scmp.eq.s32.totalorder %s10, 0
    %p56 = por %p54, %p55
    %p57 = scmp.ne.s32.totalorder %s46, %s49
    %p58 = scmp.eq.s32.totalorder %s15, 1
    %p59 = por %p57, %p58
    %p60 = scmp.ne.s32.totalorder %s49, %s50
    %p61 = scmp.eq.s32.totalorder %s15, 0
    %p62 = por %p60, %p61
    %p63 = scmp.ne.s32.totalorder %s49, %s50
    %p64 = scmp.eq.s32.totalorder %s16, 1
    %p65 = por %p63, %p64
    %p67 = scmp.ne.s32.totalorder %s50, %s66
    %p68 = scmp.eq.s32.totalorder %s16, 0
    %p69 = por %p67, %p68
    %s70 = ssub.s32 %s10, %s17
    %p71 = scmp.eq.s32.totalorder %s70, 0
    %s73 = sadd.s32 %s72, 1
    %s74 = scalar_select %p71, %s72, %s73
    %p77 = pneg %p71
    %p78 = scmp.eq.s32.totalorder %s10, 1
    %p79 = por %p77, %p78
    %p80 = scmp.ne.s32.totalorder %s72, %s75
    %p81 = scmp.eq.s32.totalorder %s10, 0
    %p82 = por %p80, %p81
    %p83 = scmp.ne.s32.totalorder %s72, %s75
    %p84 = scmp.eq.s32.totalorder %s15, 1
    %p85 = por %p83, %p84
    %p86 = scmp.ne.s32.totalorder %s75, %s76
    %p87 = scmp.eq.s32.totalorder %s15, 0
    %p88 = por %p86, %p87
    %p89 = scmp.ne.s32.totalorder %s75, %s76
    %p90 = scmp.eq.s32.totalorder %s16, 1
    %p91 = por %p89, %p90
    %p93 = scmp.ne.s32.totalorder %s76, %s92
    %p94 = scmp.eq.s32.totalorder %s16, 0
    %p95 = por %p93, %p94
    %s96 = ssub.s32 %s10, %s17
    %p97 = scmp.eq.s32.totalorder %s96, 0
    %s99 = sadd.s32 %s98, 1
    %s100 = scalar_select %p97, %s98, %s99
    %p103 = pneg %p97
    %p104 = scmp.eq.s32.totalorder %s10, 1
    %p105 = por %p103, %p104
    %p106 = scmp.ne.s32.totalorder %s98, %s101
    %p107 = scmp.eq.s32.totalorder %s10, 0
    %p108 = por %p106, %p107
    %p109 = scmp.ne.s32.totalorder %s98, %s101
    %p110 = scmp.eq.s32.totalorder %s15, 1
    %p111 = por %p109, %p110
    %p112 = scmp.ne.s32.totalorder %s101, %s102
    %p113 = scmp.eq.s32.totalorder %s15, 0
    %p114 = por %p112, %p113
    %p115 = scmp.ne.s32.totalorder %s101, %s102
    %p116 = scmp.eq.s32.totalorder %s16, 1
    %p117 = por %p115, %p116
    %p119 = scmp.ne.s32.totalorder %s102, %s118
    %p120 = scmp.eq.s32.totalorder %s16, 0
    %p121 = por %p119, %p120
    %s122 = ssub.s32 %s10, %s17
    %p123 = scmp.eq.s32.totalorder %s122, 0
    %s125 = sadd.s32 %s124, 1
    %s126 = scalar_select %p123, %s124, %s125
    %p129 = pneg %p123
    %p130 = scmp.eq.s32.totalorder %s10, 1
    %p131 = por %p129, %p130
    %p132 = scmp.ne.s32.totalorder %s124, %s127
    %p133 = scmp.eq.s32.totalorder %s10, 0
    %p134 = por %p132, %p133
    %p135 = scmp.ne.s32.totalorder %s124, %s127
    %p136 = scmp.eq.s32.totalorder %s15, 1
    %p137 = por %p135, %p136
    %p138 = scmp.ne.s32.totalorder %s127, %s128
    %p139 = scmp.eq.s32.totalorder %s15, 0
    %p140 = por %p138, %p139
    %p141 = scmp.ne.s32.totalorder %s127, %s128
    %p142 = scmp.eq.s32.totalorder %s16, 1
    %p143 = por %p141, %p142
    %p145 = scmp.ne.s32.totalorder %s128, %s144
    %p146 = scmp.eq.s32.totalorder %s16, 0
    %p147 = por %p145, %p146
    %p148 = scmp.le.s32.totalorder 1, %s10
    %p149 = scmp.lt.s32.totalorder %s10, 3
    %p150 = pnand %p148, %p149
    %p151 = pneg %p150
    // Predicated region
    $region9: #{model_forward.14} parent=5 // pred_check
      _
    $region10: #{model_forward.14} parent=5 // pred_check_branch
      %153 = sbr.rel (%p150) target = $region12
    $region11: #{model_forward.14} parent=5 // pred_region
      %s154 = ssub.s32 %s10, 1
    $region12: #{model_forward.14} parent=5 // pred_fallthru
      _
    %p155 = scmp.lt.s32.totalorder %s10, 2
    // Predicated region
    $region13: #{model_forward.14} parent=5 // pred_check
      %p156 = pneg %p155
    $region14: #{model_forward.14} parent=5 // pred_check_branch
      %158 = sbr.rel (%p156) target = $region16
    $region15: #{model_forward.14} parent=5 // pred_region
      // Predicated region
      $region17: #{model_forward.14} parent=15 // pred_check
        %p159 = pneg %p30
      $region18: #{model_forward.14} parent=15 // pred_check_branch
        %161 = sbr.rel (%p159) target = $region20
      $region19: #{model_forward.14} parent=15 // pred_region
        %p162 = scmp.lt.s32.totalorder %s10, 1
        %s163 = scalar_select %p162, %s10, 1
        %s164 = smul.addr %s163, 6
        %s165 = smul.addr %s164, 4
        %s166 = scalar_lea.vmem %s0, %s165
      $region20: #{model_forward.14} parent=15 // pred_fallthru
        _
      // Predicated region
      $region21: #{model_forward.14} parent=15 // pred_check
        %p167 = pneg %p56
      $region22: #{model_forward.14} parent=15 // pred_check_branch
        %169 = sbr.rel (%p167) target = $region24
      $region23: #{model_forward.14} parent=15 // pred_region
        %p170 = scmp.lt.s32.totalorder %s10, 1
        %s171 = scalar_select %p170, %s10, 1
        %s172 = smul.addr %s171, 6
        %s173 = sadd.s32 2, %s172
        %s174 = smul.addr %s173, 4
        %s175 = scalar_lea.vmem %s1, %s174
      $region24: #{model_forward.14} parent=15 // pred_fallthru
        _
      // Predicated region
      $region25: #{model_forward.14} parent=15 // pred_check
        %p176 = pneg %p82
      $region26: #{model_forward.14} parent=15 // pred_check_branch
        %178 = sbr.rel (%p176) target = $region28
      $region27: #{model_forward.14} parent=15 // pred_region
        %p179 = scmp.lt.s32.totalorder %s10, 1
        %s180 = scalar_select %p179, %s10, 1
        %s181 = smul.addr %s180, 6
        %s182 = sadd.s32 4, %s181
        %s183 = smul.addr %s182, 4
        %s184 = scalar_lea.vmem %s2, %s183
      $region28: #{model_forward.14} parent=15 // pred_fallthru
        _
      // Predicated region
      $region29: #{model_forward.14} parent=15 // pred_check
        %p185 = pneg %p108
      $region30: #{model_forward.14} parent=15 // pred_check_branch
        %187 = sbr.rel (%p185) target = $region32
      $region31: #{model_forward.14} parent=15 // pred_region
        %p188 = scmp.lt.s32.totalorder %s10, 1
        %s189 = scalar_select %p188, %s10, 1
        %s190 = scalar_lea.vmem %s3, %s189
      $region32: #{model_forward.14} parent=15 // pred_fallthru
        _
    $region16: #{model_forward.14} parent=5 // pred_fallthru
      _
    %p191 = scmp.le.s32.totalorder 1, %s10
    %p192 = scmp.lt.s32.totalorder %s10, 3
    %p193 = pnand %p191, %p192
    %p194 = pneg %p193
    // Predicated region
    $region33: #{model_forward.14} parent=5 // pred_check
      _
    $region34: #{model_forward.14} parent=5 // pred_check_branch
      %196 = sbr.rel (%p193) target = $region36
    $region35: #{model_forward.14} parent=5 // pred_region
      %s197 = ssub.s32 %s10, 1
      %p198 = scmp.lt.s32.totalorder %s15, 1
      %s199 = scalar_select %p198, %s15, 1
      %s200 = smul.addr %s199, 6
      %s201 = smul.addr %s200, 4
      %s202 = scalar_lea.vmem %s0, %s201
      %p203 = pneg %p36
      %p204 = pneg %p33
      %p205 = scmp.lt.s32.totalorder %s15, 1
      %s206 = scalar_select %p205, %s15, 1
      %s207 = smul.addr %s206, 6
      %s208 = sadd.s32 2, %s207
      %s209 = smul.addr %s208, 4
      %s210 = scalar_lea.vmem %s1, %s209
      %p211 = pneg %p62
      %p212 = pneg %p59
      %p213 = scmp.lt.s32.totalorder %s15, 1
      %s214 = scalar_select %p213, %s15, 1
      %s215 = smul.addr %s214, 6
      %s216 = sadd.s32 4, %s215
      %s217 = smul.addr %s216, 4
      %s218 = scalar_lea.vmem %s2, %s217
      %p219 = pneg %p88
      %p220 = pneg %p85
      %p221 = scmp.lt.s32.totalorder %s15, 1
      %s222 = scalar_select %p221, %s15, 1
      %s223 = scalar_lea.vmem %s3, %s222
      %p224 = pneg %p114
      %p225 = pneg %p111
      %p226 = pneg %p140
      %p227 = pneg %p137
      %p228 = scmp.lt.s32.totalorder %s15, 1
      %s229 = scalar_select %p228, %s15, 1
      %s230 = smul.addr %s229, 2
      %s231 = smul.addr %s230, 4
      %s232 = scalar_lea.vmem %s4, %s231
      %p233 = scmp.lt.s32.totalorder %s15, 1
      %s234 = scalar_select %p233, %s15, 1
      %s235 = smul.addr %s234, 6
      %s236 = smul.addr %s235, 4
      %s237 = scalar_lea.vmem %s0, %s236
      %p238 = scmp.lt.s32.totalorder %s15, 1
      %s239 = scalar_select %p238, %s15, 1
      %s240 = smul.addr %s239, 6
      %s241 = sadd.s32 2, %s240
      %s242 = smul.addr %s241, 4
      %s243 = scalar_lea.vmem %s1, %s242
      %p244 = scmp.lt.s32.totalorder %s15, 1
      %s245 = scalar_select %p244, %s15, 1
      %s246 = smul.addr %s245, 6
      %s247 = sadd.s32 4, %s246
      %s248 = smul.addr %s247, 4
      %s249 = scalar_lea.vmem %s2, %s248
      %p250 = scmp.lt.s32.totalorder %s15, 1
      %s251 = scalar_select %p250, %s15, 1
      %s252 = scalar_lea.vmem %s3, %s251
      %p253 = scmp.lt.s32.totalorder %s15, 1
      %s254 = scalar_select %p253, %s15, 1
      %s255 = smul.addr %s254, 2
      %s256 = smul.addr %s255, 4
      %s257 = scalar_lea.vmem %s4, %s256
      %v259 = vld [vmem:[%s237] sm:$0xff]
      %v260 = vld [vmem:[%s243] sm:$0xff]
      %v261 = vld [vmem:[%s249] sm:$0xff]
      %v262 = vld [vmem:[%s252] sm:$0x1]
      %263 = vmatprep.subr.bf16.mxu0 0
      %264 = vmatpush1.bf16.xpose.msra.mxu0 0
      %265 = vmatprep.subr.bf16.mxu0 0
      %266 = vmatpush1.bf16.xpose.msra.mxu0 0
      %267 = vmatprep.subr.bf16.mxu0 0
      %268 = vmatpush1.bf16.xpose.msra.mxu0 0
      %269 = vmatprep.subr.bf16.mxu0 0
      %270 = vmatpush1.bf16.xpose.msra.mxu0 0
      %271 = vmatprep.subr.bf16.mxu0 0
      %272 = vmatpush1.bf16.xpose.msra.mxu0 0
      %273 = vmatprep.subr.bf16.mxu0 0
      %274 = vmatpush1.bf16.xpose.msra.mxu0 0
      %275 = vmatprep.subr.bf16.mxu0 0
      %276 = vmatpush1.bf16.xpose.msra.mxu0 0
      %277 = vmatprep.subr.bf16.mxu0 0
      %278 = vmatpush1.bf16.xpose.msra.mxu0 %v260
      %279 = vmatprep.subr.bf16.mxu0 0
      %280 = vmatpush2.bf16.xpose.msra.mxu0 0
      %281 = vmatprep.subr.bf16.mxu0 0
      %282 = vmatpush2.bf16.xpose.msra.mxu0 0
      %283 = vmatprep.subr.bf16.mxu0 0
      %284 = vmatpush2.bf16.xpose.msra.mxu0 0
      %285 = vmatprep.subr.bf16.mxu0 0
      %286 = vmatpush2.bf16.xpose.msra.mxu0 0
      %287 = vmatprep.subr.bf16.mxu0 0
      %288 = vmatpush2.bf16.xpose.msra.mxu0 0
      %289 = vmatprep.subr.bf16.mxu0 0
      %290 = vmatpush2.bf16.xpose.msra.mxu0 0
      %291 = vmatprep.subr.bf16.mxu0 0
      %292 = vmatpush2.bf16.xpose.msra.mxu0 0
      %293 = vmatprep.subr.bf16.mxu0 0
      %294 = vmatpush2.bf16.xpose.msra.mxu0 0
      %295 = vmatprep.mubr.bf16.mxu0 0
      %296 = vmatmul.mubr.bf16.gmra.mxu0 %v259
      %v297 = vpop.f32.mrf.mxu0
      %v298 = vadd.f32 0.0, %v297
      %v299 = vpop.f32.mrf.mxu0
      %v300 = vpop.f32.mrf.mxu0
      %v301 = vpop.f32.mrf.mxu0
      %302 = vdwg.mxu0
      %v303 = vmul.f32 %v298, 0.088388346
      %v305 = vlaneseq
      %v306 = vshrl.u32 %v305, 7
      %v307 = vsub.s32 0, %v306
      %v308 = vrot.slane %v262, %v307
      %v310 = vadd.f32 %v303, %v308
      %vm311 = vcmask 64512
      %v312 = vsel %vm311, %v310, -inf
      %313 = vmax.xlane.f32.xlu0 %v312
      %v314 = vpop.xlane.xlu0 %313
      %v315 = vsub.f32 %v310, %v314
      %v316 = vmul.f32 %v315, 1.442695
      %v317 = vpow.pop %v316
      %v318 = vsel %vm311, %v317, 0.0
      %319 = vadd.xlane.f32.xlu0 %v318
      %v320 = vpop.xlane.xlu0 %319
      %v321 = vrcp.pop %v320
      %v322 = vmul.f32 %v317, %v321
      %v323 = vpack.c.bf16 %v322, %v322
      %v325 = vsel %vm311, %v323, 0
      %vm327 = vcmask 1043456
      %v329 = vsel %vm327, %v261, 0
      %331 = vmatprep.subr.bf16.mxu0 0
      %332 = vmatpush1.bf16.msra.mxu0 0
      %333 = vmatprep.subr.bf16.mxu0 0
      %334 = vmatpush1.bf16.msra.mxu0 0
      %335 = vmatprep.subr.bf16.mxu0 0
      %336 = vmatpush1.bf16.msra.mxu0 0
      %337 = vmatprep.subr.bf16.mxu0 0
      %338 = vmatpush1.bf16.msra.mxu0 0
      %339 = vmatprep.subr.bf16.mxu0 0
      %340 = vmatpush1.bf16.msra.mxu0 0
      %341 = vmatprep.subr.bf16.mxu0 0
      %342 = vmatpush1.bf16.msra.mxu0 0
      %343 = vmatprep.subr.bf16.mxu0 0
      %344 = vmatpush1.bf16.msra.mxu0 0
      %345 = vmatprep.subr.bf16.mxu0 0
      %346 = vmatpush1.bf16.msra.mxu0 %v329
      %347 = vmatprep.subr.bf16.mxu0 0
      %348 = vmatpush2.bf16.msra.mxu0 0
      %349 = vmatprep.subr.bf16.mxu0 0
      %350 = vmatpush2.bf16.msra.mxu0 0
      %351 = vmatprep.subr.bf16.mxu0 0
      %352 = vmatpush2.bf16.msra.mxu0 0
      %353 = vmatprep.subr.bf16.mxu0 0
      %354 = vmatpush2.bf16.msra.mxu0 0
      %355 = vmatprep.subr.bf16.mxu0 0
      %356 = vmatpush2.bf16.msra.mxu0 0
      %357 = vmatprep.subr.bf16.mxu0 0
      %358 = vmatpush2.bf16.msra.mxu0 0
      %359 = vmatprep.subr.bf16.mxu0 0
      %360 = vmatpush2.bf16.msra.mxu0 0
      %361 = vmatprep.subr.bf16.mxu0 0
      %362 = vmatpush2.bf16.msra.mxu0 0
      %363 = vmatprep.mubr.bf16.mxu0 0
      %364 = vmatmul.mubr.bf16.gmra.mxu0 %v325
      %v365 = vpop.f32.mrf.mxu0
      %v366 = vadd.f32 0.0, %v365
      %v367 = vpop.f32.mrf.mxu0
      %v368 = vpop.f32.mrf.mxu0
      %v369 = vpop.f32.mrf.mxu0
      %370 = vdwg.mxu0
      %v372 = vunpack.c.h.b16 %v259
      %v373 = vpack.c.b16 %v372, %v372
      %v376 = vunpack.c.h.b16 %v260
      %v377 = vpack.c.b16 %v376, %v376
      %379 = vmatprep.subr.bf16.mxu0 0
      %380 = vmatpush1.bf16.xpose.msra.mxu0 0
      %381 = vmatprep.subr.bf16.mxu0 0
      %382 = vmatpush1.bf16.xpose.msra.mxu0 0
      %383 = vmatprep.subr.bf16.mxu0 0
      %384 = vmatpush1.bf16.xpose.msra.mxu0 0
      %385 = vmatprep.subr.bf16.mxu0 0
      %386 = vmatpush1.bf16.xpose.msra.mxu0 0
      %387 = vmatprep.subr.bf16.mxu0 0
      %388 = vmatpush1.bf16.xpose.msra.mxu0 0
      %389 = vmatprep.subr.bf16.mxu0 0
      %390 = vmatpush1.bf16.xpose.msra.mxu0 0
      %391 = vmatprep.subr.bf16.mxu0 0
      %392 = vmatpush1.bf16.xpose.msra.mxu0 0
      %393 = vmatprep.subr.bf16.mxu0 0
      %394 = vmatpush1.bf16.xpose.msra.mxu0 %v377
      %395 = vmatprep.subr.bf16.mxu0 0
      %396 = vmatpush2.bf16.xpose.msra.mxu0 0
      %397 = vmatprep.subr.bf16.mxu0 0
      %398 = vmatpush2.bf16.xpose.msra.mxu0 0
      %399 = vmatprep.subr.bf16.mxu0 0
      %400 = vmatpush2.bf16.xpose.msra.mxu0 0
      %401 = vmatprep.subr.bf16.mxu0 0
      %402 = vmatpush2.bf16.xpose.msra.mxu0 0
      %403 = vmatprep.subr.bf16.mxu0 0
      %404 = vmatpush2.bf16.xpose.msra.mxu0 0
      %405 = vmatprep.subr.bf16.mxu0 0
      %406 = vmatpush2.bf16.xpose.msra.mxu0 0
      %407 = vmatprep.subr.bf16.mxu0 0
      %408 = vmatpush2.bf16.xpose.msra.mxu0 0
      %409 = vmatprep.subr.bf16.mxu0 0
      %410 = vmatpush2.bf16.xpose.msra.mxu0 0
      %411 = vmatprep.mubr.bf16.mxu0 0
      %412 = vmatmul.mubr.bf16.gmra.mxu0 %v373
      %v413 = vpop.f32.mrf.mxu0
      %v414 = vadd.f32 0.0, %v413
      %v415 = vpop.f32.mrf.mxu0
      %v416 = vpop.f32.mrf.mxu0
      %v417 = vpop.f32.mrf.mxu0
      %418 = vdwg.mxu0
      %v419 = vmul.f32 %v414, 0.088388346
      %v420 = vadd.f32 %v419, %v308
      %v421 = vsel %vm311, %v420, -inf
      %422 = vmax.xlane.f32.xlu0 %v421
      %v423 = vpop.xlane.xlu0 %422
      %v424 = vsub.f32 %v420, %v423
      %v425 = vmul.f32 %v424, 1.442695
      %v426 = vpow.pop %v425
      %v427 = vsel %vm311, %v426, 0.0
      %428 = vadd.xlane.f32.xlu0 %v427
      %v429 = vpop.xlane.xlu0 %428
      %v430 = vrcp.pop %v429
      %v431 = vmul.f32 %v426, %v430
      %v432 = vpack.c.bf16 %v431, %v431
      %v434 = vunpack.c.h.b16 %v261
      %v435 = vpack.c.b16 %v434, %v434
      %v437 = vsel %vm311, %v432, 0
      %v440 = vsel %vm327, %v435, 0
      %442 = vmatprep.subr.bf16.mxu0 0
      %443 = vmatpush1.bf16.msra.mxu0 0
      %444 = vmatprep.subr.bf16.mxu0 0
      %445 = vmatpush1.bf16.msra.mxu0 0
      %446 = vmatprep.subr.bf16.mxu0 0
      %447 = vmatpush1.bf16.msra.mxu0 0
      %448 = vmatprep.subr.bf16.mxu0 0
      %449 = vmatpush1.bf16.msra.mxu0 0
      %450 = vmatprep.subr.bf16.mxu0 0
      %451 = vmatpush1.bf16.msra.mxu0 0
      %452 = vmatprep.subr.bf16.mxu0 0
      %453 = vmatpush1.bf16.msra.mxu0 0
      %454 = vmatprep.subr.bf16.mxu0 0
      %455 = vmatpush1.bf16.msra.mxu0 0
      %456 = vmatprep.subr.bf16.mxu0 0
      %457 = vmatpush1.bf16.msra.mxu0 %v440
      %458 = vmatprep.subr.bf16.mxu0 0
      %459 = vmatpush2.bf16.msra.mxu0 0
      %460 = vmatprep.subr.bf16.mxu0 0
      %461 = vmatpush2.bf16.msra.mxu0 0
      %462 = vmatprep.subr.bf16.mxu0 0
      %463 = vmatpush2.bf16.msra.mxu0 0
      %464 = vmatprep.subr.bf16.mxu0 0
      %465 = vmatpush2.bf16.msra.mxu0 0
      %466 = vmatprep.subr.bf16.mxu0 0
      %467 = vmatpush2.bf16.msra.mxu0 0
      %468 = vmatprep.subr.bf16.mxu0 0
      %469 = vmatpush2.bf16.msra.mxu0 0
      %470 = vmatprep.subr.bf16.mxu0 0
      %471 = vmatpush2.bf16.msra.mxu0 0
      %472 = vmatprep.subr.bf16.mxu0 0
      %473 = vmatpush2.bf16.msra.mxu0 0
      %474 = vmatprep.mubr.bf16.mxu0 0
      %475 = vmatmul.mubr.bf16.gmra.mxu0 %v437
      %v476 = vpop.f32.mrf.mxu0
      %v477 = vadd.f32 0.0, %v476
      %v478 = vpop.f32.mrf.mxu0
      %v479 = vpop.f32.mrf.mxu0
      %v480 = vpop.f32.mrf.mxu0
      %481 = vdwg.mxu0
      %v482 = vpack.c.bf16 %v366, %v366
      %v483 = vpack.c.bf16 %v477, %v477
      %v486 = vunpack.c.l.b16 %v482
      %v487 = vunpack.c.l.b16 %v483
      %v488 = vpack.c.b16 %v487, %v486
      %490 = vst [vmem:[%s257] sm:$0xff] %v488
      %p491 = scmp.lt.s32.totalorder %s15, 1
      %s492 = scalar_select %p491, %s15, 1
      %s493 = smul.addr %s492, 2
      %s494 = smul.addr %s493, 4
      %s495 = scalar_lea.vmem %s4, %s494
      // Predicated region
      $region37: #{model_forward.14} parent=35 // pred_check
        %p496 = pneg %p137
      $region38: #{model_forward.14} parent=35 // pred_check_branch
        %498 = sbr.rel (%p496) target = $region40
      $region39: #{model_forward.14} parent=35 // pred_region
        _
      $region40: #{model_forward.14} parent=35 // pred_fallthru
        _
    $region36: #{model_forward.14} parent=5 // pred_fallthru
      _
    %p499 = scmp.le.s32.totalorder 2, %s10
    // Predicated region
    $region41: #{model_forward.14} parent=5 // pred_check
      %p500 = pneg %p499
    $region42: #{model_forward.14} parent=5 // pred_check_branch
      %502 = sbr.rel (%p500) target = $region44
    $region43: #{model_forward.14} parent=5 // pred_region
      %s503 = ssub.s32 %s10, 2
      // Predicated region
      $region45: #{model_forward.14} parent=43 // pred_check
        %p504 = pneg %p143
      $region46: #{model_forward.14} parent=43 // pred_check_branch
        %506 = sbr.rel (%p504) target = $region48
      $region47: #{model_forward.14} parent=43 // pred_region
        %p507 = scmp.lt.s32.totalorder %s16, 1
        %s508 = scalar_select %p507, %s16, 1
        %s509 = smul.addr %s508, 2
        %s510 = smul.addr %s509, 4
        %s511 = scalar_lea.vmem %s4, %s510
      $region48: #{model_forward.14} parent=43 // pred_fallthru
        _
    $region44: #{model_forward.14} parent=5 // pred_fallthru
      _
  $region6: #{model_forward.14} parent=0 // loop_footer
    %s14 = sadd.s32 1, %s10
  $region7: #{model_forward.14} parent=0 // loop_footer_branch
    %9 = sbr.rel target = $region3
  $region8: #{model_forward.14} parent=0 // loop_exit
    _

// kernel: model_forward.15
$region0: #{model_forward.15}
  #allocation0 [shape = 'u32[]', space=smem, size = 0x4, offset = 0x4, fixed_abs, tag = 'smem constant byte address 0x4 - core index']
  #allocation1 [shape = 'u32[144,128]{1,0:T(1,128)}', space=vmem, size = 0x12000, scoped, tag = 'internal scratch']
  %s0 = inlined_call_operand.vmem [shape: bf16[16,256], index: 0, kind: input, shape index: {}]
  %s1 = inlined_call_operand.vmem [shape: bf16[256,256], index: 1, kind: input, shape index: {}]
  %s2 = inlined_call_operand.vmem [shape: f32[1,256], index: 2, kind: input, shape index: {}]
  %s3 = inlined_call_operand.vmem [shape: bf16[16,256], index: 3, kind: input, shape index: {}]
  %s4 = inlined_call_operand.vmem [shape: f32[1,256], index: 4, kind: input, shape index: {}]
  %s5 = inlined_call_operand.vmem [shape: f32[1,256], index: 5, kind: input, shape index: {}]
  %s6 = inlined_call_operand.vmem [shape: bf16[16,256], index: 6, kind: output, shape index: {}]
  %s7 = sld [smem:[#allocation0]]
  $region34: #{model_forward.15} parent=0
    _
  %s9 = ssub.s32 1, %s7
  %s10 = scalar_select 0, %s9, %s7
  // Predicated region
  $region2: #{model_forward.15} parent=0 // pred_check
    _
  $region3: #{model_forward.15} parent=0 // pred_check_branch
    %12 = sbr.rel (0) target = $region5
  $region4: #{model_forward.15} parent=0 // pred_region
    _
  $region5: #{model_forward.15} parent=0 // pred_fallthru
    _
  // Predicated region
  $region6: #{model_forward.15} parent=0 // pred_check
    _
  $region7: #{model_forward.15} parent=0 // pred_check_branch
    %14 = sbr.rel (0) target = $region9
  $region8: #{model_forward.15} parent=0 // pred_region
    _
  $region9: #{model_forward.15} parent=0 // pred_fallthru
    _
  // Predicated region
  $region10: #{model_forward.15} parent=0 // pred_check
    _
  $region11: #{model_forward.15} parent=0 // pred_check_branch
    %16 = sbr.rel (0) target = $region13
  $region12: #{model_forward.15} parent=0 // pred_region
    _
  $region13: #{model_forward.15} parent=0 // pred_fallthru
    _
  // Predicated region
  $region14: #{model_forward.15} parent=0 // pred_check
    _
  $region15: #{model_forward.15} parent=0 // pred_check_branch
    %18 = sbr.rel (0) target = $region17
  $region16: #{model_forward.15} parent=0 // pred_region
    _
  $region17: #{model_forward.15} parent=0 // pred_fallthru
    _
  // Predicated region
  $region18: #{model_forward.15} parent=0 // pred_check
    _
  $region19: #{model_forward.15} parent=0 // pred_check_branch
    %20 = sbr.rel (0) target = $region21
  $region20: #{model_forward.15} parent=0 // pred_region
    _
  $region21: #{model_forward.15} parent=0 // pred_fallthru
    _
  // Predicated region
  $region22: #{model_forward.15} parent=0 // pred_check
    _
  $region23: #{model_forward.15} parent=0 // pred_check_branch
    %22 = sbr.rel (0) target = $region25
  $region24: #{model_forward.15} parent=0 // pred_region
    _
  $region25: #{model_forward.15} parent=0 // pred_fallthru
    _
  %v23 = vld [vmem:[%s0] sm:$0xff]
  %v24 = vld [vmem:[%s0 + $0x8] sm:$0xff]
  %v25 = vld [vmem:[%s1] sm:$0xff]
  %v26 = vld [vmem:[%s1 + $0x8] sm:$0xff]
  %v27 = vld [vmem:[%s1 + $0x10] sm:$0xff]
  %v28 = vld [vmem:[%s1 + $0x18] sm:$0xff]
  %v29 = vld [vmem:[%s1 + $0x20] sm:$0xff]
  %v30 = vld [vmem:[%s1 + $0x28] sm:$0xff]
  %v31 = vld [vmem:[%s1 + $0x30] sm:$0xff]
  %v32 = vld [vmem:[%s1 + $0x38] sm:$0xff]
  %v33 = vld [vmem:[%s1 + $0x40] sm:$0xff]
  %v34 = vld [vmem:[%s1 + $0x48] sm:$0xff]
  %v35 = vld [vmem:[%s1 + $0x50] sm:$0xff]
  %v36 = vld [vmem:[%s1 + $0x58] sm:$0xff]
  %v37 = vld [vmem:[%s1 + $0x60] sm:$0xff]
  %v38 = vld [vmem:[%s1 + $0x68] sm:$0xff]
  %v39 = vld [vmem:[%s1 + $0x70] sm:$0xff]
  %v40 = vld [vmem:[%s1 + $0x78] sm:$0xff]
  %v41 = vld [vmem:[%s1 + $0x80] sm:$0xff]
  %v42 = vld [vmem:[%s1 + $0x88] sm:$0xff]
  %v43 = vld [vmem:[%s1 + $0x90] sm:$0xff]
  %v44 = vld [vmem:[%s1 + $0x98] sm:$0xff]
  %v45 = vld [vmem:[%s1 + $0xa0] sm:$0xff]
  %v46 = vld [vmem:[%s1 + $0xa8] sm:$0xff]
  %v47 = vld [vmem:[%s1 + $0xb0] sm:$0xff]
  %v48 = vld [vmem:[%s1 + $0xb8] sm:$0xff]
  %v49 = vld [vmem:[%s1 + $0xc0] sm:$0xff]
  %v50 = vld [vmem:[%s1 + $0xc8] sm:$0xff]
  %v51 = vld [vmem:[%s1 + $0xd0] sm:$0xff]
  %v52 = vld [vmem:[%s1 + $0xd8] sm:$0xff]
  %v53 = vld [vmem:[%s1 + $0xe0] sm:$0xff]
  %v54 = vld [vmem:[%s1 + $0xe8] sm:$0xff]
  %v55 = vld [vmem:[%s1 + $0xf0] sm:$0xff]
  %v56 = vld [vmem:[%s1 + $0xf8] sm:$0xff]
  %v57 = vld [vmem:[%s2] sm:$0x3]
  %v59 = vlaneseq
  %v60 = vshrl.u32 %v59, 7
  %v61 = vsub.s32 0, %v60
  %v62 = vrot.slane %v57, %v61
  %v63 = vlaneseq
  %v64 = vshrl.u32 %v63, 7
  %v65 = vsub.s32 1, %v64
  %v66 = vrot.slane %v57, %v65
  %v71 = vunpack.c.l.b16 %v23
  %v72 = vunpack.c.h.b16 %v23
  %v73 = vunpack.c.l.b16 %v24
  %v74 = vunpack.c.h.b16 %v24
  %v75 = vpack.c.b16 %v73, %v71
  %v76 = vpack.c.b16 %v74, %v72
  %v111 = vunpack.c.l.b16 %v25
  %v112 = vunpack.c.h.b16 %v25
  %v113 = vunpack.c.l.b16 %v26
  %v114 = vunpack.c.h.b16 %v26
  %v115 = vunpack.c.l.b16 %v27
  %v116 = vunpack.c.h.b16 %v27
  %v117 = vunpack.c.l.b16 %v28
  %v118 = vunpack.c.h.b16 %v28
  %v119 = vunpack.c.l.b16 %v29
  %v120 = vunpack.c.h.b16 %v29
  %v121 = vunpack.c.l.b16 %v30
  %v122 = vunpack.c.h.b16 %v30
  %v123 = vunpack.c.l.b16 %v31
  %v124 = vunpack.c.h.b16 %v31
  %v125 = vunpack.c.l.b16 %v32
  %v126 = vunpack.c.h.b16 %v32
  %v127 = vunpack.c.l.b16 %v33
  %v128 = vunpack.c.h.b16 %v33
  %v129 = vunpack.c.l.b16 %v34
  %v130 = vunpack.c.h.b16 %v34
  %v131 = vunpack.c.l.b16 %v35
  %v132 = vunpack.c.h.b16 %v35
  %v133 = vunpack.c.l.b16 %v36
  %v134 = vunpack.c.h.b16 %v36
  %v135 = vunpack.c.l.b16 %v37
  %v136 = vunpack.c.h.b16 %v37
  %v137 = vunpack.c.l.b16 %v38
  %v138 = vunpack.c.h.b16 %v38
  %v139 = vunpack.c.l.b16 %v39
  %v140 = vunpack.c.h.b16 %v39
  %v141 = vunpack.c.l.b16 %v40
  %v142 = vunpack.c.h.b16 %v40
  %v143 = vunpack.c.l.b16 %v41
  %v144 = vunpack.c.h.b16 %v41
  %v145 = vunpack.c.l.b16 %v42
  %v146 = vunpack.c.h.b16 %v42
  %v147 = vunpack.c.l.b16 %v43
  %v148 = vunpack.c.h.b16 %v43
  %v149 = vunpack.c.l.b16 %v44
  %v150 = vunpack.c.h.b16 %v44
  %v151 = vunpack.c.l.b16 %v45
  %v152 = vunpack.c.h.b16 %v45
  %v153 = vunpack.c.l.b16 %v46
  %v154 = vunpack.c.h.b16 %v46
  %v155 = vunpack.c.l.b16 %v47
  %v156 = vunpack.c.h.b16 %v47
  %v157 = vunpack.c.l.b16 %v48
  %v158 = vunpack.c.h.b16 %v48
  %v159 = vunpack.c.l.b16 %v49
  %v160 = vunpack.c.h.b16 %v49
  %v161 = vunpack.c.l.b16 %v50
  %v162 = vunpack.c.h.b16 %v50
  %v163 = vunpack.c.l.b16 %v51
  %v164 = vunpack.c.h.b16 %v51
  %v165 = vunpack.c.l.b16 %v52
  %v166 = vunpack.c.h.b16 %v52
  %v167 = vunpack.c.l.b16 %v53
  %v168 = vunpack.c.h.b16 %v53
  %v169 = vunpack.c.l.b16 %v54
  %v170 = vunpack.c.h.b16 %v54
  %v171 = vunpack.c.l.b16 %v55
  %v172 = vunpack.c.h.b16 %v55
  %v173 = vunpack.c.l.b16 %v56
  %v174 = vunpack.c.h.b16 %v56
  %v175 = vpack.c.b16 %v113, %v111
  %v176 = vpack.c.b16 %v114, %v112
  %v177 = vpack.c.b16 %v117, %v115
  %v178 = vpack.c.b16 %v118, %v116
  %v179 = vpack.c.b16 %v121, %v119
  %v180 = vpack.c.b16 %v122, %v120
  %v181 = vpack.c.b16 %v125, %v123
  %v182 = vpack.c.b16 %v126, %v124
  %v183 = vpack.c.b16 %v129, %v127
  %v184 = vpack.c.b16 %v130, %v128
  %v185 = vpack.c.b16 %v133, %v131
  %v186 = vpack.c.b16 %v134, %v132
  %v187 = vpack.c.b16 %v137, %v135
  %v188 = vpack.c.b16 %v138, %v136
  %v189 = vpack.c.b16 %v141, %v139
  %v190 = vpack.c.b16 %v142, %v140
  %v191 = vpack.c.b16 %v145, %v143
  %v192 = vpack.c.b16 %v146, %v144
  %v193 = vpack.c.b16 %v149, %v147
  %v194 = vpack.c.b16 %v150, %v148
  %v195 = vpack.c.b16 %v153, %v151
  %v196 = vpack.c.b16 %v154, %v152
  %v197 = vpack.c.b16 %v157, %v155
  %v198 = vpack.c.b16 %v158, %v156
  %v199 = vpack.c.b16 %v161, %v159
  %v200 = vpack.c.b16 %v162, %v160
  %v201 = vpack.c.b16 %v165, %v163
  %v202 = vpack.c.b16 %v166, %v164
  %v203 = vpack.c.b16 %v169, %v167
  %v204 = vpack.c.b16 %v170, %v168
  %v205 = vpack.c.b16 %v173, %v171
  %v206 = vpack.c.b16 %v174, %v172
  %239 = vmatprep.subr.bf16.mxu0 %v190
  %240 = vmatpush1.bf16.msra.mxu0 %v189
  %241 = vmatprep.subr.bf16.mxu0 %v188
  %242 = vmatpush1.bf16.msra.mxu0 %v187
  %243 = vmatprep.subr.bf16.mxu0 %v186
  %244 = vmatpush1.bf16.msra.mxu0 %v185
  %245 = vmatprep.subr.bf16.mxu0 %v184
  %246 = vmatpush1.bf16.msra.mxu0 %v183
  %247 = vmatprep.subr.bf16.mxu0 %v182
  %248 = vmatpush1.bf16.msra.mxu0 %v181
  %249 = vmatprep.subr.bf16.mxu0 %v180
  %250 = vmatpush1.bf16.msra.mxu0 %v179
  %251 = vmatprep.subr.bf16.mxu0 %v178
  %252 = vmatpush1.bf16.msra.mxu0 %v177
  %253 = vmatprep.subr.bf16.mxu0 %v176
  %254 = vmatpush1.bf16.msra.mxu0 %v175
  %255 = vmatprep.subr.bf16.mxu0 %v206
  %256 = vmatpush2.bf16.msra.mxu0 %v205
  %257 = vmatprep.subr.bf16.mxu0 %v204
  %258 = vmatpush2.bf16.msra.mxu0 %v203
  %259 = vmatprep.subr.bf16.mxu0 %v202
  %260 = vmatpush2.bf16.msra.mxu0 %v201
  %261 = vmatprep.subr.bf16.mxu0 %v200
  %262 = vmatpush2.bf16.msra.mxu0 %v199
  %263 = vmatprep.subr.bf16.mxu0 %v198
  %264 = vmatpush2.bf16.msra.mxu0 %v197
  %265 = vmatprep.subr.bf16.mxu0 %v196
  %266 = vmatpush2.bf16.msra.mxu0 %v195
  %267 = vmatprep.subr.bf16.mxu0 %v194
  %268 = vmatpush2.bf16.msra.mxu0 %v193
  %269 = vmatprep.subr.bf16.mxu0 %v192
  %270 = vmatpush2.bf16.msra.mxu0 %v191
  %271 = vmatprep.mubr.bf16.mxu0 %v76
  %272 = vmatmul.mubr.bf16.gmra.mxu0 %v75
  %v273 = vpop.f32.mrf.mxu0
  %v274 = vadd.f32 %v62, %v273
  %v275 = vpop.f32.mrf.mxu0
  %v276 = vadd.f32 %v66, %v275
  %v277 = vpop.f32.mrf.mxu0
  %v278 = vadd.f32 %v62, %v277
  %v279 = vpop.f32.mrf.mxu0
  %v280 = vadd.f32 %v66, %v279
  %281 = vdwg.mxu0
  %v282 = vld [vmem:[%s3] sm:$0xff]
  %v283 = vld [vmem:[%s3 + $0x8] sm:$0xff]
  %v284 = vunpack.c.l.bf16 %v282
  %v285 = vunpack.c.h.bf16 %v282
  %v286 = vunpack.c.l.bf16 %v283
  %v287 = vunpack.c.h.bf16 %v283
  %v288 = vadd.f32 %v274, %v284
  %v289 = vadd.f32 %v276, %v285
  %v290 = vadd.f32 %v278, %v286
  %v291 = vadd.f32 %v280, %v287
  %v292 = vadd.f32 %v288, %v289
  %293 = vadd.xlane.f32.xlu0 %v292
  %v294 = vpop.xlane.xlu0 %293
  %v295 = vadd.f32 %v290, %v291
  %296 = vadd.xlane.f32.xlu0 %v295
  %v297 = vpop.xlane.xlu0 %296
  %v298 = vrcp.pop 256.0
  %v299 = vmul.f32 %v294, %v298
  %v300 = vmul.f32 %v297, %v298
  %v301 = vsub.f32 %v288, %v299
  %v302 = vsub.f32 %v289, %v299
  %v303 = vsub.f32 %v290, %v300
  %v304 = vsub.f32 %v291, %v300
  %v305 = vmul.f32 %v301, %v301
  %v306 = vmul.f32 %v302, %v302
  %v307 = vmul.f32 %v303, %v303
  %v308 = vmul.f32 %v304, %v304
  %v309 = vadd.f32 %v305, %v306
  %310 = vadd.xlane.f32.xlu0 %v309
  %v311 = vpop.xlane.xlu0 %310
  %v312 = vadd.f32 %v307, %v308
  %313 = vadd.xlane.f32.xlu0 %v312
  %v314 = vpop.xlane.xlu0 %313
  %v315 = vmul.f32 %v311, %v298
  %v316 = vmul.f32 %v314, %v298
  %v317 = vadd.f32 %v315, 1e-05
  %v318 = vadd.f32 %v316, 1e-05
  %v319 = vrsqrt.pop %v317
  %v320 = vrsqrt.pop %v318
  %v321 = vmul.f32 %v301, %v319
  %v322 = vmul.f32 %v302, %v319
  %v323 = vmul.f32 %v303, %v320
  %v324 = vmul.f32 %v304, %v320
  %v325 = vld [vmem:[%s4] sm:$0x3]
  %v327 = vlaneseq
  %v328 = vshrl.u32 %v327, 7
  %v329 = vsub.s32 0, %v328
  %v330 = vrot.slane %v325, %v329
  %v331 = vlaneseq
  %v332 = vshrl.u32 %v331, 7
  %v333 = vsub.s32 1, %v332
  %v334 = vrot.slane %v325, %v333
  %v337 = vmul.f32 %v321, %v330
  %v338 = vmul.f32 %v322, %v334
  %v339 = vmul.f32 %v323, %v330
  %v340 = vmul.f32 %v324, %v334
  %v341 = vld [vmem:[%s5] sm:$0x3]
  %v343 = vlaneseq
  %v344 = vshrl.u32 %v343, 7
  %v345 = vsub.s32 0, %v344
  %v346 = vrot.slane %v341, %v345
  %v347 = vlaneseq
  %v348 = vshrl.u32 %v347, 7
  %v349 = vsub.s32 1, %v348
  %v350 = vrot.slane %v341, %v349
  %v353 = vadd.f32 %v337, %v346
  %v354 = vadd.f32 %v338, %v350
  %v355 = vadd.f32 %v339, %v346
  %v356 = vadd.f32 %v340, %v350
  %v357 = vpack.c.bf16 %v355, %v353
  %v358 = vpack.c.bf16 %v356, %v354
  %v361 = vunpack.c.l.b16 %v357
  %v362 = vunpack.c.l.b16 %v358
  %v363 = vunpack.c.h.b16 %v357
  %v364 = vunpack.c.h.b16 %v358
  %v365 = vpack.c.b16 %v362, %v361
  %v366 = vpack.c.b16 %v364, %v363
  %369 = vst [vmem:[%s6] sm:$0xff] %v365
  %370 = vst [vmem:[%s6 + $0x8] sm:$0xff] %v366
  // Predicated region
  $region26: #{model_forward.15} parent=0 // pred_check
    _
  $region27: #{model_forward.15} parent=0 // pred_check_branch
    %372 = sbr.rel (0) target = $region29
  $region28: #{model_forward.15} parent=0 // pred_region
    _
  $region29: #{model_forward.15} parent=0 // pred_fallthru
    _
  // Predicated region
  $region30: #{model_forward.15} parent=0 // pred_check
    _
  $region31: #{model_forward.15} parent=0 // pred_check_branch
    %374 = sbr.rel (0) target = $region33
  $region32: #{model_forward.15} parent=0 // pred_region
    _
  $region33: #{model_forward.15} parent=0 // pred_fallthru
    _

// kernel: model_forward.13
$region0: #{model_forward.13}
  #allocation0 [shape = 'u32[]', space=smem, size = 0x4, offset = 0x4, fixed_abs, tag = 'smem constant byte address 0x4 - core index']
  #allocation1 [shape = 'u32[144,128]{1,0:T(1,128)}', space=vmem, size = 0x12000, scoped, tag = 'internal scratch']
  %s0 = inlined_call_operand.vmem [shape: bf16[16,256], index: 0, kind: input, shape index: {}]
  %s1 = inlined_call_operand.hbm [shape: bf16[256,768], index: 1, kind: input, shape index: {}]
  %s2 = inlined_call_operand.vmem [shape: f32[1,768], index: 2, kind: input, shape index: {}]
  %s3 = inlined_call_operand.vmem [shape: bf16[16,768], index: 3, kind: output, shape index: {}]
  %s4 = sld [smem:[#allocation0]]
  $region26: #{model_forward.13} parent=0
    _
  %s6 = ssub.s32 1, %s4
  %s7 = scalar_select 0, %s6, %s4
  $region1: #{model_forward.13} parent=0
    #allocation2 [shape = 'u8[393216]{0}', space=vmem, size = 0x60000, scoped, tag = 'input window, operand 1, single buffered']
    #allocation3 [shape = 's32[1]{0}', space=sflag, size = 0x4, scoped, tag = 'scoped memory for model_forward.13']
    %8 = vsyncpa [#allocation3], 0
    // Predicated region
    $region2: #{model_forward.13} parent=1 // pred_check
      _
    $region3: #{model_forward.13} parent=1 // pred_check_branch
      %10 = sbr.rel (0) target = $region5
    $region4: #{model_forward.13} parent=1 // pred_region
      _
    $region5: #{model_forward.13} parent=1 // pred_fallthru
      _
    // Predicated region
    $region6: #{model_forward.13} parent=1 // pred_check
      _
    $region7: #{model_forward.13} parent=1 // pred_check_branch
      %12 = sbr.rel (0) target = $region9
    $region8: #{model_forward.13} parent=1 // pred_region
      %s14 = ssub.s32 12288, 12288
      %15 = vsyncadd [#allocation3], %s14
      %s16 = sshll.u32 [#allocation2], 4
      %s17 = int_to_ptr.vmem [resolvable:$true] %s16
      %22 = dma.hbm_to_vmem [thread:$0]  %s1, 12288, %s17, [#allocation3], 384, 384, 24
    $region9: #{model_forward.13} parent=1 // pred_fallthru
      _
    // Predicated region
    $region10: #{model_forward.13} parent=1 // pred_check
      _
    $region11: #{model_forward.13} parent=1 // pred_check_branch
      %24 = sbr.rel (0) target = $region13
    $region12: #{model_forward.13} parent=1 // pred_region
      _
    $region13: #{model_forward.13} parent=1 // pred_fallthru
      _
    // Predicated region
    $region14: #{model_forward.13} parent=1 // pred_check
      _
    $region15: #{model_forward.13} parent=1 // pred_check_branch
      %26 = sbr.rel (0) target = $region17
    $region16: #{model_forward.13} parent=1 // pred_region
      %27 = dma.done [#allocation3], 12288
    $region17: #{model_forward.13} parent=1 // pred_fallthru
      _
    %v28 = vld [vmem:[%s0] sm:$0xff]
    %v29 = vld [vmem:[%s0 + $0x8] sm:$0xff]
    %v30 = vld [vmem:[#allocation2] sm:$0xff]
    %v31 = vld [vmem:[#allocation2 + $0x8] sm:$0xff]
    %v32 = vld [vmem:[#allocation2 + $0x10] sm:$0xff]
    %v33 = vld [vmem:[#allocation2 + $0x18] sm:$0xff]
    %v34 = vld [vmem:[#allocation2 + $0x20] sm:$0xff]
    %v35 = vld [vmem:[#allocation2 + $0x28] sm:$0xff]
    %v36 = vld [vmem:[#allocation2 + $0x30] sm:$0xff]
    %v37 = vld [vmem:[#allocation2 + $0x38] sm:$0xff]
    %v38 = vld [vmem:[#allocation2 + $0x40] sm:$0xff]
    %v39 = vld [vmem:[#allocation2 + $0x48] sm:$0xff]
    %v40 = vld [vmem:[#allocation2 + $0x50] sm:$0xff]
    %v41 = vld [vmem:[#allocation2 + $0x58] sm:$0xff]
    %v42 = vld [vmem:[#allocation2 + $0x60] sm:$0xff]
    %v43 = vld [vmem:[#allocation2 + $0x68] sm:$0xff]
    %v44 = vld [vmem:[#allocation2 + $0x70] sm:$0xff]
    %v45 = vld [vmem:[#allocation2 + $0x78] sm:$0xff]
    %v46 = vld [vmem:[#allocation2 + $0x80] sm:$0xff]
    %v47 = vld [vmem:[#allocation2 + $0x88] sm:$0xff]
    %v48 = vld [vmem:[#allocation2 + $0x90] sm:$0xff]
    %v49 = vld [vmem:[#allocation2 + $0x98] sm:$0xff]
    %v50 = vld [vmem:[#allocation2 + $0xa0] sm:$0xff]
    %v51 = vld [vmem:[#allocation2 + $0xa8] sm:$0xff]
    %v52 = vld [vmem:[#allocation2 + $0xb0] sm:$0xff]
    %v53 = vld [vmem:[#allocation2 + $0xb8] sm:$0xff]
    %v54 = vld [vmem:[#allocation2 + $0xc0] sm:$0xff]
    %v55 = vld [vmem:[#allocation2 + $0xc8] sm:$0xff]
    %v56 = vld [vmem:[#allocation2 + $0xd0] sm:$0xff]
    %v57 = vld [vmem:[#allocation2 + $0xd8] sm:$0xff]
    %v58 = vld [vmem:[#allocation2 + $0xe0] sm:$0xff]
    %v59 = vld [vmem:[#allocation2 + $0xe8] sm:$0xff]
    %v60 = vld [vmem:[#allocation2 + $0xf0] sm:$0xff]
    %v61 = vld [vmem:[#allocation2 + $0xf8] sm:$0xff]
    %v62 = vld [vmem:[#allocation2 + $0x100] sm:$0xff]
    %v63 = vld [vmem:[#allocation2 + $0x108] sm:$0xff]
    %v64 = vld [vmem:[#allocation2 + $0x110] sm:$0xff]
    %v65 = vld [vmem:[#allocation2 + $0x118] sm:$0xff]
    %v66 = vld [vmem:[#allocation2 + $0x120] sm:$0xff]
    %v67 = vld [vmem:[#allocation2 + $0x128] sm:$0xff]
    %v68 = vld [vmem:[#allocation2 + $0x130] sm:$0xff]
    %v69 = vld [vmem:[#allocation2 + $0x138] sm:$0xff]
    %v70 = vld [vmem:[#allocation2 + $0x140] sm:$0xff]
    %v71 = vld [vmem:[#allocation2 + $0x148] sm:$0xff]
    %v72 = vld [vmem:[#allocation2 + $0x150] sm:$0xff]
    %v73 = vld [vmem:[#allocation2 + $0x158] sm:$0xff]
    %v74 = vld [vmem:[#allocation2 + $0x160] sm:$0xff]
    %v75 = vld [vmem:[#allocation2 + $0x168] sm:$0xff]
    %v76 = vld [vmem:[#allocation2 + $0x170] sm:$0xff]
    %v77 = vld [vmem:[#allocation2 + $0x178] sm:$0xff]
    %v78 = vld [vmem:[#allocation2 + $0x180] sm:$0xff]
    %v79 = vld [vmem:[#allocation2 + $0x188] sm:$0xff]
    %v80 = vld [vmem:[#allocation2 + $0x190] sm:$0xff]
    %v81 = vld [vmem:[#allocation2 + $0x198] sm:$0xff]
    %v82 = vld [vmem:[#allocation2 + $0x1a0] sm:$0xff]
    %v83 = vld [vmem:[#allocation2 + $0x1a8] sm:$0xff]
    %v84 = vld [vmem:[#allocation2 + $0x1b0] sm:$0xff]
    %v85 = vld [vmem:[#allocation2 + $0x1b8] sm:$0xff]
    %v86 = vld [vmem:[#allocation2 + $0x1c0] sm:$0xff]
    %v87 = vld [vmem:[#allocation2 + $0x1c8] sm:$0xff]
    %v88 = vld [vmem:[#allocation2 + $0x1d0] sm:$0xff]
    %v89 = vld [vmem:[#allocation2 + $0x1d8] sm:$0xff]
    %v90 = vld [vmem:[#allocation2 + $0x1e0] sm:$0xff]
    %v91 = vld [vmem:[#allocation2 + $0x1e8] sm:$0xff]
    %v92 = vld [vmem:[#allocation2 + $0x1f0] sm:$0xff]
    %v93 = vld [vmem:[#allocation2 + $0x1f8] sm:$0xff]
    %v94 = vld [vmem:[#allocation2 + $0x200] sm:$0xff]
    %v95 = vld [vmem:[#allocation2 + $0x208] sm:$0xff]
    %v96 = vld [vmem:[#allocation2 + $0x210] sm:$0xff]
    %v97 = vld [vmem:[#allocation2 + $0x218] sm:$0xff]
    %v98 = vld [vmem:[#allocation2 + $0x220] sm:$0xff]
    %v99 = vld [vmem:[#allocation2 + $0x228] sm:$0xff]
    %v100 = vld [vmem:[#allocation2 + $0x230] sm:$0xff]
    %v101 = vld [vmem:[#allocation2 + $0x238] sm:$0xff]
    %v102 = vld [vmem:[#allocation2 + $0x240] sm:$0xff]
    %v103 = vld [vmem:[#allocation2 + $0x248] sm:$0xff]
    %v104 = vld [vmem:[#allocation2 + $0x250] sm:$0xff]
    %v105 = vld [vmem:[#allocation2 + $0x258] sm:$0xff]
    %v106 = vld [vmem:[#allocation2 + $0x260] sm:$0xff]
    %v107 = vld [vmem:[#allocation2 + $0x268] sm:$0xff]
    %v108 = vld [vmem:[#allocation2 + $0x270] sm:$0xff]
    %v109 = vld [vmem:[#allocation2 + $0x278] sm:$0xff]
    %v110 = vld [vmem:[#allocation2 + $0x280] sm:$0xff]
    %v111 = vld [vmem:[#allocation2 + $0x288] sm:$0xff]
    %v112 = vld [vmem:[#allocation2 + $0x290] sm:$0xff]
    %v113 = vld [vmem:[#allocation2 + $0x298] sm:$0xff]
    %v114 = vld [vmem:[#allocation2 + $0x2a0] sm:$0xff]
    %v115 = vld [vmem:[#allocation2 + $0x2a8] sm:$0xff]
    %v116 = vld [vmem:[#allocation2 + $0x2b0] sm:$0xff]
    %v117 = vld [vmem:[#allocation2 + $0x2b8] sm:$0xff]
    %v118 = vld [vmem:[#allocation2 + $0x2c0] sm:$0xff]
    %v119 = vld [vmem:[#allocation2 + $0x2c8] sm:$0xff]
    %v120 = vld [vmem:[#allocation2 + $0x2d0] sm:$0xff]
    %v121 = vld [vmem:[#allocation2 + $0x2d8] sm:$0xff]
    %v122 = vld [vmem:[#allocation2 + $0x2e0] sm:$0xff]
    %v123 = vld [vmem:[#allocation2 + $0x2e8] sm:$0xff]
    %v124 = vld [vmem:[#allocation2 + $0x2f0] sm:$0xff]
    %v125 = vld [vmem:[#allocation2 + $0x2f8] sm:$0xff]
    %v126 = vld [vmem:[%s2] sm:$0x3f]
    %v128 = vlaneseq
    %v129 = vshrl.u32 %v128, 7
    %v130 = vsub.s32 0, %v129
    %v131 = vrot.slane %v126, %v130
    %v132 = vlaneseq
    %v133 = vshrl.u32 %v132, 7
    %v134 = vsub.s32 1, %v133
    %v135 = vrot.slane %v126, %v134
    %v136 = vlaneseq
    %v137 = vshrl.u32 %v136, 7
    %v138 = vsub.s32 2, %v137
    %v139 = vrot.slane %v126, %v138
    %v140 = vlaneseq
    %v141 = vshrl.u32 %v140, 7
    %v142 = vsub.s32 3, %v141
    %v143 = vrot.slane %v126, %v142
    %v144 = vlaneseq
    %v145 = vshrl.u32 %v144, 7
    %v146 = vsub.s32 4, %v145
    %v147 = vrot.slane %v126, %v146
    %v148 = vlaneseq
    %v149 = vshrl.u32 %v148, 7
    %v150 = vsub.s32 5, %v149
    %v151 = vrot.slane %v126, %v150
    %v160 = vunpack.c.l.b16 %v28
    %v161 = vunpack.c.h.b16 %v28
    %v162 = vunpack.c.l.b16 %v29
    %v163 = vunpack.c.h.b16 %v29
    %v164 = vpack.c.b16 %v162, %v160
    %v165 = vpack.c.b16 %v163, %v161
    %v264 = vunpack.c.l.b16 %v30
    %v265 = vunpack.c.h.b16 %v30
    %v266 = vunpack.c.l.b16 %v31
    %v267 = vunpack.c.h.b16 %v31
    %v268 = vunpack.c.l.b16 %v32
    %v269 = vunpack.c.h.b16 %v32
    %v270 = vunpack.c.l.b16 %v33
    %v271 = vunpack.c.h.b16 %v33
    %v272 = vunpack.c.l.b16 %v34
    %v273 = vunpack.c.h.b16 %v34
    %v274 = vunpack.c.l.b16 %v35
    %v275 = vunpack.c.h.b16 %v35
    %v276 = vunpack.c.l.b16 %v36
    %v277 = vunpack.c.h.b16 %v36
    %v278 = vunpack.c.l.b16 %v37
    %v279 = vunpack.c.h.b16 %v37
    %v280 = vunpack.c.l.b16 %v38
    %v281 = vunpack.c.h.b16 %v38
    %v282 = vunpack.c.l.b16 %v39
    %v283 = vunpack.c.h.b16 %v39
    %v284 = vunpack.c.l.b16 %v40
    %v285 = vunpack.c.h.b16 %v40
    %v286 = vunpack.c.l.b16 %v41
    %v287 = vunpack.c.h.b16 %v41
    %v288 = vunpack.c.l.b16 %v42
    %v289 = vunpack.c.h.b16 %v42
    %v290 = vunpack.c.l.b16 %v43
    %v291 = vunpack.c.h.b16 %v43
    %v292 = vunpack.c.l.b16 %v44
    %v293 = vunpack.c.h.b16 %v44
    %v294 = vunpack.c.l.b16 %v45
    %v295 = vunpack.c.h.b16 %v45
    %v296 = vunpack.c.l.b16 %v46
    %v297 = vunpack.c.h.b16 %v46
    %v298 = vunpack.c.l.b16 %v47
    %v299 = vunpack.c.h.b16 %v47
    %v300 = vunpack.c.l.b16 %v48
    %v301 = vunpack.c.h.b16 %v48
    %v302 = vunpack.c.l.b16 %v49
    %v303 = vunpack.c.h.b16 %v49
    %v304 = vunpack.c.l.b16 %v50
    %v305 = vunpack.c.h.b16 %v50
    %v306 = vunpack.c.l.b16 %v51
    %v307 = vunpack.c.h.b16 %v51
    %v308 = vunpack.c.l.b16 %v52
    %v309 = vunpack.c.h.b16 %v52
    %v310 = vunpack.c.l.b16 %v53
    %v311 = vunpack.c.h.b16 %v53
    %v312 = vunpack.c.l.b16 %v54
    %v313 = vunpack.c.h.b16 %v54
    %v314 = vunpack.c.l.b16 %v55
    %v315 = vunpack.c.h.b16 %v55
    %v316 = vunpack.c.l.b16 %v56
    %v317 = vunpack.c.h.b16 %v56
    %v318 = vunpack.c.l.b16 %v57
    %v319 = vunpack.c.h.b16 %v57
    %v320 = vunpack.c.l.b16 %v58
    %v321 = vunpack.c.h.b16 %v58
    %v322 = vunpack.c.l.b16 %v59
    %v323 = vunpack.c.h.b16 %v59
    %v324 = vunpack.c.l.b16 %v60
    %v325 = vunpack.c.h.b16 %v60
    %v326 = vunpack.c.l.b16 %v61
    %v327 = vunpack.c.h.b16 %v61
    %v328 = vunpack.c.l.b16 %v62
    %v329 = vunpack.c.h.b16 %v62
    %v330 = vunpack.c.l.b16 %v63
    %v331 = vunpack.c.h.b16 %v63
    %v332 = vunpack.c.l.b16 %v64
    %v333 = vunpack.c.h.b16 %v64
    %v334 = vunpack.c.l.b16 %v65
    %v335 = vunpack.c.h.b16 %v65
    %v336 = vunpack.c.l.b16 %v66
    %v337 = vunpack.c.h.b16 %v66
    %v338 = vunpack.c.l.b16 %v67
    %v339 = vunpack.c.h.b16 %v67
    %v340 = vunpack.c.l.b16 %v68
    %v341 = vunpack.c.h.b16 %v68
    %v342 = vunpack.c.l.b16 %v69
    %v343 = vunpack.c.h.b16 %v69
    %v344 = vunpack.c.l.b16 %v70
    %v345 = vunpack.c.h.b16 %v70
    %v346 = vunpack.c.l.b16 %v71
    %v347 = vunpack.c.h.b16 %v71
    %v348 = vunpack.c.l.b16 %v72
    %v349 = vunpack.c.h.b16 %v72
    %v350 = vunpack.c.l.b16 %v73
    %v351 = vunpack.c.h.b16 %v73
    %v352 = vunpack.c.l.b16 %v74
    %v353 = vunpack.c.h.b16 %v74
    %v354 = vunpack.c.l.b16 %v75
    %v355 = vunpack.c.h.b16 %v75
    %v356 = vunpack.c.l.b16 %v76
    %v357 = vunpack.c.h.b16 %v76
    %v358 = vunpack.c.l.b16 %v77
    %v359 = vunpack.c.h.b16 %v77
    %v360 = vunpack.c.l.b16 %v78
    %v361 = vunpack.c.h.b16 %v78
    %v362 = vunpack.c.l.b16 %v79
    %v363 = vunpack.c.h.b16 %v79
    %v364 = vunpack.c.l.b16 %v80
    %v365 = vunpack.c.h.b16 %v80
    %v366 = vunpack.c.l.b16 %v81
    %v367 = vunpack.c.h.b16 %v81
    %v368 = vunpack.c.l.b16 %v82
    %v369 = vunpack.c.h.b16 %v82
    %v370 = vunpack.c.l.b16 %v83
    %v371 = vunpack.c.h.b16 %v83
    %v372 = vunpack.c.l.b16 %v84
    %v373 = vunpack.c.h.b16 %v84
    %v374 = vunpack.c.l.b16 %v85
    %v375 = vunpack.c.h.b16 %v85
    %v376 = vunpack.c.l.b16 %v86
    %v377 = vunpack.c.h.b16 %v86
    %v378 = vunpack.c.l.b16 %v87
    %v379 = vunpack.c.h.b16 %v87
    %v380 = vunpack.c.l.b16 %v88
    %v381 = vunpack.c.h.b16 %v88
    %v382 = vunpack.c.l.b16 %v89
    %v383 = vunpack.c.h.b16 %v89
    %v384 = vunpack.c.l.b16 %v90
    %v385 = vunpack.c.h.b16 %v90
    %v386 = vunpack.c.l.b16 %v91
    %v387 = vunpack.c.h.b16 %v91
    %v388 = vunpack.c.l.b16 %v92
    %v389 = vunpack.c.h.b16 %v92
    %v390 = vunpack.c.l.b16 %v93
    %v391 = vunpack.c.h.b16 %v93
    %v392 = vunpack.c.l.b16 %v94
    %v393 = vunpack.c.h.b16 %v94
    %v394 = vunpack.c.l.b16 %v95
    %v395 = vunpack.c.h.b16 %v95
    %v396 = vunpack.c.l.b16 %v96
    %v397 = vunpack.c.h.b16 %v96
    %v398 = vunpack.c.l.b16 %v97
    %v399 = vunpack.c.h.b16 %v97
    %v400 = vunpack.c.l.b16 %v98
    %v401 = vunpack.c.h.b16 %v98
    %v402 = vunpack.c.l.b16 %v99
    %v403 = vunpack.c.h.b16 %v99
    %v404 = vunpack.c.l.b16 %v100
    %v405 = vunpack.c.h.b16 %v100
    %v406 = vunpack.c.l.b16 %v101
    %v407 = vunpack.c.h.b16 %v101
    %v408 = vunpack.c.l.b16 %v102
    %v409 = vunpack.c.h.b16 %v102
    %v410 = vunpack.c.l.b16 %v103
    %v411 = vunpack.c.h.b16 %v103
    %v412 = vunpack.c.l.b16 %v104
    %v413 = vunpack.c.h.b16 %v104
    %v414 = vunpack.c.l.b16 %v105
    %v415 = vunpack.c.h.b16 %v105
    %v416 = vunpack.c.l.b16 %v106
    %v417 = vunpack.c.h.b16 %v106
    %v418 = vunpack.c.l.b16 %v107
    %v419 = vunpack.c.h.b16 %v107
    %v420 = vunpack.c.l.b16 %v108
    %v421 = vunpack.c.h.b16 %v108
    %v422 = vunpack.c.l.b16 %v109
    %v423 = vunpack.c.h.b16 %v109
    %v424 = vunpack.c.l.b16 %v110
    %v425 = vunpack.c.h.b16 %v110
    %v426 = vunpack.c.l.b16 %v111
    %v427 = vunpack.c.h.b16 %v111
    %v428 = vunpack.c.l.b16 %v112
    %v429 = vunpack.c.h.b16 %v112
    %v430 = vunpack.c.l.b16 %v113
    %v431 = vunpack.c.h.b16 %v113
    %v432 = vunpack.c.l.b16 %v114
    %v433 = vunpack.c.h.b16 %v114
    %v434 = vunpack.c.l.b16 %v115
    %v435 = vunpack.c.h.b16 %v115
    %v436 = vunpack.c.l.b16 %v116
    %v437 = vunpack.c.h.b16 %v116
    %v438 = vunpack.c.l.b16 %v117
    %v439 = vunpack.c.h.b16 %v117
    %v440 = vunpack.c.l.b16 %v118
    %v441 = vunpack.c.h.b16 %v118
    %v442 = vunpack.c.l.b16 %v119
    %v443 = vunpack.c.h.b16 %v119
    %v444 = vunpack.c.l.b16 %v120
    %v445 = vunpack.c.h.b16 %v120
    %v446 = vunpack.c.l.b16 %v121
    %v447 = vunpack.c.h.b16 %v121
    %v448 = vunpack.c.l.b16 %v122
    %v449 = vunpack.c.h.b16 %v122
    %v450 = vunpack.c.l.b16 %v123
    %v451 = vunpack.c.h.b16 %v123
    %v452 = vunpack.c.l.b16 %v124
    %v453 = vunpack.c.h.b16 %v124
    %v454 = vunpack.c.l.b16 %v125
    %v455 = vunpack.c.h.b16 %v125
    %v456 = vpack.c.b16 %v270, %v264
    %v457 = vpack.c.b16 %v271, %v265
    %v458 = vpack.c.b16 %v272, %v266
    %v459 = vpack.c.b16 %v273, %v267
    %v460 = vpack.c.b16 %v274, %v268
    %v461 = vpack.c.b16 %v275, %v269
    %v462 = vpack.c.b16 %v282, %v276
    %v463 = vpack.c.b16 %v283, %v277
    %v464 = vpack.c.b16 %v284, %v278
    %v465 = vpack.c.b16 %v285, %v279
    %v466 = vpack.c.b16 %v286, %v280
    %v467 = vpack.c.b16 %v287, %v281
    %v468 = vpack.c.b16 %v294, %v288
    %v469 = vpack.c.b16 %v295, %v289
    %v470 = vpack.c.b16 %v296, %v290
    %v471 = vpack.c.b16 %v297, %v291
    %v472 = vpack.c.b16 %v298, %v292
    %v473 = vpack.c.b16 %v299, %v293
    %v474 = vpack.c.b16 %v306, %v300
    %v475 = vpack.c.b16 %v307, %v301
    %v476 = vpack.c.b16 %v308, %v302
    %v477 = vpack.c.b16 %v309, %v303
    %v478 = vpack.c.b16 %v310, %v304
    %v479 = vpack.c.b16 %v311, %v305
    %v480 = vpack.c.b16 %v318, %v312
    %v481 = vpack.c.b16 %v319, %v313
    %v482 = vpack.c.b16 %v320, %v314
    %v483 = vpack.c.b16 %v321, %v315
    %v484 = vpack.c.b16 %v322, %v316
    %v485 = vpack.c.b16 %v323, %v317
    %v486 = vpack.c.b16 %v330, %v324
    %v487 = vpack.c.b16 %v331, %v325
    %v488 = vpack.c.b16 %v332, %v326
    %v489 = vpack.c.b16 %v333, %v327
    %v490 = vpack.c.b16 %v334, %v328
    %v491 = vpack.c.b16 %v335, %v329
    %v492 = vpack.c.b16 %v342, %v336
    %v493 = vpack.c.b16 %v343, %v337
    %v494 = vpack.c.b16 %v344, %v338
    %v495 = vpack.c.b16 %v345, %v339
    %v496 = vpack.c.b16 %v346, %v340
    %v497 = vpack.c.b16 %v347, %v341
    %v498 = vpack.c.b16 %v354, %v348
    %v499 = vpack.c.b16 %v355, %v349
    %v500 = vpack.c.b16 %v356, %v350
    %v501 = vpack.c.b16 %v357, %v351
    %v502 = vpack.c.b16 %v358, %v352
    %v503 = vpack.c.b16 %v359, %v353
    %v504 = vpack.c.b16 %v366, %v360
    %v505 = vpack.c.b16 %v367, %v361
    %v506 = vpack.c.b16 %v368, %v362
    %v507 = vpack.c.b16 %v369, %v363
    %v508 = vpack.c.b16 %v370, %v364
    %v509 = vpack.c.b16 %v371, %v365
    %v510 = vpack.c.b16 %v378, %v372
    %v511 = vpack.c.b16 %v379, %v373
    %v512 = vpack.c.b16 %v380, %v374
    %v513 = vpack.c.b16 %v381, %v375
    %v514 = vpack.c.b16 %v382, %v376
    %v515 = vpack.c.b16 %v383, %v377
    %v516 = vpack.c.b16 %v390, %v384
    %v517 = vpack.c.b16 %v391, %v385
    %v518 = vpack.c.b16 %v392, %v386
    %v519 = vpack.c.b16 %v393, %v387
    %v520 = vpack.c.b16 %v394, %v388
    %v521 = vpack.c.b16 %v395, %v389
    %v522 = vpack.c.b16 %v402, %v396
    %v523 = vpack.c.b16 %v403, %v397
    %v524 = vpack.c.b16 %v404, %v398
    %v525 = vpack.c.b16 %v405, %v399
    %v526 = vpack.c.b16 %v406, %v400
    %v527 = vpack.c.b16 %v407, %v401
    %v528 = vpack.c.b16 %v414, %v408
    %v529 = vpack.c.b16 %v415, %v409
    %v530 = vpack.c.b16 %v416, %v410
    %v531 = vpack.c.b16 %v417, %v411
    %v532 = vpack.c.b16 %v418, %v412
    %v533 = vpack.c.b16 %v419, %v413
    %v534 = vpack.c.b16 %v426, %v420
    %v535 = vpack.c.b16 %v427, %v421
    %v536 = vpack.c.b16 %v428, %v422
    %v537 = vpack.c.b16 %v429, %v423
    %v538 = vpack.c.b16 %v430, %v424
    %v539 = vpack.c.b16 %v431, %v425
    %v540 = vpack.c.b16 %v438, %v432
    %v541 = vpack.c.b16 %v439, %v433
    %v542 = vpack.c.b16 %v440, %v434
    %v543 = vpack.c.b16 %v441, %v435
    %v544 = vpack.c.b16 %v442, %v436
    %v545 = vpack.c.b16 %v443, %v437
    %v546 = vpack.c.b16 %v450, %v444
    %v547 = vpack.c.b16 %v451, %v445
    %v548 = vpack.c.b16 %v452, %v446
    %v549 = vpack.c.b16 %v453, %v447
    %v550 = vpack.c.b16 %v454, %v448
    %v551 = vpack.c.b16 %v455, %v449
    %648 = vmatprep.subr.bf16.mxu0 %v499
    %649 = vmatpush1.bf16.msra.mxu0 %v498
    %650 = vmatprep.subr.bf16.mxu0 %v493
    %651 = vmatpush1.bf16.msra.mxu0 %v492
    %652 = vmatprep.subr.bf16.mxu0 %v487
    %653 = vmatpush1.bf16.msra.mxu0 %v486
    %654 = vmatprep.subr.bf16.mxu0 %v481
    %655 = vmatpush1.bf16.msra.mxu0 %v480
    %656 = vmatprep.subr.bf16.mxu0 %v475
    %657 = vmatpush1.bf16.msra.mxu0 %v474
    %658 = vmatprep.subr.bf16.mxu0 %v469
    %659 = vmatpush1.bf16.msra.mxu0 %v468
    %660 = vmatprep.subr.bf16.mxu0 %v463
    %661 = vmatpush1.bf16.msra.mxu0 %v462
    %662 = vmatprep.subr.bf16.mxu0 %v457
    %663 = vmatpush1.bf16.msra.mxu0 %v456
    %664 = vmatprep.subr.bf16.mxu0 %v547
    %665 = vmatpush2.bf16.msra.mxu0 %v546
    %666 = vmatprep.subr.bf16.mxu0 %v541
    %667 = vmatpush2.bf16.msra.mxu0 %v540
    %668 = vmatprep.subr.bf16.mxu0 %v535
    %669 = vmatpush2.bf16.msra.mxu0 %v534
    %670 = vmatprep.subr.bf16.mxu0 %v529
    %671 = vmatpush2.bf16.msra.mxu0 %v528
    %672 = vmatprep.subr.bf16.mxu0 %v523
    %673 = vmatpush2.bf16.msra.mxu0 %v522
    %674 = vmatprep.subr.bf16.mxu0 %v517
    %675 = vmatpush2.bf16.msra.mxu0 %v516
    %676 = vmatprep.subr.bf16.mxu0 %v511
    %677 = vmatpush2.bf16.msra.mxu0 %v510
    %678 = vmatprep.subr.bf16.mxu0 %v505
    %679 = vmatpush2.bf16.msra.mxu0 %v504
    %680 = vmatprep.mubr.bf16.mxu0 %v165
    %681 = vmatmul.mubr.bf16.gmra.mxu0 %v164
    %v682 = vpop.f32.mrf.mxu0
    %v683 = vadd.f32 %v131, %v682
    %v684 = vpop.f32.mrf.mxu0
    %v685 = vadd.f32 %v135, %v684
    %v686 = vpop.f32.mrf.mxu0
    %v687 = vadd.f32 %v131, %v686
    %v688 = vpop.f32.mrf.mxu0
    %v689 = vadd.f32 %v135, %v688
    %690 = vdwg.mxu0
    %691 = vmatprep.subr.bf16.mxu0 %v501
    %692 = vmatpush1.bf16.msra.mxu0 %v500
    %693 = vmatprep.subr.bf16.mxu0 %v495
    %694 = vmatpush1.bf16.msra.mxu0 %v494
    %695 = vmatprep.subr.bf16.mxu0 %v489
    %696 = vmatpush1.bf16.msra.mxu0 %v488
    %697 = vmatprep.subr.bf16.mxu0 %v483
    %698 = vmatpush1.bf16.msra.mxu0 %v482
    %699 = vmatprep.subr.bf16.mxu0 %v477
    %700 = vmatpush1.bf16.msra.mxu0 %v476
    %701 = vmatprep.subr.bf16.mxu0 %v471
    %702 = vmatpush1.bf16.msra.mxu0 %v470
    %703 = vmatprep.subr.bf16.mxu0 %v465
    %704 = vmatpush1.bf16.msra.mxu0 %v464
    %705 = vmatprep.subr.bf16.mxu0 %v459
    %706 = vmatpush1.bf16.msra.mxu0 %v458
    %707 = vmatprep.subr.bf16.mxu0 %v549
    %708 = vmatpush2.bf16.msra.mxu0 %v548
    %709 = vmatprep.subr.bf16.mxu0 %v543
    %710 = vmatpush2.bf16.msra.mxu0 %v542
    %711 = vmatprep.subr.bf16.mxu0 %v537
    %712 = vmatpush2.bf16.msra.mxu0 %v536
    %713 = vmatprep.subr.bf16.mxu0 %v531
    %714 = vmatpush2.bf16.msra.mxu0 %v530
    %715 = vmatprep.subr.bf16.mxu0 %v525
    %716 = vmatpush2.bf16.msra.mxu0 %v524
    %717 = vmatprep.subr.bf16.mxu0 %v519
    %718 = vmatpush2.bf16.msra.mxu0 %v518
    %719 = vmatprep.subr.bf16.mxu0 %v513
    %720 = vmatpush2.bf16.msra.mxu0 %v512
    %721 = vmatprep.subr.bf16.mxu0 %v507
    %722 = vmatpush2.bf16.msra.mxu0 %v506
    %723 = vmatprep.mubr.bf16.mxu0 %v165
    %724 = vmatmul.mubr.bf16.gmra.mxu0 %v164
    %v725 = vpop.f32.mrf.mxu0
    %v726 = vadd.f32 %v139, %v725
    %v727 = vpop.f32.mrf.mxu0
    %v728 = vadd.f32 %v143, %v727
    %v729 = vpop.f32.mrf.mxu0
    %v730 = vadd.f32 %v139, %v729
    %v731 = vpop.f32.mrf.mxu0
    %v732 = vadd.f32 %v143, %v731
    %733 = vdwg.mxu0
    %734 = vmatprep.subr.bf16.mxu0 %v503
    %735 = vmatpush1.bf16.msra.mxu0 %v502
    %736 = vmatprep.subr.bf16.mxu0 %v497
    %737 = vmatpush1.bf16.msra.mxu0 %v496
    %738 = vmatprep.subr.bf16.mxu0 %v491
    %739 = vmatpush1.bf16.msra.mxu0 %v490
    %740 = vmatprep.subr.bf16.mxu0 %v485
    %741 = vmatpush1.bf16.msra.mxu0 %v484
    %742 = vmatprep.subr.bf16.mxu0 %v479
    %743 = vmatpush1.bf16.msra.mxu0 %v478
    %744 = vmatprep.subr.bf16.mxu0 %v473
    %745 = vmatpush1.bf16.msra.mxu0 %v472
    %746 = vmatprep.subr.bf16.mxu0 %v467
    %747 = vmatpush1.bf16.msra.mxu0 %v466
    %748 = vmatprep.subr.bf16.mxu0 %v461
    %749 = vmatpush1.bf16.msra.mxu0 %v460
    %750 = vmatprep.subr.bf16.mxu0 %v551
    %751 = vmatpush2.bf16.msra.mxu0 %v550
    %752 = vmatprep.subr.bf16.mxu0 %v545
    %753 = vmatpush2.bf16.msra.mxu0 %v544
    %754 = vmatprep.subr.bf16.mxu0 %v539
    %755 = vmatpush2.bf16.msra.mxu0 %v538
    %756 = vmatprep.subr.bf16.mxu0 %v533
    %757 = vmatpush2.bf16.msra.mxu0 %v532
    %758 = vmatprep.subr.bf16.mxu0 %v527
    %759 = vmatpush2.bf16.msra.mxu0 %v526
    %760 = vmatprep.subr.bf16.mxu0 %v521
    %761 = vmatpush2.bf16.msra.mxu0 %v520
    %762 = vmatprep.subr.bf16.mxu0 %v515
    %763 = vmatpush2.bf16.msra.mxu0 %v514
    %764 = vmatprep.subr.bf16.mxu0 %v509
    %765 = vmatpush2.bf16.msra.mxu0 %v508
    %766 = vmatprep.mubr.bf16.mxu0 %v165
    %767 = vmatmul.mubr.bf16.gmra.mxu0 %v164
    %v768 = vpop.f32.mrf.mxu0
    %v769 = vadd.f32 %v147, %v768
    %v770 = vpop.f32.mrf.mxu0
    %v771 = vadd.f32 %v151, %v770
    %v772 = vpop.f32.mrf.mxu0
    %v773 = vadd.f32 %v147, %v772
    %v774 = vpop.f32.mrf.mxu0
    %v775 = vadd.f32 %v151, %v774
    %776 = vdwg.mxu0
    %v777 = vpack.c.bf16 %v687, %v683
    %v778 = vpack.c.bf16 %v689, %v685
    %v779 = vpack.c.bf16 %v730, %v726
    %v780 = vpack.c.bf16 %v732, %v728
    %v781 = vpack.c.bf16 %v773, %v769
    %v782 = vpack.c.bf16 %v775, %v771
    %v789 = vunpack.c.l.b16 %v777
    %v790 = vunpack.c.l.b16 %v778
    %v791 = vunpack.c.l.b16 %v779
    %v792 = vunpack.c.l.b16 %v780
    %v793 = vunpack.c.l.b16 %v781
    %v794 = vunpack.c.l.b16 %v782
    %v795 = vunpack.c.h.b16 %v777
    %v796 = vunpack.c.h.b16 %v778
    %v797 = vunpack.c.h.b16 %v779
    %v798 = vunpack.c.h.b16 %v780
    %v799 = vunpack.c.h.b16 %v781
    %v800 = vunpack.c.h.b16 %v782
    %v801 = vpack.c.b16 %v790, %v789
    %v802 = vpack.c.b16 %v792, %v791
    %v803 = vpack.c.b16 %v794, %v793
    %v804 = vpack.c.b16 %v796, %v795
    %v805 = vpack.c.b16 %v798, %v797
    %v806 = vpack.c.b16 %v800, %v799
    %813 = vst [vmem:[%s3] sm:$0xff] %v801
    %814 = vst [vmem:[%s3 + $0x8] sm:$0xff] %v802
    %815 = vst [vmem:[%s3 + $0x10] sm:$0xff] %v803
    %816 = vst [vmem:[%s3 + $0x18] sm:$0xff] %v804
    %817 = vst [vmem:[%s3 + $0x20] sm:$0xff] %v805
    %818 = vst [vmem:[%s3 + $0x28] sm:$0xff] %v806
    // Predicated region
    $region18: #{model_forward.13} parent=1 // pred_check
      _
    $region19: #{model_forward.13} parent=1 // pred_check_branch
      %820 = sbr.rel (0) target = $region21
    $region20: #{model_forward.13} parent=1 // pred_region
      _
    $region21: #{model_forward.13} parent=1 // pred_fallthru
      _
    // Predicated region
    $region22: #{model_forward.13} parent=1 // pred_check
      _
    $region23: #{model_forward.13} parent=1 // pred_check_branch
      %822 = sbr.rel (0) target = $region25
    $region24: #{model_forward.13} parent=1 // pred_region
      _
    $region25: #{model_forward.13} parent=1 // pred_fallthru
      _
    %823 = vsyncpa [#allocation3], 1

// kernel: model_forward.16
$region0: #{model_forward.16}
  #allocation0 [shape = 'u32[]', space=smem, size = 0x4, offset = 0x4, fixed_abs, tag = 'smem constant byte address 0x4 - core index']
  #allocation1 [shape = 'u32[144,128]{1,0:T(1,128)}', space=vmem, size = 0x12000, scoped, tag = 'internal scratch']
  %s0 = inlined_call_operand.vmem [shape: bf16[16,256], index: 0, kind: input, shape index: {}]
  %s1 = inlined_call_operand.vmem [shape: bf16[256,512], index: 1, kind: input, shape index: {}]
  %s2 = inlined_call_operand.vmem [shape: f32[1,512], index: 2, kind: input, shape index: {}]
  %s3 = inlined_call_operand.vmem [shape: bf16[16,512], index: 3, kind: output, shape index: {}]
  %s4 = sld [smem:[#allocation0]]
  $region22: #{model_forward.16} parent=0
    _
  %s6 = ssub.s32 1, %s4
  %s7 = scalar_select 0, %s6, %s4
  // Predicated region
  $region2: #{model_forward.16} parent=0 // pred_check
    _
  $region3: #{model_forward.16} parent=0 // pred_check_branch
    %9 = sbr.rel (0) target = $region5
  $region4: #{model_forward.16} parent=0 // pred_region
    _
  $region5: #{model_forward.16} parent=0 // pred_fallthru
    _
  // Predicated region
  $region6: #{model_forward.16} parent=0 // pred_check
    _
  $region7: #{model_forward.16} parent=0 // pred_check_branch
    %11 = sbr.rel (0) target = $region9
  $region8: #{model_forward.16} parent=0 // pred_region
    _
  $region9: #{model_forward.16} parent=0 // pred_fallthru
    _
  // Predicated region
  $region10: #{model_forward.16} parent=0 // pred_check
    _
  $region11: #{model_forward.16} parent=0 // pred_check_branch
    %13 = sbr.rel (0) target = $region13
  $region12: #{model_forward.16} parent=0 // pred_region
    _
  $region13: #{model_forward.16} parent=0 // pred_fallthru
    _
  %v14 = vld [vmem:[%s0] sm:$0xff]
  %v15 = vld [vmem:[%s0 + $0x8] sm:$0xff]
  %v16 = vld [vmem:[%s1] sm:$0xff]
  %v17 = vld [vmem:[%s1 + $0x8] sm:$0xff]
  %v18 = vld [vmem:[%s1 + $0x10] sm:$0xff]
  %v19 = vld [vmem:[%s1 + $0x18] sm:$0xff]
  %v20 = vld [vmem:[%s1 + $0x20] sm:$0xff]
  %v21 = vld [vmem:[%s1 + $0x28] sm:$0xff]
  %v22 = vld [vmem:[%s1 + $0x30] sm:$0xff]
  %v23 = vld [vmem:[%s1 + $0x38] sm:$0xff]
  %v24 = vld [vmem:[%s1 + $0x40] sm:$0xff]
  %v25 = vld [vmem:[%s1 + $0x48] sm:$0xff]
  %v26 = vld [vmem:[%s1 + $0x50] sm:$0xff]
  %v27 = vld [vmem:[%s1 + $0x58] sm:$0xff]
  %v28 = vld [vmem:[%s1 + $0x60] sm:$0xff]
  %v29 = vld [vmem:[%s1 + $0x68] sm:$0xff]
  %v30 = vld [vmem:[%s1 + $0x70] sm:$0xff]
  %v31 = vld [vmem:[%s1 + $0x78] sm:$0xff]
  %v32 = vld [vmem:[%s1 + $0x80] sm:$0xff]
  %v33 = vld [vmem:[%s1 + $0x88] sm:$0xff]
  %v34 = vld [vmem:[%s1 + $0x90] sm:$0xff]
  %v35 = vld [vmem:[%s1 + $0x98] sm:$0xff]
  %v36 = vld [vmem:[%s1 + $0xa0] sm:$0xff]
  %v37 = vld [vmem:[%s1 + $0xa8] sm:$0xff]
  %v38 = vld [vmem:[%s1 + $0xb0] sm:$0xff]
  %v39 = vld [vmem:[%s1 + $0xb8] sm:$0xff]
  %v40 = vld [vmem:[%s1 + $0xc0] sm:$0xff]
  %v41 = vld [vmem:[%s1 + $0xc8] sm:$0xff]
  %v42 = vld [vmem:[%s1 + $0xd0] sm:$0xff]
  %v43 = vld [vmem:[%s1 + $0xd8] sm:$0xff]
  %v44 = vld [vmem:[%s1 + $0xe0] sm:$0xff]
  %v45 = vld [vmem:[%s1 + $0xe8] sm:$0xff]
  %v46 = vld [vmem:[%s1 + $0xf0] sm:$0xff]
  %v47 = vld [vmem:[%s1 + $0xf8] sm:$0xff]
  %v48 = vld [vmem:[%s1 + $0x100] sm:$0xff]
  %v49 = vld [vmem:[%s1 + $0x108] sm:$0xff]
  %v50 = vld [vmem:[%s1 + $0x110] sm:$0xff]
  %v51 = vld [vmem:[%s1 + $0x118] sm:$0xff]
  %v52 = vld [vmem:[%s1 + $0x120] sm:$0xff]
  %v53 = vld [vmem:[%s1 + $0x128] sm:$0xff]
  %v54 = vld [vmem:[%s1 + $0x130] sm:$0xff]
  %v55 = vld [vmem:[%s1 + $0x138] sm:$0xff]
  %v56 = vld [vmem:[%s1 + $0x140] sm:$0xff]
  %v57 = vld [vmem:[%s1 + $0x148] sm:$0xff]
  %v58 = vld [vmem:[%s1 + $0x150] sm:$0xff]
  %v59 = vld [vmem:[%s1 + $0x158] sm:$0xff]
  %v60 = vld [vmem:[%s1 + $0x160] sm:$0xff]
  %v61 = vld [vmem:[%s1 + $0x168] sm:$0xff]
  %v62 = vld [vmem:[%s1 + $0x170] sm:$0xff]
  %v63 = vld [vmem:[%s1 + $0x178] sm:$0xff]
  %v64 = vld [vmem:[%s1 + $0x180] sm:$0xff]
  %v65 = vld [vmem:[%s1 + $0x188] sm:$0xff]
  %v66 = vld [vmem:[%s1 + $0x190] sm:$0xff]
  %v67 = vld [vmem:[%s1 + $0x198] sm:$0xff]
  %v68 = vld [vmem:[%s1 + $0x1a0] sm:$0xff]
  %v69 = vld [vmem:[%s1 + $0x1a8] sm:$0xff]
  %v70 = vld [vmem:[%s1 + $0x1b0] sm:$0xff]
  %v71 = vld [vmem:[%s1 + $0x1b8] sm:$0xff]
  %v72 = vld [vmem:[%s1 + $0x1c0] sm:$0xff]
  %v73 = vld [vmem:[%s1 + $0x1c8] sm:$0xff]
  %v74 = vld [vmem:[%s1 + $0x1d0] sm:$0xff]
  %v75 = vld [vmem:[%s1 + $0x1d8] sm:$0xff]
  %v76 = vld [vmem:[%s1 + $0x1e0] sm:$0xff]
  %v77 = vld [vmem:[%s1 + $0x1e8] sm:$0xff]
  %v78 = vld [vmem:[%s1 + $0x1f0] sm:$0xff]
  %v79 = vld [vmem:[%s1 + $0x1f8] sm:$0xff]
  %v80 = vld [vmem:[%s2] sm:$0xf]
  %v82 = vlaneseq
  %v83 = vshrl.u32 %v82, 7
  %v84 = vsub.s32 0, %v83
  %v85 = vrot.slane %v80, %v84
  %v86 = vlaneseq
  %v87 = vshrl.u32 %v86, 7
  %v88 = vsub.s32 1, %v87
  %v89 = vrot.slane %v80, %v88
  %v90 = vlaneseq
  %v91 = vshrl.u32 %v90, 7
  %v92 = vsub.s32 2, %v91
  %v93 = vrot.slane %v80, %v92
  %v94 = vlaneseq
  %v95 = vshrl.u32 %v94, 7
  %v96 = vsub.s32 3, %v95
  %v97 = vrot.slane %v80, %v96
  %v104 = vunpack.c.l.b16 %v14
  %v105 = vunpack.c.h.b16 %v14
  %v106 = vunpack.c.l.b16 %v15
  %v107 = vunpack.c.h.b16 %v15
  %v108 = vpack.c.b16 %v106, %v104
  %v109 = vpack.c.b16 %v107, %v105
  %v176 = vunpack.c.l.b16 %v16
  %v177 = vunpack.c.h.b16 %v16
  %v178 = vunpack.c.l.b16 %v17
  %v179 = vunpack.c.h.b16 %v17
  %v180 = vunpack.c.l.b16 %v18
  %v181 = vunpack.c.h.b16 %v18
  %v182 = vunpack.c.l.b16 %v19
  %v183 = vunpack.c.h.b16 %v19
  %v184 = vunpack.c.l.b16 %v20
  %v185 = vunpack.c.h.b16 %v20
  %v186 = vunpack.c.l.b16 %v21
  %v187 = vunpack.c.h.b16 %v21
  %v188 = vunpack.c.l.b16 %v22
  %v189 = vunpack.c.h.b16 %v22
  %v190 = vunpack.c.l.b16 %v23
  %v191 = vunpack.c.h.b16 %v23
  %v192 = vunpack.c.l.b16 %v24
  %v193 = vunpack.c.h.b16 %v24
  %v194 = vunpack.c.l.b16 %v25
  %v195 = vunpack.c.h.b16 %v25
  %v196 = vunpack.c.l.b16 %v26
  %v197 = vunpack.c.h.b16 %v26
  %v198 = vunpack.c.l.b16 %v27
  %v199 = vunpack.c.h.b16 %v27
  %v200 = vunpack.c.l.b16 %v28
  %v201 = vunpack.c.h.b16 %v28
  %v202 = vunpack.c.l.b16 %v29
  %v203 = vunpack.c.h.b16 %v29
  %v204 = vunpack.c.l.b16 %v30
  %v205 = vunpack.c.h.b16 %v30
  %v206 = vunpack.c.l.b16 %v31
  %v207 = vunpack.c.h.b16 %v31
  %v208 = vunpack.c.l.b16 %v32
  %v209 = vunpack.c.h.b16 %v32
  %v210 = vunpack.c.l.b16 %v33
  %v211 = vunpack.c.h.b16 %v33
  %v212 = vunpack.c.l.b16 %v34
  %v213 = vunpack.c.h.b16 %v34
  %v214 = vunpack.c.l.b16 %v35
  %v215 = vunpack.c.h.b16 %v35
  %v216 = vunpack.c.l.b16 %v36
  %v217 = vunpack.c.h.b16 %v36
  %v218 = vunpack.c.l.b16 %v37
  %v219 = vunpack.c.h.b16 %v37
  %v220 = vunpack.c.l.b16 %v38
  %v221 = vunpack.c.h.b16 %v38
  %v222 = vunpack.c.l.b16 %v39
  %v223 = vunpack.c.h.b16 %v39
  %v224 = vunpack.c.l.b16 %v40
  %v225 = vunpack.c.h.b16 %v40
  %v226 = vunpack.c.l.b16 %v41
  %v227 = vunpack.c.h.b16 %v41
  %v228 = vunpack.c.l.b16 %v42
  %v229 = vunpack.c.h.b16 %v42
  %v230 = vunpack.c.l.b16 %v43
  %v231 = vunpack.c.h.b16 %v43
  %v232 = vunpack.c.l.b16 %v44
  %v233 = vunpack.c.h.b16 %v44
  %v234 = vunpack.c.l.b16 %v45
  %v235 = vunpack.c.h.b16 %v45
  %v236 = vunpack.c.l.b16 %v46
  %v237 = vunpack.c.h.b16 %v46
  %v238 = vunpack.c.l.b16 %v47
  %v239 = vunpack.c.h.b16 %v47
  %v240 = vunpack.c.l.b16 %v48
  %v241 = vunpack.c.h.b16 %v48
  %v242 = vunpack.c.l.b16 %v49
  %v243 = vunpack.c.h.b16 %v49
  %v244 = vunpack.c.l.b16 %v50
  %v245 = vunpack.c.h.b16 %v50
  %v246 = vunpack.c.l.b16 %v51
  %v247 = vunpack.c.h.b16 %v51
  %v248 = vunpack.c.l.b16 %v52
  %v249 = vunpack.c.h.b16 %v52
  %v250 = vunpack.c.l.b16 %v53
  %v251 = vunpack.c.h.b16 %v53
  %v252 = vunpack.c.l.b16 %v54
  %v253 = vunpack.c.h.b16 %v54
  %v254 = vunpack.c.l.b16 %v55
  %v255 = vunpack.c.h.b16 %v55
  %v256 = vunpack.c.l.b16 %v56
  %v257 = vunpack.c.h.b16 %v56
  %v258 = vunpack.c.l.b16 %v57
  %v259 = vunpack.c.h.b16 %v57
  %v260 = vunpack.c.l.b16 %v58
  %v261 = vunpack.c.h.b16 %v58
  %v262 = vunpack.c.l.b16 %v59
  %v263 = vunpack.c.h.b16 %v59
  %v264 = vunpack.c.l.b16 %v60
  %v265 = vunpack.c.h.b16 %v60
  %v266 = vunpack.c.l.b16 %v61
  %v267 = vunpack.c.h.b16 %v61
  %v268 = vunpack.c.l.b16 %v62
  %v269 = vunpack.c.h.b16 %v62
  %v270 = vunpack.c.l.b16 %v63
  %v271 = vunpack.c.h.b16 %v63
  %v272 = vunpack.c.l.b16 %v64
  %v273 = vunpack.c.h.b16 %v64
  %v274 = vunpack.c.l.b16 %v65
  %v275 = vunpack.c.h.b16 %v65
  %v276 = vunpack.c.l.b16 %v66
  %v277 = vunpack.c.h.b16 %v66
  %v278 = vunpack.c.l.b16 %v67
  %v279 = vunpack.c.h.b16 %v67
  %v280 = vunpack.c.l.b16 %v68
  %v281 = vunpack.c.h.b16 %v68
  %v282 = vunpack.c.l.b16 %v69
  %v283 = vunpack.c.h.b16 %v69
  %v284 = vunpack.c.l.b16 %v70
  %v285 = vunpack.c.h.b16 %v70
  %v286 = vunpack.c.l.b16 %v71
  %v287 = vunpack.c.h.b16 %v71
  %v288 = vunpack.c.l.b16 %v72
  %v289 = vunpack.c.h.b16 %v72
  %v290 = vunpack.c.l.b16 %v73
  %v291 = vunpack.c.h.b16 %v73
  %v292 = vunpack.c.l.b16 %v74
  %v293 = vunpack.c.h.b16 %v74
  %v294 = vunpack.c.l.b16 %v75
  %v295 = vunpack.c.h.b16 %v75
  %v296 = vunpack.c.l.b16 %v76
  %v297 = vunpack.c.h.b16 %v76
  %v298 = vunpack.c.l.b16 %v77
  %v299 = vunpack.c.h.b16 %v77
  %v300 = vunpack.c.l.b16 %v78
  %v301 = vunpack.c.h.b16 %v78
  %v302 = vunpack.c.l.b16 %v79
  %v303 = vunpack.c.h.b16 %v79
  %v304 = vpack.c.b16 %v180, %v176
  %v305 = vpack.c.b16 %v181, %v177
  %v306 = vpack.c.b16 %v182, %v178
  %v307 = vpack.c.b16 %v183, %v179
  %v308 = vpack.c.b16 %v188, %v184
  %v309 = vpack.c.b16 %v189, %v185
  %v310 = vpack.c.b16 %v190, %v186
  %v311 = vpack.c.b16 %v191, %v187
  %v312 = vpack.c.b16 %v196, %v192
  %v313 = vpack.c.b16 %v197, %v193
  %v314 = vpack.c.b16 %v198, %v194
  %v315 = vpack.c.b16 %v199, %v195
  %v316 = vpack.c.b16 %v204, %v200
  %v317 = vpack.c.b16 %v205, %v201
  %v318 = vpack.c.b16 %v206, %v202
  %v319 = vpack.c.b16 %v207, %v203
  %v320 = vpack.c.b16 %v212, %v208
  %v321 = vpack.c.b16 %v213, %v209
  %v322 = vpack.c.b16 %v214, %v210
  %v323 = vpack.c.b16 %v215, %v211
  %v324 = vpack.c.b16 %v220, %v216
  %v325 = vpack.c.b16 %v221, %v217
  %v326 = vpack.c.b16 %v222, %v218
  %v327 = vpack.c.b16 %v223, %v219
  %v328 = vpack.c.b16 %v228, %v224
  %v329 = vpack.c.b16 %v229, %v225
  %v330 = vpack.c.b16 %v230, %v226
  %v331 = vpack.c.b16 %v231, %v227
  %v332 = vpack.c.b16 %v236, %v232
  %v333 = vpack.c.b16 %v237, %v233
  %v334 = vpack.c.b16 %v238, %v234
  %v335 = vpack.c.b16 %v239, %v235
  %v336 = vpack.c.b16 %v244, %v240
  %v337 = vpack.c.b16 %v245, %v241
  %v338 = vpack.c.b16 %v246, %v242
  %v339 = vpack.c.b16 %v247, %v243
  %v340 = vpack.c.b16 %v252, %v248
  %v341 = vpack.c.b16 %v253, %v249
  %v342 = vpack.c.b16 %v254, %v250
  %v343 = vpack.c.b16 %v255, %v251
  %v344 = vpack.c.b16 %v260, %v256
  %v345 = vpack.c.b16 %v261, %v257
  %v346 = vpack.c.b16 %v262, %v258
  %v347 = vpack.c.b16 %v263, %v259
  %v348 = vpack.c.b16 %v268, %v264
  %v349 = vpack.c.b16 %v269, %v265
  %v350 = vpack.c.b16 %v270, %v266
  %v351 = vpack.c.b16 %v271, %v267
  %v352 = vpack.c.b16 %v276, %v272
  %v353 = vpack.c.b16 %v277, %v273
  %v354 = vpack.c.b16 %v278, %v274
  %v355 = vpack.c.b16 %v279, %v275
  %v356 = vpack.c.b16 %v284, %v280
  %v357 = vpack.c.b16 %v285, %v281
  %v358 = vpack.c.b16 %v286, %v282
  %v359 = vpack.c.b16 %v287, %v283
  %v360 = vpack.c.b16 %v292, %v288
  %v361 = vpack.c.b16 %v293, %v289
  %v362 = vpack.c.b16 %v294, %v290
  %v363 = vpack.c.b16 %v295, %v291
  %v364 = vpack.c.b16 %v300, %v296
  %v365 = vpack.c.b16 %v301, %v297
  %v366 = vpack.c.b16 %v302, %v298
  %v367 = vpack.c.b16 %v303, %v299
  %432 = vmatprep.subr.bf16.mxu0 %v333
  %433 = vmatpush1.bf16.msra.mxu0 %v332
  %434 = vmatprep.subr.bf16.mxu0 %v329
  %435 = vmatpush1.bf16.msra.mxu0 %v328
  %436 = vmatprep.subr.bf16.mxu0 %v325
  %437 = vmatpush1.bf16.msra.mxu0 %v324
  %438 = vmatprep.subr.bf16.mxu0 %v321
  %439 = vmatpush1.bf16.msra.mxu0 %v320
  %440 = vmatprep.subr.bf16.mxu0 %v317
  %441 = vmatpush1.bf16.msra.mxu0 %v316
  %442 = vmatprep.subr.bf16.mxu0 %v313
  %443 = vmatpush1.bf16.msra.mxu0 %v312
  %444 = vmatprep.subr.bf16.mxu0 %v309
  %445 = vmatpush1.bf16.msra.mxu0 %v308
  %446 = vmatprep.subr.bf16.mxu0 %v305
  %447 = vmatpush1.bf16.msra.mxu0 %v304
  %448 = vmatprep.subr.bf16.mxu0 %v365
  %449 = vmatpush2.bf16.msra.mxu0 %v364
  %450 = vmatprep.subr.bf16.mxu0 %v361
  %451 = vmatpush2.bf16.msra.mxu0 %v360
  %452 = vmatprep.subr.bf16.mxu0 %v357
  %453 = vmatpush2.bf16.msra.mxu0 %v356
  %454 = vmatprep.subr.bf16.mxu0 %v353
  %455 = vmatpush2.bf16.msra.mxu0 %v352
  %456 = vmatprep.subr.bf16.mxu0 %v349
  %457 = vmatpush2.bf16.msra.mxu0 %v348
  %458 = vmatprep.subr.bf16.mxu0 %v345
  %459 = vmatpush2.bf16.msra.mxu0 %v344
  %460 = vmatprep.subr.bf16.mxu0 %v341
  %461 = vmatpush2.bf16.msra.mxu0 %v340
  %462 = vmatprep.subr.bf16.mxu0 %v337
  %463 = vmatpush2.bf16.msra.mxu0 %v336
  %464 = vmatprep.mubr.bf16.mxu0 %v109
  %465 = vmatmul.mubr.bf16.gmra.mxu0 %v108
  %v466 = vpop.f32.mrf.mxu0
  %v467 = vadd.f32 %v85, %v466
  %v468 = vpop.f32.mrf.mxu0
  %v469 = vadd.f32 %v89, %v468
  %v470 = vpop.f32.mrf.mxu0
  %v471 = vadd.f32 %v85, %v470
  %v472 = vpop.f32.mrf.mxu0
  %v473 = vadd.f32 %v89, %v472
  %474 = vdwg.mxu0
  %475 = vmatprep.subr.bf16.mxu0 %v335
  %476 = vmatpush1.bf16.msra.mxu0 %v334
  %477 = vmatprep.subr.bf16.mxu0 %v331
  %478 = vmatpush1.bf16.msra.mxu0 %v330
  %479 = vmatprep.subr.bf16.mxu0 %v327
  %480 = vmatpush1.bf16.msra.mxu0 %v326
  %481 = vmatprep.subr.bf16.mxu0 %v323
  %482 = vmatpush1.bf16.msra.mxu0 %v322
  %483 = vmatprep.subr.bf16.mxu0 %v319
  %484 = vmatpush1.bf16.msra.mxu0 %v318
  %485 = vmatprep.subr.bf16.mxu0 %v315
  %486 = vmatpush1.bf16.msra.mxu0 %v314
  %487 = vmatprep.subr.bf16.mxu0 %v311
  %488 = vmatpush1.bf16.msra.mxu0 %v310
  %489 = vmatprep.subr.bf16.mxu0 %v307
  %490 = vmatpush1.bf16.msra.mxu0 %v306
  %491 = vmatprep.subr.bf16.mxu0 %v367
  %492 = vmatpush2.bf16.msra.mxu0 %v366
  %493 = vmatprep.subr.bf16.mxu0 %v363
  %494 = vmatpush2.bf16.msra.mxu0 %v362
  %495 = vmatprep.subr.bf16.mxu0 %v359
  %496 = vmatpush2.bf16.msra.mxu0 %v358
  %497 = vmatprep.subr.bf16.mxu0 %v355
  %498 = vmatpush2.bf16.msra.mxu0 %v354
  %499 = vmatprep.subr.bf16.mxu0 %v351
  %500 = vmatpush2.bf16.msra.mxu0 %v350
  %501 = vmatprep.subr.bf16.mxu0 %v347
  %502 = vmatpush2.bf16.msra.mxu0 %v346
  %503 = vmatprep.subr.bf16.mxu0 %v343
  %504 = vmatpush2.bf16.msra.mxu0 %v342
  %505 = vmatprep.subr.bf16.mxu0 %v339
  %506 = vmatpush2.bf16.msra.mxu0 %v338
  %507 = vmatprep.mubr.bf16.mxu0 %v109
  %508 = vmatmul.mubr.bf16.gmra.mxu0 %v108
  %v509 = vpop.f32.mrf.mxu0
  %v510 = vadd.f32 %v93, %v509
  %v511 = vpop.f32.mrf.mxu0
  %v512 = vadd.f32 %v97, %v511
  %v513 = vpop.f32.mrf.mxu0
  %v514 = vadd.f32 %v93, %v513
  %v515 = vpop.f32.mrf.mxu0
  %v516 = vadd.f32 %v97, %v515
  %517 = vdwg.mxu0
  %v518 = vmul.f32 %v467, 0.5
  %v519 = vmul.f32 %v469, 0.5
  %v520 = vmul.f32 %v510, 0.5
  %v521 = vmul.f32 %v512, 0.5
  %v522 = vmul.f32 %v471, 0.5
  %v523 = vmul.f32 %v473, 0.5
  %v524 = vmul.f32 %v514, 0.5
  %v525 = vmul.f32 %v516, 0.5
  %v526 = vmul.f32 %v467, 0.70710677
  %v527 = vmul.f32 %v469, 0.70710677
  %v528 = vmul.f32 %v510, 0.70710677
  %v529 = vmul.f32 %v512, 0.70710677
  %v530 = vmul.f32 %v471, 0.70710677
  %v531 = vmul.f32 %v473, 0.70710677
  %v532 = vmul.f32 %v514, 0.70710677
  %v533 = vmul.f32 %v516, 0.70710677
  %v534 = vand.u32 2147483647, %v526
  %v535 = vand.u32 2147483647, %v527
  %v536 = vand.u32 2147483647, %v528
  %v537 = vand.u32 2147483647, %v529
  %v538 = vand.u32 2147483647, %v530
  %v539 = vand.u32 2147483647, %v531
  %v540 = vand.u32 2147483647, %v532
  %v541 = vand.u32 2147483647, %v533
  %v542 = vmul.f32 %v534, 0.3275911
  %v543 = vmul.f32 %v535, 0.3275911
  %v544 = vmul.f32 %v536, 0.3275911
  %v545 = vmul.f32 %v537, 0.3275911
  %v546 = vmul.f32 %v538, 0.3275911
  %v547 = vmul.f32 %v539, 0.3275911
  %v548 = vmul.f32 %v540, 0.3275911
  %v549 = vmul.f32 %v541, 0.3275911
  %v550 = vadd.f32 %v542, 1.0
  %v551 = vadd.f32 %v543, 1.0
  %v552 = vadd.f32 %v544, 1.0
  %v553 = vadd.f32 %v545, 1.0
  %v554 = vadd.f32 %v546, 1.0
  %v555 = vadd.f32 %v547, 1.0
  %v556 = vadd.f32 %v548, 1.0
  %v557 = vadd.f32 %v549, 1.0
  %v558 = vrcp.pop %v550
  %v559 = vmul.f32 1.0, %v558
  %v560 = vrcp.pop %v551
  %v561 = vmul.f32 1.0, %v560
  %v562 = vrcp.pop %v552
  %v563 = vmul.f32 1.0, %v562
  %v564 = vrcp.pop %v553
  %v565 = vmul.f32 1.0, %v564
  %v566 = vrcp.pop %v554
  %v567 = vmul.f32 1.0, %v566
  %v568 = vrcp.pop %v555
  %v569 = vmul.f32 1.0, %v568
  %v570 = vrcp.pop %v556
  %v571 = vmul.f32 1.0, %v570
  %v572 = vrcp.pop %v557
  %v573 = vmul.f32 1.0, %v572
  %v574 = vmul.f32 %v559, 1.0614054
  %v575 = vmul.f32 %v561, 1.0614054
  %v576 = vmul.f32 %v563, 1.0614054
  %v577 = vmul.f32 %v565, 1.0614054
  %v578 = vmul.f32 %v567, 1.0614054
  %v579 = vmul.f32 %v569, 1.0614054
  %v580 = vmul.f32 %v571, 1.0614054
  %v581 = vmul.f32 %v573, 1.0614054
  %v582 = vadd.f32 %v574, -1.4531521
  %v583 = vadd.f32 %v575, -1.4531521
  %v584 = vadd.f32 %v576, -1.4531521
  %v585 = vadd.f32 %v577, -1.4531521
  %v586 = vadd.f32 %v578, -1.4531521
  %v587 = vadd.f32 %v579, -1.4531521
  %v588 = vadd.f32 %v580, -1.4531521
  %v589 = vadd.f32 %v581, -1.4531521
  %v590 = vmul.f32 %v582, %v559
  %v591 = vmul.f32 %v583, %v561
  %v592 = vmul.f32 %v584, %v563
  %v593 = vmul.f32 %v585, %v565
  %v594 = vmul.f32 %v586, %v567
  %v595 = vmul.f32 %v587, %v569
  %v596 = vmul.f32 %v588, %v571
  %v597 = vmul.f32 %v589, %v573
  %v598 = vadd.f32 %v590, 1.4214138
  %v599 = vadd.f32 %v591, 1.4214138
  %v600 = vadd.f32 %v592, 1.4214138
  %v601 = vadd.f32 %v593, 1.4214138
  %v602 = vadd.f32 %v594, 1.4214138
  %v603 = vadd.f32 %v595, 1.4214138
  %v604 = vadd.f32 %v596, 1.4214138
  %v605 = vadd.f32 %v597, 1.4214138
  %v606 = vmul.f32 %v598, %v559
  %v607 = vmul.f32 %v599, %v561
  %v608 = vmul.f32 %v600, %v563
  %v609 = vmul.f32 %v601, %v565
  %v610 = vmul.f32 %v602, %v567
  %v611 = vmul.f32 %v603, %v569
  %v612 = vmul.f32 %v604, %v571
  %v613 = vmul.f32 %v605, %v573
  %v614 = vadd.f32 %v606, -0.28449672
  %v615 = vadd.f32 %v607, -0.28449672
  %v616 = vadd.f32 %v608, -0.28449672
  %v617 = vadd.f32 %v609, -0.28449672
  %v618 = vadd.f32 %v610, -0.28449672
  %v619 = vadd.f32 %v611, -0.28449672
  %v620 = vadd.f32 %v612, -0.28449672
  %v621 = vadd.f32 %v613, -0.28449672
  %v622 = vmul.f32 %v614, %v559
  %v623 = vmul.f32 %v615, %v561
  %v624 = vmul.f32 %v616, %v563
  %v625 = vmul.f32 %v617, %v565
  %v626 = vmul.f32 %v618, %v567
  %v627 = vmul.f32 %v619, %v569
  %v628 = vmul.f32 %v620, %v571
  %v629 = vmul.f32 %v621, %v573
  %v630 = vadd.f32 %v622, 0.2548296
  %v631 = vadd.f32 %v623, 0.2548296
  %v632 = vadd.f32 %v624, 0.2548296
  %v633 = vadd.f32 %v625, 0.2548296
  %v634 = vadd.f32 %v626, 0.2548296
  %v635 = vadd.f32 %v627, 0.2548296
  %v636 = vadd.f32 %v628, 0.2548296
  %v637 = vadd.f32 %v629, 0.2548296
  %v638 = vmul.f32 %v630, %v559
  %v639 = vmul.f32 %v631, %v561
  %v640 = vmul.f32 %v632, %v563
  %v641 = vmul.f32 %v633, %v565
  %v642 = vmul.f32 %v634, %v567
  %v643 = vmul.f32 %v635, %v569
  %v644 = vmul.f32 %v636, %v571
  %v645 = vmul.f32 %v637, %v573
  %v646 = vsub.f32 0.0, %v534
  %v647 = vsub.f32 0.0, %v535
  %v648 = vsub.f32 0.0, %v536
  %v649 = vsub.f32 0.0, %v537
  %v650 = vsub.f32 0.0, %v538
  %v651 = vsub.f32 0.0, %v539
  %v652 = vsub.f32 0.0, %v540
  %v653 = vsub.f32 0.0, %v541
  %v654 = vmul.f32 %v646, %v534
  %v655 = vmul.f32 %v647, %v535
  %v656 = vmul.f32 %v648, %v536
  %v657 = vmul.f32 %v649, %v537
  %v658 = vmul.f32 %v650, %v538
  %v659 = vmul.f32 %v651, %v539
  %v660 = vmul.f32 %v652, %v540
  %v661 = vmul.f32 %v653, %v541
  %v662 = vmul.f32 %v654, 1.442695
  %v663 = vpow.pop %v662
  %v664 = vmul.f32 %v655, 1.442695
  %v665 = vpow.pop %v664
  %v666 = vmul.f32 %v656, 1.442695
  %v667 = vpow.pop %v666
  %v668 = vmul.f32 %v657, 1.442695
  %v669 = vpow.pop %v668
  %v670 = vmul.f32 %v658, 1.442695
  %v671 = vpow.pop %v670
  %v672 = vmul.f32 %v659, 1.442695
  %v673 = vpow.pop %v672
  %v674 = vmul.f32 %v660, 1.442695
  %v675 = vpow.pop %v674
  %v676 = vmul.f32 %v661, 1.442695
  %v677 = vpow.pop %v676
  %v678 = vmul.f32 %v638, %v663
  %v679 = vmul.f32 %v639, %v665
  %v680 = vmul.f32 %v640, %v667
  %v681 = vmul.f32 %v641, %v669
  %v682 = vmul.f32 %v642, %v671
  %v683 = vmul.f32 %v643, %v673
  %v684 = vmul.f32 %v644, %v675
  %v685 = vmul.f32 %v645, %v677
  %v686 = vsub.f32 1.0, %v678
  %v687 = vsub.f32 1.0, %v679
  %v688 = vsub.f32 1.0, %v680
  %v689 = vsub.f32 1.0, %v681
  %v690 = vsub.f32 1.0, %v682
  %v691 = vsub.f32 1.0, %v683
  %v692 = vsub.f32 1.0, %v684
  %v693 = vsub.f32 1.0, %v685
  %vm694 = vcmp.ge.f32.partialorder %v526, 0.0
  %vm695 = vcmp.ge.f32.partialorder %v527, 0.0
  %vm696 = vcmp.ge.f32.partialorder %v528, 0.0
  %vm697 = vcmp.ge.f32.partialorder %v529, 0.0
  %vm698 = vcmp.ge.f32.partialorder %v530, 0.0
  %vm699 = vcmp.ge.f32.partialorder %v531, 0.0
  %vm700 = vcmp.ge.f32.partialorder %v532, 0.0
  %vm701 = vcmp.ge.f32.partialorder %v533, 0.0
  %v702 = vsub.f32 0.0, %v686
  %v703 = vsub.f32 0.0, %v687
  %v704 = vsub.f32 0.0, %v688
  %v705 = vsub.f32 0.0, %v689
  %v706 = vsub.f32 0.0, %v690
  %v707 = vsub.f32 0.0, %v691
  %v708 = vsub.f32 0.0, %v692
  %v709 = vsub.f32 0.0, %v693
  %v710 = vsel %vm694, %v686, %v702
  %v711 = vsel %vm695, %v687, %v703
  %v712 = vsel %vm696, %v688, %v704
  %v713 = vsel %vm697, %v689, %v705
  %v714 = vsel %vm698, %v690, %v706
  %v715 = vsel %vm699, %v691, %v707
  %v716 = vsel %vm700, %v692, %v708
  %v717 = vsel %vm701, %v693, %v709
  %v718 = vadd.f32 %v710, 1.0
  %v719 = vadd.f32 %v711, 1.0
  %v720 = vadd.f32 %v712, 1.0
  %v721 = vadd.f32 %v713, 1.0
  %v722 = vadd.f32 %v714, 1.0
  %v723 = vadd.f32 %v715, 1.0
  %v724 = vadd.f32 %v716, 1.0
  %v725 = vadd.f32 %v717, 1.0
  %v726 = vmul.f32 %v518, %v718
  %v727 = vmul.f32 %v519, %v719
  %v728 = vmul.f32 %v520, %v720
  %v729 = vmul.f32 %v521, %v721
  %v730 = vmul.f32 %v522, %v722
  %v731 = vmul.f32 %v523, %v723
  %v732 = vmul.f32 %v524, %v724
  %v733 = vmul.f32 %v525, %v725
  %v734 = vpack.c.bf16 %v730, %v726
  %v735 = vpack.c.bf16 %v731, %v727
  %v736 = vpack.c.bf16 %v732, %v728
  %v737 = vpack.c.bf16 %v733, %v729
  %v742 = vunpack.c.l.b16 %v734
  %v743 = vunpack.c.l.b16 %v735
  %v744 = vunpack.c.l.b16 %v736
  %v745 = vunpack.c.l.b16 %v737
  %v746 = vunpack.c.h.b16 %v734
  %v747 = vunpack.c.h.b16 %v735
  %v748 = vunpack.c.h.b16 %v736
  %v749 = vunpack.c.h.b16 %v737
  %v750 = vpack.c.b16 %v743, %v742
  %v751 = vpack.c.b16 %v745, %v744
  %v752 = vpack.c.b16 %v747, %v746
  %v753 = vpack.c.b16 %v749, %v748
  %758 = vst [vmem:[%s3] sm:$0xff] %v750
  %759 = vst [vmem:[%s3 + $0x8] sm:$0xff] %v751
  %760 = vst [vmem:[%s3 + $0x10] sm:$0xff] %v752
  %761 = vst [vmem:[%s3 + $0x18] sm:$0xff] %v753
  // Predicated region
  $region14: #{model_forward.16} parent=0 // pred_check
    _
  $region15: #{model_forward.16} parent=0 // pred_check_branch
    %763 = sbr.rel (0) target = $region17
  $region16: #{model_forward.16} parent=0 // pred_region
    _
  $region17: #{model_forward.16} parent=0 // pred_fallthru
    _
  // Predicated region
  $region18: #{model_forward.16} parent=0 // pred_check
    _
  $region19: #{model_forward.16} parent=0 // pred_check_branch
    %765 = sbr.rel (0) target = $region21
  $region20: #{model_forward.16} parent=0 // pred_region
    _
  $region21: #{model_forward.16} parent=0 // pred_fallthru
    _

// kernel: model_forward.17
$region0: #{model_forward.17}
  #allocation0 [shape = 'u32[]', space=smem, size = 0x4, offset = 0x4, fixed_abs, tag = 'smem constant byte address 0x4 - core index']
  #allocation1 [shape = 'u32[144,128]{1,0:T(1,128)}', space=vmem, size = 0x12000, scoped, tag = 'internal scratch']
  %s0 = inlined_call_operand.vmem [shape: bf16[16,512], index: 0, kind: input, shape index: {}]
  %s1 = inlined_call_operand.vmem [shape: bf16[512,256], index: 1, kind: input, shape index: {}]
  %s2 = inlined_call_operand.vmem [shape: f32[1,256], index: 2, kind: input, shape index: {}]
  %s3 = inlined_call_operand.vmem [shape: bf16[16,256], index: 3, kind: input, shape index: {}]
  %s4 = inlined_call_operand.vmem [shape: f32[1,256], index: 4, kind: input, shape index: {}]
  %s5 = inlined_call_operand.vmem [shape: f32[1,256], index: 5, kind: input, shape index: {}]
  %s6 = inlined_call_operand.vmem [shape: bf16[16,256], index: 6, kind: output, shape index: {}]
  %s7 = sld [smem:[#allocation0]]
  $region34: #{model_forward.17} parent=0
    _
  %s9 = ssub.s32 1, %s7
  %s10 = scalar_select 0, %s9, %s7
  // Predicated region
  $region2: #{model_forward.17} parent=0 // pred_check
    _
  $region3: #{model_forward.17} parent=0 // pred_check_branch
    %12 = sbr.rel (0) target = $region5
  $region4: #{model_forward.17} parent=0 // pred_region
    _
  $region5: #{model_forward.17} parent=0 // pred_fallthru
    _
  // Predicated region
  $region6: #{model_forward.17} parent=0 // pred_check
    _
  $region7: #{model_forward.17} parent=0 // pred_check_branch
    %14 = sbr.rel (0) target = $region9
  $region8: #{model_forward.17} parent=0 // pred_region
    _
  $region9: #{model_forward.17} parent=0 // pred_fallthru
    _
  // Predicated region
  $region10: #{model_forward.17} parent=0 // pred_check
    _
  $region11: #{model_forward.17} parent=0 // pred_check_branch
    %16 = sbr.rel (0) target = $region13
  $region12: #{model_forward.17} parent=0 // pred_region
    _
  $region13: #{model_forward.17} parent=0 // pred_fallthru
    _
  // Predicated region
  $region14: #{model_forward.17} parent=0 // pred_check
    _
  $region15: #{model_forward.17} parent=0 // pred_check_branch
    %18 = sbr.rel (0) target = $region17
  $region16: #{model_forward.17} parent=0 // pred_region
    _
  $region17: #{model_forward.17} parent=0 // pred_fallthru
    _
  // Predicated region
  $region18: #{model_forward.17} parent=0 // pred_check
    _
  $region19: #{model_forward.17} parent=0 // pred_check_branch
    %20 = sbr.rel (0) target = $region21
  $region20: #{model_forward.17} parent=0 // pred_region
    _
  $region21: #{model_forward.17} parent=0 // pred_fallthru
    _
  // Predicated region
  $region22: #{model_forward.17} parent=0 // pred_check
    _
  $region23: #{model_forward.17} parent=0 // pred_check_branch
    %22 = sbr.rel (0) target = $region25
  $region24: #{model_forward.17} parent=0 // pred_region
    _
  $region25: #{model_forward.17} parent=0 // pred_fallthru
    _
  %v23 = vld [vmem:[%s0] sm:$0xff]
  %v24 = vld [vmem:[%s0 + $0x8] sm:$0xff]
  %v25 = vld [vmem:[%s0 + $0x10] sm:$0xff]
  %v26 = vld [vmem:[%s0 + $0x18] sm:$0xff]
  %v27 = vld [vmem:[%s1] sm:$0xff]
  %v28 = vld [vmem:[%s1 + $0x8] sm:$0xff]
  %v29 = vld [vmem:[%s1 + $0x10] sm:$0xff]
  %v30 = vld [vmem:[%s1 + $0x18] sm:$0xff]
  %v31 = vld [vmem:[%s1 + $0x20] sm:$0xff]
  %v32 = vld [vmem:[%s1 + $0x28] sm:$0xff]
  %v33 = vld [vmem:[%s1 + $0x30] sm:$0xff]
  %v34 = vld [vmem:[%s1 + $0x38] sm:$0xff]
  %v35 = vld [vmem:[%s1 + $0x40] sm:$0xff]
  %v36 = vld [vmem:[%s1 + $0x48] sm:$0xff]
  %v37 = vld [vmem:[%s1 + $0x50] sm:$0xff]
  %v38 = vld [vmem:[%s1 + $0x58] sm:$0xff]
  %v39 = vld [vmem:[%s1 + $0x60] sm:$0xff]
  %v40 = vld [vmem:[%s1 + $0x68] sm:$0xff]
  %v41 = vld [vmem:[%s1 + $0x70] sm:$0xff]
  %v42 = vld [vmem:[%s1 + $0x78] sm:$0xff]
  %v43 = vld [vmem:[%s1 + $0x80] sm:$0xff]
  %v44 = vld [vmem:[%s1 + $0x88] sm:$0xff]
  %v45 = vld [vmem:[%s1 + $0x90] sm:$0xff]
  %v46 = vld [vmem:[%s1 + $0x98] sm:$0xff]
  %v47 = vld [vmem:[%s1 + $0xa0] sm:$0xff]
  %v48 = vld [vmem:[%s1 + $0xa8] sm:$0xff]
  %v49 = vld [vmem:[%s1 + $0xb0] sm:$0xff]
  %v50 = vld [vmem:[%s1 + $0xb8] sm:$0xff]
  %v51 = vld [vmem:[%s1 + $0xc0] sm:$0xff]
  %v52 = vld [vmem:[%s1 + $0xc8] sm:$0xff]
  %v53 = vld [vmem:[%s1 + $0xd0] sm:$0xff]
  %v54 = vld [vmem:[%s1 + $0xd8] sm:$0xff]
  %v55 = vld [vmem:[%s1 + $0xe0] sm:$0xff]
  %v56 = vld [vmem:[%s1 + $0xe8] sm:$0xff]
  %v57 = vld [vmem:[%s1 + $0xf0] sm:$0xff]
  %v58 = vld [vmem:[%s1 + $0xf8] sm:$0xff]
  %v59 = vld [vmem:[%s1 + $0x100] sm:$0xff]
  %v60 = vld [vmem:[%s1 + $0x108] sm:$0xff]
  %v61 = vld [vmem:[%s1 + $0x110] sm:$0xff]
  %v62 = vld [vmem:[%s1 + $0x118] sm:$0xff]
  %v63 = vld [vmem:[%s1 + $0x120] sm:$0xff]
  %v64 = vld [vmem:[%s1 + $0x128] sm:$0xff]
  %v65 = vld [vmem:[%s1 + $0x130] sm:$0xff]
  %v66 = vld [vmem:[%s1 + $0x138] sm:$0xff]
  %v67 = vld [vmem:[%s1 + $0x140] sm:$0xff]
  %v68 = vld [vmem:[%s1 + $0x148] sm:$0xff]
  %v69 = vld [vmem:[%s1 + $0x150] sm:$0xff]
  %v70 = vld [vmem:[%s1 + $0x158] sm:$0xff]
  %v71 = vld [vmem:[%s1 + $0x160] sm:$0xff]
  %v72 = vld [vmem:[%s1 + $0x168] sm:$0xff]
  %v73 = vld [vmem:[%s1 + $0x170] sm:$0xff]
  %v74 = vld [vmem:[%s1 + $0x178] sm:$0xff]
  %v75 = vld [vmem:[%s1 + $0x180] sm:$0xff]
  %v76 = vld [vmem:[%s1 + $0x188] sm:$0xff]
  %v77 = vld [vmem:[%s1 + $0x190] sm:$0xff]
  %v78 = vld [vmem:[%s1 + $0x198] sm:$0xff]
  %v79 = vld [vmem:[%s1 + $0x1a0] sm:$0xff]
  %v80 = vld [vmem:[%s1 + $0x1a8] sm:$0xff]
  %v81 = vld [vmem:[%s1 + $0x1b0] sm:$0xff]
  %v82 = vld [vmem:[%s1 + $0x1b8] sm:$0xff]
  %v83 = vld [vmem:[%s1 + $0x1c0] sm:$0xff]
  %v84 = vld [vmem:[%s1 + $0x1c8] sm:$0xff]
  %v85 = vld [vmem:[%s1 + $0x1d0] sm:$0xff]
  %v86 = vld [vmem:[%s1 + $0x1d8] sm:$0xff]
  %v87 = vld [vmem:[%s1 + $0x1e0] sm:$0xff]
  %v88 = vld [vmem:[%s1 + $0x1e8] sm:$0xff]
  %v89 = vld [vmem:[%s1 + $0x1f0] sm:$0xff]
  %v90 = vld [vmem:[%s1 + $0x1f8] sm:$0xff]
  %v91 = vld [vmem:[%s2] sm:$0x3]
  %v93 = vlaneseq
  %v94 = vshrl.u32 %v93, 7
  %v95 = vsub.s32 0, %v94
  %v96 = vrot.slane %v91, %v95
  %v97 = vlaneseq
  %v98 = vshrl.u32 %v97, 7
  %v99 = vsub.s32 1, %v98
  %v100 = vrot.slane %v91, %v99
  %v107 = vunpack.c.l.b16 %v23
  %v108 = vunpack.c.h.b16 %v23
  %v109 = vunpack.c.l.b16 %v24
  %v110 = vunpack.c.h.b16 %v24
  %v111 = vunpack.c.l.b16 %v25
  %v112 = vunpack.c.h.b16 %v25
  %v113 = vunpack.c.l.b16 %v26
  %v114 = vunpack.c.h.b16 %v26
  %v115 = vpack.c.b16 %v111, %v107
  %v116 = vpack.c.b16 %v112, %v108
  %v117 = vpack.c.b16 %v113, %v109
  %v118 = vpack.c.b16 %v114, %v110
  %v187 = vunpack.c.l.b16 %v27
  %v188 = vunpack.c.h.b16 %v27
  %v189 = vunpack.c.l.b16 %v28
  %v190 = vunpack.c.h.b16 %v28
  %v191 = vunpack.c.l.b16 %v29
  %v192 = vunpack.c.h.b16 %v29
  %v193 = vunpack.c.l.b16 %v30
  %v194 = vunpack.c.h.b16 %v30
  %v195 = vunpack.c.l.b16 %v31
  %v196 = vunpack.c.h.b16 %v31
  %v197 = vunpack.c.l.b16 %v32
  %v198 = vunpack.c.h.b16 %v32
  %v199 = vunpack.c.l.b16 %v33
  %v200 = vunpack.c.h.b16 %v33
  %v201 = vunpack.c.l.b16 %v34
  %v202 = vunpack.c.h.b16 %v34
  %v203 = vunpack.c.l.b16 %v35
  %v204 = vunpack.c.h.b16 %v35
  %v205 = vunpack.c.l.b16 %v36
  %v206 = vunpack.c.h.b16 %v36
  %v207 = vunpack.c.l.b16 %v37
  %v208 = vunpack.c.h.b16 %v37
  %v209 = vunpack.c.l.b16 %v38
  %v210 = vunpack.c.h.b16 %v38
  %v211 = vunpack.c.l.b16 %v39
  %v212 = vunpack.c.h.b16 %v39
  %v213 = vunpack.c.l.b16 %v40
  %v214 = vunpack.c.h.b16 %v40
  %v215 = vunpack.c.l.b16 %v41
  %v216 = vunpack.c.h.b16 %v41
  %v217 = vunpack.c.l.b16 %v42
  %v218 = vunpack.c.h.b16 %v42
  %v219 = vunpack.c.l.b16 %v43
  %v220 = vunpack.c.h.b16 %v43
  %v221 = vunpack.c.l.b16 %v44
  %v222 = vunpack.c.h.b16 %v44
  %v223 = vunpack.c.l.b16 %v45
  %v224 = vunpack.c.h.b16 %v45
  %v225 = vunpack.c.l.b16 %v46
  %v226 = vunpack.c.h.b16 %v46
  %v227 = vunpack.c.l.b16 %v47
  %v228 = vunpack.c.h.b16 %v47
  %v229 = vunpack.c.l.b16 %v48
  %v230 = vunpack.c.h.b16 %v48
  %v231 = vunpack.c.l.b16 %v49
  %v232 = vunpack.c.h.b16 %v49
  %v233 = vunpack.c.l.b16 %v50
  %v234 = vunpack.c.h.b16 %v50
  %v235 = vunpack.c.l.b16 %v51
  %v236 = vunpack.c.h.b16 %v51
  %v237 = vunpack.c.l.b16 %v52
  %v238 = vunpack.c.h.b16 %v52
  %v239 = vunpack.c.l.b16 %v53
  %v240 = vunpack.c.h.b16 %v53
  %v241 = vunpack.c.l.b16 %v54
  %v242 = vunpack.c.h.b16 %v54
  %v243 = vunpack.c.l.b16 %v55
  %v244 = vunpack.c.h.b16 %v55
  %v245 = vunpack.c.l.b16 %v56
  %v246 = vunpack.c.h.b16 %v56
  %v247 = vunpack.c.l.b16 %v57
  %v248 = vunpack.c.h.b16 %v57
  %v249 = vunpack.c.l.b16 %v58
  %v250 = vunpack.c.h.b16 %v58
  %v251 = vunpack.c.l.b16 %v59
  %v252 = vunpack.c.h.b16 %v59
  %v253 = vunpack.c.l.b16 %v60
  %v254 = vunpack.c.h.b16 %v60
  %v255 = vunpack.c.l.b16 %v61
  %v256 = vunpack.c.h.b16 %v61
  %v257 = vunpack.c.l.b16 %v62
  %v258 = vunpack.c.h.b16 %v62
  %v259 = vunpack.c.l.b16 %v63
  %v260 = vunpack.c.h.b16 %v63
  %v261 = vunpack.c.l.b16 %v64
  %v262 = vunpack.c.h.b16 %v64
  %v263 = vunpack.c.l.b16 %v65
  %v264 = vunpack.c.h.b16 %v65
  %v265 = vunpack.c.l.b16 %v66
  %v266 = vunpack.c.h.b16 %v66
  %v267 = vunpack.c.l.b16 %v67
  %v268 = vunpack.c.h.b16 %v67
  %v269 = vunpack.c.l.b16 %v68
  %v270 = vunpack.c.h.b16 %v68
  %v271 = vunpack.c.l.b16 %v69
  %v272 = vunpack.c.h.b16 %v69
  %v273 = vunpack.c.l.b16 %v70
  %v274 = vunpack.c.h.b16 %v70
  %v275 = vunpack.c.l.b16 %v71
  %v276 = vunpack.c.h.b16 %v71
  %v277 = vunpack.c.l.b16 %v72
  %v278 = vunpack.c.h.b16 %v72
  %v279 = vunpack.c.l.b16 %v73
  %v280 = vunpack.c.h.b16 %v73
  %v281 = vunpack.c.l.b16 %v74
  %v282 = vunpack.c.h.b16 %v74
  %v283 = vunpack.c.l.b16 %v75
  %v284 = vunpack.c.h.b16 %v75
  %v285 = vunpack.c.l.b16 %v76
  %v286 = vunpack.c.h.b16 %v76
  %v287 = vunpack.c.l.b16 %v77
  %v288 = vunpack.c.h.b16 %v77
  %v289 = vunpack.c.l.b16 %v78
  %v290 = vunpack.c.h.b16 %v78
  %v291 = vunpack.c.l.b16 %v79
  %v292 = vunpack.c.h.b16 %v79
  %v293 = vunpack.c.l.b16 %v80
  %v294 = vunpack.c.h.b16 %v80
  %v295 = vunpack.c.l.b16 %v81
  %v296 = vunpack.c.h.b16 %v81
  %v297 = vunpack.c.l.b16 %v82
  %v298 = vunpack.c.h.b16 %v82
  %v299 = vunpack.c.l.b16 %v83
  %v300 = vunpack.c.h.b16 %v83
  %v301 = vunpack.c.l.b16 %v84
  %v302 = vunpack.c.h.b16 %v84
  %v303 = vunpack.c.l.b16 %v85
  %v304 = vunpack.c.h.b16 %v85
  %v305 = vunpack.c.l.b16 %v86
  %v306 = vunpack.c.h.b16 %v86
  %v307 = vunpack.c.l.b16 %v87
  %v308 = vunpack.c.h.b16 %v87
  %v309 = vunpack.c.l.b16 %v88
  %v310 = vunpack.c.h.b16 %v88
  %v311 = vunpack.c.l.b16 %v89
  %v312 = vunpack.c.h.b16 %v89
  %v313 = vunpack.c.l.b16 %v90
  %v314 = vunpack.c.h.b16 %v90
  %v315 = vpack.c.b16 %v189, %v187
  %v316 = vpack.c.b16 %v190, %v188
  %v317 = vpack.c.b16 %v193, %v191
  %v318 = vpack.c.b16 %v194, %v192
  %v319 = vpack.c.b16 %v197, %v195
  %v320 = vpack.c.b16 %v198, %v196
  %v321 = vpack.c.b16 %v201, %v199
  %v322 = vpack.c.b16 %v202, %v200
  %v323 = vpack.c.b16 %v205, %v203
  %v324 = vpack.c.b16 %v206, %v204
  %v325 = vpack.c.b16 %v209, %v207
  %v326 = vpack.c.b16 %v210, %v208
  %v327 = vpack.c.b16 %v213, %v211
  %v328 = vpack.c.b16 %v214, %v212
  %v329 = vpack.c.b16 %v217, %v215
  %v330 = vpack.c.b16 %v218, %v216
  %v331 = vpack.c.b16 %v221, %v219
  %v332 = vpack.c.b16 %v222, %v220
  %v333 = vpack.c.b16 %v225, %v223
  %v334 = vpack.c.b16 %v226, %v224
  %v335 = vpack.c.b16 %v229, %v227
  %v336 = vpack.c.b16 %v230, %v228
  %v337 = vpack.c.b16 %v233, %v231
  %v338 = vpack.c.b16 %v234, %v232
  %v339 = vpack.c.b16 %v237, %v235
  %v340 = vpack.c.b16 %v238, %v236
  %v341 = vpack.c.b16 %v241, %v239
  %v342 = vpack.c.b16 %v242, %v240
  %v343 = vpack.c.b16 %v245, %v243
  %v344 = vpack.c.b16 %v246, %v244
  %v345 = vpack.c.b16 %v249, %v247
  %v346 = vpack.c.b16 %v250, %v248
  %v347 = vpack.c.b16 %v253, %v251
  %v348 = vpack.c.b16 %v254, %v252
  %v349 = vpack.c.b16 %v257, %v255
  %v350 = vpack.c.b16 %v258, %v256
  %v351 = vpack.c.b16 %v261, %v259
  %v352 = vpack.c.b16 %v262, %v260
  %v353 = vpack.c.b16 %v265, %v263
  %v354 = vpack.c.b16 %v266, %v264
  %v355 = vpack.c.b16 %v269, %v267
  %v356 = vpack.c.b16 %v270, %v268
  %v357 = vpack.c.b16 %v273, %v271
  %v358 = vpack.c.b16 %v274, %v272
  %v359 = vpack.c.b16 %v277, %v275
  %v360 = vpack.c.b16 %v278, %v276
  %v361 = vpack.c.b16 %v281, %v279
  %v362 = vpack.c.b16 %v282, %v280
  %v363 = vpack.c.b16 %v285, %v283
  %v364 = vpack.c.b16 %v286, %v284
  %v365 = vpack.c.b16 %v289, %v287
  %v366 = vpack.c.b16 %v290, %v288
  %v367 = vpack.c.b16 %v293, %v291
  %v368 = vpack.c.b16 %v294, %v292
  %v369 = vpack.c.b16 %v297, %v295
  %v370 = vpack.c.b16 %v298, %v296
  %v371 = vpack.c.b16 %v301, %v299
  %v372 = vpack.c.b16 %v302, %v300
  %v373 = vpack.c.b16 %v305, %v303
  %v374 = vpack.c.b16 %v306, %v304
  %v375 = vpack.c.b16 %v309, %v307
  %v376 = vpack.c.b16 %v310, %v308
  %v377 = vpack.c.b16 %v313, %v311
  %v378 = vpack.c.b16 %v314, %v312
  %443 = vmatprep.subr.bf16.mxu0 %v330
  %444 = vmatpush1.bf16.msra.mxu0 %v329
  %445 = vmatprep.subr.bf16.mxu0 %v328
  %446 = vmatpush1.bf16.msra.mxu0 %v327
  %447 = vmatprep.subr.bf16.mxu0 %v326
  %448 = vmatpush1.bf16.msra.mxu0 %v325
  %449 = vmatprep.subr.bf16.mxu0 %v324
  %450 = vmatpush1.bf16.msra.mxu0 %v323
  %451 = vmatprep.subr.bf16.mxu0 %v322
  %452 = vmatpush1.bf16.msra.mxu0 %v321
  %453 = vmatprep.subr.bf16.mxu0 %v320
  %454 = vmatpush1.bf16.msra.mxu0 %v319
  %455 = vmatprep.subr.bf16.mxu0 %v318
  %456 = vmatpush1.bf16.msra.mxu0 %v317
  %457 = vmatprep.subr.bf16.mxu0 %v316
  %458 = vmatpush1.bf16.msra.mxu0 %v315
  %459 = vmatprep.subr.bf16.mxu0 %v346
  %460 = vmatpush2.bf16.msra.mxu0 %v345
  %461 = vmatprep.subr.bf16.mxu0 %v344
  %462 = vmatpush2.bf16.msra.mxu0 %v343
  %463 = vmatprep.subr.bf16.mxu0 %v342
  %464 = vmatpush2.bf16.msra.mxu0 %v341
  %465 = vmatprep.subr.bf16.mxu0 %v340
  %466 = vmatpush2.bf16.msra.mxu0 %v339
  %467 = vmatprep.subr.bf16.mxu0 %v338
  %468 = vmatpush2.bf16.msra.mxu0 %v337
  %469 = vmatprep.subr.bf16.mxu0 %v336
  %470 = vmatpush2.bf16.msra.mxu0 %v335
  %471 = vmatprep.subr.bf16.mxu0 %v334
  %472 = vmatpush2.bf16.msra.mxu0 %v333
  %473 = vmatprep.subr.bf16.mxu0 %v332
  %474 = vmatpush2.bf16.msra.mxu0 %v331
  %475 = vmatprep.mubr.bf16.mxu0 %v116
  %476 = vmatmul.mubr.bf16.gmra.mxu0 %v115
  %v477 = vpop.f32.mrf.mxu0
  %v478 = vadd.f32 %v96, %v477
  %v479 = vpop.f32.mrf.mxu0
  %v480 = vadd.f32 %v100, %v479
  %v481 = vpop.f32.mrf.mxu0
  %v482 = vadd.f32 %v96, %v481
  %v483 = vpop.f32.mrf.mxu0
  %v484 = vadd.f32 %v100, %v483
  %485 = vdwg.mxu0
  %486 = vmatprep.subr.bf16.mxu0 %v362
  %487 = vmatpush1.bf16.msra.mxu0 %v361
  %488 = vmatprep.subr.bf16.mxu0 %v360
  %489 = vmatpush1.bf16.msra.mxu0 %v359
  %490 = vmatprep.subr.bf16.mxu0 %v358
  %491 = vmatpush1.bf16.msra.mxu0 %v357
  %492 = vmatprep.subr.bf16.mxu0 %v356
  %493 = vmatpush1.bf16.msra.mxu0 %v355
  %494 = vmatprep.subr.bf16.mxu0 %v354
  %495 = vmatpush1.bf16.msra.mxu0 %v353
  %496 = vmatprep.subr.bf16.mxu0 %v352
  %497 = vmatpush1.bf16.msra.mxu0 %v351
  %498 = vmatprep.subr.bf16.mxu0 %v350
  %499 = vmatpush1.bf16.msra.mxu0 %v349
  %500 = vmatprep.subr.bf16.mxu0 %v348
  %501 = vmatpush1.bf16.msra.mxu0 %v347
  %502 = vmatprep.subr.bf16.mxu0 %v378
  %503 = vmatpush2.bf16.msra.mxu0 %v377
  %504 = vmatprep.subr.bf16.mxu0 %v376
  %505 = vmatpush2.bf16.msra.mxu0 %v375
  %506 = vmatprep.subr.bf16.mxu0 %v374
  %507 = vmatpush2.bf16.msra.mxu0 %v373
  %508 = vmatprep.subr.bf16.mxu0 %v372
  %509 = vmatpush2.bf16.msra.mxu0 %v371
  %510 = vmatprep.subr.bf16.mxu0 %v370
  %511 = vmatpush2.bf16.msra.mxu0 %v369
  %512 = vmatprep.subr.bf16.mxu0 %v368
  %513 = vmatpush2.bf16.msra.mxu0 %v367
  %514 = vmatprep.subr.bf16.mxu0 %v366
  %515 = vmatpush2.bf16.msra.mxu0 %v365
  %516 = vmatprep.subr.bf16.mxu0 %v364
  %517 = vmatpush2.bf16.msra.mxu0 %v363
  %518 = vmatprep.mubr.bf16.mxu0 %v118
  %519 = vmatmul.mubr.bf16.gmra.mxu0 %v117
  %v520 = vpop.f32.mrf.mxu0
  %v521 = vadd.f32 %v478, %v520
  %v522 = vpop.f32.mrf.mxu0
  %v523 = vadd.f32 %v480, %v522
  %v524 = vpop.f32.mrf.mxu0
  %v525 = vadd.f32 %v482, %v524
  %v526 = vpop.f32.mrf.mxu0
  %v527 = vadd.f32 %v484, %v526
  %528 = vdwg.mxu0
  %v529 = vld [vmem:[%s3] sm:$0xff]
  %v530 = vld [vmem:[%s3 + $0x8] sm:$0xff]
  %v531 = vunpack.c.l.bf16 %v529
  %v532 = vunpack.c.h.bf16 %v529
  %v533 = vunpack.c.l.bf16 %v530
  %v534 = vunpack.c.h.bf16 %v530
  %v535 = vadd.f32 %v521, %v531
  %v536 = vadd.f32 %v523, %v532
  %v537 = vadd.f32 %v525, %v533
  %v538 = vadd.f32 %v527, %v534
  %v539 = vadd.f32 %v535, %v536
  %540 = vadd.xlane.f32.xlu0 %v539
  %v541 = vpop.xlane.xlu0 %540
  %v542 = vadd.f32 %v537, %v538
  %543 = vadd.xlane.f32.xlu0 %v542
  %v544 = vpop.xlane.xlu0 %543
  %v545 = vrcp.pop 256.0
  %v546 = vmul.f32 %v541, %v545
  %v547 = vmul.f32 %v544, %v545
  %v548 = vsub.f32 %v535, %v546
  %v549 = vsub.f32 %v536, %v546
  %v550 = vsub.f32 %v537, %v547
  %v551 = vsub.f32 %v538, %v547
  %v552 = vmul.f32 %v548, %v548
  %v553 = vmul.f32 %v549, %v549
  %v554 = vmul.f32 %v550, %v550
  %v555 = vmul.f32 %v551, %v551
  %v556 = vadd.f32 %v552, %v553
  %557 = vadd.xlane.f32.xlu0 %v556
  %v558 = vpop.xlane.xlu0 %557
  %v559 = vadd.f32 %v554, %v555
  %560 = vadd.xlane.f32.xlu0 %v559
  %v561 = vpop.xlane.xlu0 %560
  %v562 = vmul.f32 %v558, %v545
  %v563 = vmul.f32 %v561, %v545
  %v564 = vadd.f32 %v562, 1e-05
  %v565 = vadd.f32 %v563, 1e-05
  %v566 = vrsqrt.pop %v564
  %v567 = vrsqrt.pop %v565
  %v568 = vmul.f32 %v548, %v566
  %v569 = vmul.f32 %v549, %v566
  %v570 = vmul.f32 %v550, %v567
  %v571 = vmul.f32 %v551, %v567
  %v572 = vld [vmem:[%s4] sm:$0x3]
  %v574 = vlaneseq
  %v575 = vshrl.u32 %v574, 7
  %v576 = vsub.s32 0, %v575
  %v577 = vrot.slane %v572, %v576
  %v578 = vlaneseq
  %v579 = vshrl.u32 %v578, 7
  %v580 = vsub.s32 1, %v579
  %v581 = vrot.slane %v572, %v580
  %v584 = vmul.f32 %v568, %v577
  %v585 = vmul.f32 %v569, %v581
  %v586 = vmul.f32 %v570, %v577
  %v587 = vmul.f32 %v571, %v581
  %v588 = vld [vmem:[%s5] sm:$0x3]
  %v590 = vlaneseq
  %v591 = vshrl.u32 %v590, 7
  %v592 = vsub.s32 0, %v591
  %v593 = vrot.slane %v588, %v592
  %v594 = vlaneseq
  %v595 = vshrl.u32 %v594, 7
  %v596 = vsub.s32 1, %v595
  %v597 = vrot.slane %v588, %v596
  %v600 = vadd.f32 %v584, %v593
  %v601 = vadd.f32 %v585, %v597
  %v602 = vadd.f32 %v586, %v593
  %v603 = vadd.f32 %v587, %v597
  %v604 = vpack.c.bf16 %v602, %v600
  %v605 = vpack.c.bf16 %v603, %v601
  %v608 = vunpack.c.l.b16 %v604
  %v609 = vunpack.c.l.b16 %v605
  %v610 = vunpack.c.h.b16 %v604
  %v611 = vunpack.c.h.b16 %v605
  %v612 = vpack.c.b16 %v609, %v608
  %v613 = vpack.c.b16 %v611, %v610
  %616 = vst [vmem:[%s6] sm:$0xff] %v612
  %617 = vst [vmem:[%s6 + $0x8] sm:$0xff] %v613
  // Predicated region
  $region26: #{model_forward.17} parent=0 // pred_check
    _
  $region27: #{model_forward.17} parent=0 // pred_check_branch
    %619 = sbr.rel (0) target = $region29
  $region28: #{model_forward.17} parent=0 // pred_region
    _
  $region29: #{model_forward.17} parent=0 // pred_fallthru
    _
  // Predicated region
  $region30: #{model_forward.17} parent=0 // pred_check
    _
  $region31: #{model_forward.17} parent=0 // pred_check_branch
    %621 = sbr.rel (0) target = $region33
  $region32: #{model_forward.17} parent=0 // pred_region
    _
  $region33: #{model_forward.17} parent=0 // pred_fallthru
    _

// kernel: model_forward.23
$region0: #{model_forward.23}
  #allocation0 [shape = 'u32[]', space=smem, size = 0x4, offset = 0x4, fixed_abs, tag = 'smem constant byte address 0x4 - core index']
  #allocation1 [shape = 'u32[144,128]{1,0:T(1,128)}', space=vmem, size = 0x12000, scoped, tag = 'internal scratch']
  %s0 = inlined_call_operand.vmem [shape: bf16[2,8,256], index: 0, kind: input, shape index: {}]
  %s1 = inlined_call_operand.vmem [shape: f32[2,8,1], index: 1, kind: input, shape index: {}]
  %s2 = inlined_call_operand.hbm [shape: f32[2,256], index: 2, kind: output, shape index: {}]
  %s3 = sld [smem:[#allocation0]]
  $region18: #{model_forward.23} parent=0
    _
  %s5 = ssub.s32 1, %s3
  %s6 = scalar_select 0, %s5, %s3
  $region1: #{model_forward.23} parent=0
    #allocation2 [shape = 'u8[2048]{0}', space=vmem, size = 0x800, scoped, tag = 'output window, operand 0, single buffered']
    #allocation3 [shape = 's32[1]{0}', space=sflag, size = 0x4, scoped, tag = 'scoped memory for model_forward.23']
    %7 = vsyncpa [#allocation3], 0
    // Predicated region
    $region2: #{model_forward.23} parent=1 // pred_check
      _
    $region3: #{model_forward.23} parent=1 // pred_check_branch
      %9 = sbr.rel (0) target = $region5
    $region4: #{model_forward.23} parent=1 // pred_region
      _
    $region5: #{model_forward.23} parent=1 // pred_fallthru
      _
    // Predicated region
    $region6: #{model_forward.23} parent=1 // pred_check
      _
    $region7: #{model_forward.23} parent=1 // pred_check_branch
      %11 = sbr.rel (0) target = $region9
    $region8: #{model_forward.23} parent=1 // pred_region
      _
    $region9: #{model_forward.23} parent=1 // pred_fallthru
      _
    %v12 = vld [vmem:[%s0] sm:$0xff]
    %v13 = vld [vmem:[%s0 + $0x8] sm:$0xff]
    %v14 = vunpack.c.l.bf16 %v12
    %v15 = vunpack.c.h.bf16 %v12
    %v16 = vunpack.c.l.bf16 %v13
    %v17 = vunpack.c.h.bf16 %v13
    %v18 = vld [vmem:[%s1] sm:$0xff]
    %v19 = vld [vmem:[%s1 + $0x8] sm:$0xff]
    %21 = vset.pattern.permute.xlu0 0
    %22 = vperm.xlu0 %21, %v18
    %v23 = vpop.permute.xlu0 %22
    %26 = vset.pattern.permute.xlu0 0
    %27 = vperm.xlu0 %26, %v19
    %v28 = vpop.permute.xlu0 %27
    %v30 = vmul.f32 %v14, %v23
    %v31 = vmul.f32 %v15, %v23
    %v32 = vmul.f32 %v16, %v28
    %v33 = vmul.f32 %v17, %v28
    %v34 = vrot.slane %v30, 4
    %v35 = vadd.f32 %v30, %v34
    %v36 = vrot.slane %v35, 2
    %v37 = vadd.f32 %v35, %v36
    %v38 = vrot.slane %v37, 1
    %v39 = vadd.f32 %v37, %v38
    %v40 = vrot.slane %v31, 4
    %v41 = vadd.f32 %v31, %v40
    %v42 = vrot.slane %v41, 2
    %v43 = vadd.f32 %v41, %v42
    %v44 = vrot.slane %v43, 1
    %v45 = vadd.f32 %v43, %v44
    %v46 = vrot.slane %v32, 4
    %v47 = vadd.f32 %v32, %v46
    %v48 = vrot.slane %v47, 2
    %v49 = vadd.f32 %v47, %v48
    %v50 = vrot.slane %v49, 1
    %v51 = vadd.f32 %v49, %v50
    %v52 = vrot.slane %v33, 4
    %v53 = vadd.f32 %v33, %v52
    %v54 = vrot.slane %v53, 2
    %v55 = vadd.f32 %v53, %v54
    %v56 = vrot.slane %v55, 1
    %v57 = vadd.f32 %v55, %v56
    %vm58 = vcmask 7168
    %v59 = vsel %vm58, %v18, 0.0
    %v60 = vrot.slane %v59, 4
    %v61 = vadd.f32 %v59, %v60
    %v62 = vrot.slane %v61, 2
    %v63 = vadd.f32 %v61, %v62
    %v64 = vrot.slane %v63, 1
    %v65 = vadd.f32 %v63, %v64
    %v66 = vsel %vm58, %v19, 0.0
    %v67 = vrot.slane %v66, 4
    %v68 = vadd.f32 %v66, %v67
    %v69 = vrot.slane %v68, 2
    %v70 = vadd.f32 %v68, %v69
    %v71 = vrot.slane %v70, 1
    %v72 = vadd.f32 %v70, %v71
    %v73 = vmax.f32 %v65, 1.0
    %v74 = vmax.f32 %v72, 1.0
    %76 = vset.pattern.permute.xlu0 0
    %77 = vperm.xlu0 %76, %v73
    %v78 = vpop.permute.xlu0 %77
    %81 = vset.pattern.permute.xlu0 0
    %82 = vperm.xlu0 %81, %v74
    %v83 = vpop.permute.xlu0 %82
    %v85 = vrcp.pop %v78
    %v86 = vmul.f32 %v39, %v85
    %v87 = vmul.f32 %v45, %v85
    %v88 = vrcp.pop %v83
    %v89 = vmul.f32 %v51, %v88
    %v90 = vmul.f32 %v57, %v88
    %v91 = vmul.f32 %v86, %v86
    %v92 = vmul.f32 %v87, %v87
    %v93 = vmul.f32 %v89, %v89
    %v94 = vmul.f32 %v90, %v90
    %vm99 = vcmask 1041409
    %v100 = vsel %vm99, %v93, %v91
    %v101 = vsel %vm99, %v94, %v92
    %vm104 = vcmask 1041408
    %v105 = vsel %vm104, %v100, 0.0
    %v106 = vsel %vm104, %v101, 0.0
    %v107 = vadd.f32 %v105, %v106
    %108 = vadd.xlane.f32.xlu0 %v107
    %v109 = vpop.xlane.xlu0 %108
    %v110 = vrsqrt.pop %v109
    %v111 = vmul.f32 %v109, %v110
    %vm112 = vcmp.eq.f32.partialorder %v109, inf
    %v113 = vsel %vm112, %v109, %v111
    %vm114 = vcmp.eq.f32.partialorder %v109, 0.0
    %v115 = vand.u32 %v109, 2147483648
    %v116 = vsel %vm114, %v115, %v113
    %v117 = vmax.f32 %v116, 1e-12
    %v119 = vrot.slane %v117, 1
    %v122 = vrcp.pop %v117
    %v123 = vmul.f32 %v86, %v122
    %v124 = vmul.f32 %v87, %v122
    %v125 = vrcp.pop %v119
    %v126 = vmul.f32 %v89, %v125
    %v127 = vmul.f32 %v90, %v125
    %v132 = vcombine.low %v123, %v124
    %v134 = vunpack.c.l.s4 1983009808
    %v135 = vunpack.c.0.s8 %v134
    %v136 = vlaneseq
    %v137 = vshrl.u32 %v136, 7
    %v138 = vsub.s32 %v135, %v137
    %v139 = vrot.slane %v132, %v138
    %v140 = vcombine.low %v126, %v127
    %v142 = vunpack.c.l.s4 1983009808
    %v143 = vunpack.c.0.s8 %v142
    %v144 = vlaneseq
    %v145 = vshrl.u32 %v144, 7
    %v146 = vsub.s32 %v143, %v145
    %v147 = vrot.slane %v140, %v146
    %vm148 = vcmask 1044484
    %v149 = vsel %vm148, %v139, %v139
    %vm150 = vcmask 1046534
    %v151 = vsel %vm150, %v139, %v149
    %v152 = vrot.slane %v147, 7
    %v153 = vsel %vm99, %v152, %v151
    %vm154 = vcmask 1043459
    %v155 = vsel %vm154, %v152, %v153
    %vm156 = vcmask 1045509
    %v157 = vsel %vm156, %v152, %v155
    %vm158 = vcmask 1047559
    %v159 = vsel %vm158, %v152, %v157
    %161 = vst [vmem:[#allocation2] sm:$0xf] %v159
    // Predicated region
    $region10: #{model_forward.23} parent=1 // pred_check
      _
    $region11: #{model_forward.23} parent=1 // pred_check_branch
      %163 = sbr.rel (0) target = $region13
    $region12: #{model_forward.23} parent=1 // pred_region
      %s165 = ssub.s32 64, 64
      %166 = vsyncadd [#allocation3], %s165
      %s168 = sshll.u32 [#allocation2], 4
      %s169 = int_to_ptr.vmem [resolvable:$true] %s168
      %171 = dma.vmem_to_hbm [thread:$0]  %s169, 64, %s2, [#allocation3]
    $region13: #{model_forward.23} parent=1 // pred_fallthru
      _
    // Predicated region
    $region14: #{model_forward.23} parent=1 // pred_check
      _
    $region15: #{model_forward.23} parent=1 // pred_check_branch
      %173 = sbr.rel (0) target = $region17
    $region16: #{model_forward.23} parent=1 // pred_region
      %174 = dma.done [#allocation3], 64
    $region17: #{model_forward.23} parent=1 // pred_fallthru
      _
    %175 = vsyncpa [#allocation3], 1

// kernel: model_forward.18
$region0: #{model_forward.18}
  #allocation0 [shape = 'u32[]', space=smem, size = 0x4, offset = 0x4, fixed_abs, tag = 'smem constant byte address 0x4 - core index']
  #allocation1 [shape = 'u32[144,128]{1,0:T(1,128)}', space=vmem, size = 0x12000, scoped, tag = 'internal scratch']
  %s0 = inlined_call_operand.vmem [shape: bf16[16,256], index: 0, kind: input, shape index: {}]
  %s1 = inlined_call_operand.vmem [shape: bf16[256,768], index: 1, kind: input, shape index: {}]
  %s2 = inlined_call_operand.vmem [shape: f32[1,768], index: 2, kind: input, shape index: {}]
  %s3 = inlined_call_operand.vmem [shape: bf16[16,768], index: 3, kind: output, shape index: {}]
  %s4 = sld [smem:[#allocation0]]
  $region22: #{model_forward.18} parent=0
    _
  %s6 = ssub.s32 1, %s4
  %s7 = scalar_select 0, %s6, %s4
  // Predicated region
  $region2: #{model_forward.18} parent=0 // pred_check
    _
  $region3: #{model_forward.18} parent=0 // pred_check_branch
    %9 = sbr.rel (0) target = $region5
  $region4: #{model_forward.18} parent=0 // pred_region
    _
  $region5: #{model_forward.18} parent=0 // pred_fallthru
    _
  // Predicated region
  $region6: #{model_forward.18} parent=0 // pred_check
    _
  $region7: #{model_forward.18} parent=0 // pred_check_branch
    %11 = sbr.rel (0) target = $region9
  $region8: #{model_forward.18} parent=0 // pred_region
    _
  $region9: #{model_forward.18} parent=0 // pred_fallthru
    _
  // Predicated region
  $region10: #{model_forward.18} parent=0 // pred_check
    _
  $region11: #{model_forward.18} parent=0 // pred_check_branch
    %13 = sbr.rel (0) target = $region13
  $region12: #{model_forward.18} parent=0 // pred_region
    _
  $region13: #{model_forward.18} parent=0 // pred_fallthru
    _
  %v14 = vld [vmem:[%s0] sm:$0xff]
  %v15 = vld [vmem:[%s0 + $0x8] sm:$0xff]
  %v16 = vld [vmem:[%s1] sm:$0xff]
  %v17 = vld [vmem:[%s1 + $0x8] sm:$0xff]
  %v18 = vld [vmem:[%s1 + $0x10] sm:$0xff]
  %v19 = vld [vmem:[%s1 + $0x18] sm:$0xff]
  %v20 = vld [vmem:[%s1 + $0x20] sm:$0xff]
  %v21 = vld [vmem:[%s1 + $0x28] sm:$0xff]
  %v22 = vld [vmem:[%s1 + $0x30] sm:$0xff]
  %v23 = vld [vmem:[%s1 + $0x38] sm:$0xff]
  %v24 = vld [vmem:[%s1 + $0x40] sm:$0xff]
  %v25 = vld [vmem:[%s1 + $0x48] sm:$0xff]
  %v26 = vld [vmem:[%s1 + $0x50] sm:$0xff]
  %v27 = vld [vmem:[%s1 + $0x58] sm:$0xff]
  %v28 = vld [vmem:[%s1 + $0x60] sm:$0xff]
  %v29 = vld [vmem:[%s1 + $0x68] sm:$0xff]
  %v30 = vld [vmem:[%s1 + $0x70] sm:$0xff]
  %v31 = vld [vmem:[%s1 + $0x78] sm:$0xff]
  %v32 = vld [vmem:[%s1 + $0x80] sm:$0xff]
  %v33 = vld [vmem:[%s1 + $0x88] sm:$0xff]
  %v34 = vld [vmem:[%s1 + $0x90] sm:$0xff]
  %v35 = vld [vmem:[%s1 + $0x98] sm:$0xff]
  %v36 = vld [vmem:[%s1 + $0xa0] sm:$0xff]
  %v37 = vld [vmem:[%s1 + $0xa8] sm:$0xff]
  %v38 = vld [vmem:[%s1 + $0xb0] sm:$0xff]
  %v39 = vld [vmem:[%s1 + $0xb8] sm:$0xff]
  %v40 = vld [vmem:[%s1 + $0xc0] sm:$0xff]
  %v41 = vld [vmem:[%s1 + $0xc8] sm:$0xff]
  %v42 = vld [vmem:[%s1 + $0xd0] sm:$0xff]
  %v43 = vld [vmem:[%s1 + $0xd8] sm:$0xff]
  %v44 = vld [vmem:[%s1 + $0xe0] sm:$0xff]
  %v45 = vld [vmem:[%s1 + $0xe8] sm:$0xff]
  %v46 = vld [vmem:[%s1 + $0xf0] sm:$0xff]
  %v47 = vld [vmem:[%s1 + $0xf8] sm:$0xff]
  %v48 = vld [vmem:[%s1 + $0x100] sm:$0xff]
  %v49 = vld [vmem:[%s1 + $0x108] sm:$0xff]
  %v50 = vld [vmem:[%s1 + $0x110] sm:$0xff]
  %v51 = vld [vmem:[%s1 + $0x118] sm:$0xff]
  %v52 = vld [vmem:[%s1 + $0x120] sm:$0xff]
  %v53 = vld [vmem:[%s1 + $0x128] sm:$0xff]
  %v54 = vld [vmem:[%s1 + $0x130] sm:$0xff]
  %v55 = vld [vmem:[%s1 + $0x138] sm:$0xff]
  %v56 = vld [vmem:[%s1 + $0x140] sm:$0xff]
  %v57 = vld [vmem:[%s1 + $0x148] sm:$0xff]
  %v58 = vld [vmem:[%s1 + $0x150] sm:$0xff]
  %v59 = vld [vmem:[%s1 + $0x158] sm:$0xff]
  %v60 = vld [vmem:[%s1 + $0x160] sm:$0xff]
  %v61 = vld [vmem:[%s1 + $0x168] sm:$0xff]
  %v62 = vld [vmem:[%s1 + $0x170] sm:$0xff]
  %v63 = vld [vmem:[%s1 + $0x178] sm:$0xff]
  %v64 = vld [vmem:[%s1 + $0x180] sm:$0xff]
  %v65 = vld [vmem:[%s1 + $0x188] sm:$0xff]
  %v66 = vld [vmem:[%s1 + $0x190] sm:$0xff]
  %v67 = vld [vmem:[%s1 + $0x198] sm:$0xff]
  %v68 = vld [vmem:[%s1 + $0x1a0] sm:$0xff]
  %v69 = vld [vmem:[%s1 + $0x1a8] sm:$0xff]
  %v70 = vld [vmem:[%s1 + $0x1b0] sm:$0xff]
  %v71 = vld [vmem:[%s1 + $0x1b8] sm:$0xff]
  %v72 = vld [vmem:[%s1 + $0x1c0] sm:$0xff]
  %v73 = vld [vmem:[%s1 + $0x1c8] sm:$0xff]
  %v74 = vld [vmem:[%s1 + $0x1d0] sm:$0xff]
  %v75 = vld [vmem:[%s1 + $0x1d8] sm:$0xff]
  %v76 = vld [vmem:[%s1 + $0x1e0] sm:$0xff]
  %v77 = vld [vmem:[%s1 + $0x1e8] sm:$0xff]
  %v78 = vld [vmem:[%s1 + $0x1f0] sm:$0xff]
  %v79 = vld [vmem:[%s1 + $0x1f8] sm:$0xff]
  %v80 = vld [vmem:[%s1 + $0x200] sm:$0xff]
  %v81 = vld [vmem:[%s1 + $0x208] sm:$0xff]
  %v82 = vld [vmem:[%s1 + $0x210] sm:$0xff]
  %v83 = vld [vmem:[%s1 + $0x218] sm:$0xff]
  %v84 = vld [vmem:[%s1 + $0x220] sm:$0xff]
  %v85 = vld [vmem:[%s1 + $0x228] sm:$0xff]
  %v86 = vld [vmem:[%s1 + $0x230] sm:$0xff]
  %v87 = vld [vmem:[%s1 + $0x238] sm:$0xff]
  %v88 = vld [vmem:[%s1 + $0x240] sm:$0xff]
  %v89 = vld [vmem:[%s1 + $0x248] sm:$0xff]
  %v90 = vld [vmem:[%s1 + $0x250] sm:$0xff]
  %v91 = vld [vmem:[%s1 + $0x258] sm:$0xff]
  %v92 = vld [vmem:[%s1 + $0x260] sm:$0xff]
  %v93 = vld [vmem:[%s1 + $0x268] sm:$0xff]
  %v94 = vld [vmem:[%s1 + $0x270] sm:$0xff]
  %v95 = vld [vmem:[%s1 + $0x278] sm:$0xff]
  %v96 = vld [vmem:[%s1 + $0x280] sm:$0xff]
  %v97 = vld [vmem:[%s1 + $0x288] sm:$0xff]
  %v98 = vld [vmem:[%s1 + $0x290] sm:$0xff]
  %v99 = vld [vmem:[%s1 + $0x298] sm:$0xff]
  %v100 = vld [vmem:[%s1 + $0x2a0] sm:$0xff]
  %v101 = vld [vmem:[%s1 + $0x2a8] sm:$0xff]
  %v102 = vld [vmem:[%s1 + $0x2b0] sm:$0xff]
  %v103 = vld [vmem:[%s1 + $0x2b8] sm:$0xff]
  %v104 = vld [vmem:[%s1 + $0x2c0] sm:$0xff]
  %v105 = vld [vmem:[%s1 + $0x2c8] sm:$0xff]
  %v106 = vld [vmem:[%s1 + $0x2d0] sm:$0xff]
  %v107 = vld [vmem:[%s1 + $0x2d8] sm:$0xff]
  %v108 = vld [vmem:[%s1 + $0x2e0] sm:$0xff]
  %v109 = vld [vmem:[%s1 + $0x2e8] sm:$0xff]
  %v110 = vld [vmem:[%s1 + $0x2f0] sm:$0xff]
  %v111 = vld [vmem:[%s1 + $0x2f8] sm:$0xff]
  %v112 = vld [vmem:[%s2] sm:$0x3f]
  %v114 = vlaneseq
  %v115 = vshrl.u32 %v114, 7
  %v116 = vsub.s32 0, %v115
  %v117 = vrot.slane %v112, %v116
  %v118 = vlaneseq
  %v119 = vshrl.u32 %v118, 7
  %v120 = vsub.s32 1, %v119
  %v121 = vrot.slane %v112, %v120
  %v122 = vlaneseq
  %v123 = vshrl.u32 %v122, 7
  %v124 = vsub.s32 2, %v123
  %v125 = vrot.slane %v112, %v124
  %v126 = vlaneseq
  %v127 = vshrl.u32 %v126, 7
  %v128 = vsub.s32 3, %v127
  %v129 = vrot.slane %v112, %v128
  %v130 = vlaneseq
  %v131 = vshrl.u32 %v130, 7
  %v132 = vsub.s32 4, %v131
  %v133 = vrot.slane %v112, %v132
  %v134 = vlaneseq
  %v135 = vshrl.u32 %v134, 7
  %v136 = vsub.s32 5, %v135
  %v137 = vrot.slane %v112, %v136
  %v146 = vunpack.c.l.b16 %v14
  %v147 = vunpack.c.h.b16 %v14
  %v148 = vunpack.c.l.b16 %v15
  %v149 = vunpack.c.h.b16 %v15
  %v150 = vpack.c.b16 %v148, %v146
  %v151 = vpack.c.b16 %v149, %v147
  %v250 = vunpack.c.l.b16 %v16
  %v251 = vunpack.c.h.b16 %v16
  %v252 = vunpack.c.l.b16 %v17
  %v253 = vunpack.c.h.b16 %v17
  %v254 = vunpack.c.l.b16 %v18
  %v255 = vunpack.c.h.b16 %v18
  %v256 = vunpack.c.l.b16 %v19
  %v257 = vunpack.c.h.b16 %v19
  %v258 = vunpack.c.l.b16 %v20
  %v259 = vunpack.c.h.b16 %v20
  %v260 = vunpack.c.l.b16 %v21
  %v261 = vunpack.c.h.b16 %v21
  %v262 = vunpack.c.l.b16 %v22
  %v263 = vunpack.c.h.b16 %v22
  %v264 = vunpack.c.l.b16 %v23
  %v265 = vunpack.c.h.b16 %v23
  %v266 = vunpack.c.l.b16 %v24
  %v267 = vunpack.c.h.b16 %v24
  %v268 = vunpack.c.l.b16 %v25
  %v269 = vunpack.c.h.b16 %v25
  %v270 = vunpack.c.l.b16 %v26
  %v271 = vunpack.c.h.b16 %v26
  %v272 = vunpack.c.l.b16 %v27
  %v273 = vunpack.c.h.b16 %v27
  %v274 = vunpack.c.l.b16 %v28
  %v275 = vunpack.c.h.b16 %v28
  %v276 = vunpack.c.l.b16 %v29
  %v277 = vunpack.c.h.b16 %v29
  %v278 = vunpack.c.l.b16 %v30
  %v279 = vunpack.c.h.b16 %v30
  %v280 = vunpack.c.l.b16 %v31
  %v281 = vunpack.c.h.b16 %v31
  %v282 = vunpack.c.l.b16 %v32
  %v283 = vunpack.c.h.b16 %v32
  %v284 = vunpack.c.l.b16 %v33
  %v285 = vunpack.c.h.b16 %v33
  %v286 = vunpack.c.l.b16 %v34
  %v287 = vunpack.c.h.b16 %v34
  %v288 = vunpack.c.l.b16 %v35
  %v289 = vunpack.c.h.b16 %v35
  %v290 = vunpack.c.l.b16 %v36
  %v291 = vunpack.c.h.b16 %v36
  %v292 = vunpack.c.l.b16 %v37
  %v293 = vunpack.c.h.b16 %v37
  %v294 = vunpack.c.l.b16 %v38
  %v295 = vunpack.c.h.b16 %v38
  %v296 = vunpack.c.l.b16 %v39
  %v297 = vunpack.c.h.b16 %v39
  %v298 = vunpack.c.l.b16 %v40
  %v299 = vunpack.c.h.b16 %v40
  %v300 = vunpack.c.l.b16 %v41
  %v301 = vunpack.c.h.b16 %v41
  %v302 = vunpack.c.l.b16 %v42
  %v303 = vunpack.c.h.b16 %v42
  %v304 = vunpack.c.l.b16 %v43
  %v305 = vunpack.c.h.b16 %v43
  %v306 = vunpack.c.l.b16 %v44
  %v307 = vunpack.c.h.b16 %v44
  %v308 = vunpack.c.l.b16 %v45
  %v309 = vunpack.c.h.b16 %v45
  %v310 = vunpack.c.l.b16 %v46
  %v311 = vunpack.c.h.b16 %v46
  %v312 = vunpack.c.l.b16 %v47
  %v313 = vunpack.c.h.b16 %v47
  %v314 = vunpack.c.l.b16 %v48
  %v315 = vunpack.c.h.b16 %v48
  %v316 = vunpack.c.l.b16 %v49
  %v317 = vunpack.c.h.b16 %v49
  %v318 = vunpack.c.l.b16 %v50
  %v319 = vunpack.c.h.b16 %v50
  %v320 = vunpack.c.l.b16 %v51
  %v321 = vunpack.c.h.b16 %v51
  %v322 = vunpack.c.l.b16 %v52
  %v323 = vunpack.c.h.b16 %v52
  %v324 = vunpack.c.l.b16 %v53
  %v325 = vunpack.c.h.b16 %v53
  %v326 = vunpack.c.l.b16 %v54
  %v327 = vunpack.c.h.b16 %v54
  %v328 = vunpack.c.l.b16 %v55
  %v329 = vunpack.c.h.b16 %v55
  %v330 = vunpack.c.l.b16 %v56
  %v331 = vunpack.c.h.b16 %v56
  %v332 = vunpack.c.l.b16 %v57
  %v333 = vunpack.c.h.b16 %v57
  %v334 = vunpack.c.l.b16 %v58
  %v335 = vunpack.c.h.b16 %v58
  %v336 = vunpack.c.l.b16 %v59
  %v337 = vunpack.c.h.b16 %v59
  %v338 = vunpack.c.l.b16 %v60
  %v339 = vunpack.c.h.b16 %v60
  %v340 = vunpack.c.l.b16 %v61
  %v341 = vunpack.c.h.b16 %v61
  %v342 = vunpack.c.l.b16 %v62
  %v343 = vunpack.c.h.b16 %v62
  %v344 = vunpack.c.l.b16 %v63
  %v345 = vunpack.c.h.b16 %v63
  %v346 = vunpack.c.l.b16 %v64
  %v347 = vunpack.c.h.b16 %v64
  %v348 = vunpack.c.l.b16 %v65
  %v349 = vunpack.c.h.b16 %v65
  %v350 = vunpack.c.l.b16 %v66
  %v351 = vunpack.c.h.b16 %v66
  %v352 = vunpack.c.l.b16 %v67
  %v353 = vunpack.c.h.b16 %v67
  %v354 = vunpack.c.l.b16 %v68
  %v355 = vunpack.c.h.b16 %v68
  %v356 = vunpack.c.l.b16 %v69
  %v357 = vunpack.c.h.b16 %v69
  %v358 = vunpack.c.l.b16 %v70
  %v359 = vunpack.c.h.b16 %v70
  %v360 = vunpack.c.l.b16 %v71
  %v361 = vunpack.c.h.b16 %v71
  %v362 = vunpack.c.l.b16 %v72
  %v363 = vunpack.c.h.b16 %v72
  %v364 = vunpack.c.l.b16 %v73
  %v365 = vunpack.c.h.b16 %v73
  %v366 = vunpack.c.l.b16 %v74
  %v367 = vunpack.c.h.b16 %v74
  %v368 = vunpack.c.l.b16 %v75
  %v369 = vunpack.c.h.b16 %v75
  %v370 = vunpack.c.l.b16 %v76
  %v371 = vunpack.c.h.b16 %v76
  %v372 = vunpack.c.l.b16 %v77
  %v373 = vunpack.c.h.b16 %v77
  %v374 = vunpack.c.l.b16 %v78
  %v375 = vunpack.c.h.b16 %v78
  %v376 = vunpack.c.l.b16 %v79
  %v377 = vunpack.c.h.b16 %v79
  %v378 = vunpack.c.l.b16 %v80
  %v379 = vunpack.c.h.b16 %v80
  %v380 = vunpack.c.l.b16 %v81
  %v381 = vunpack.c.h.b16 %v81
  %v382 = vunpack.c.l.b16 %v82
  %v383 = vunpack.c.h.b16 %v82
  %v384 = vunpack.c.l.b16 %v83
  %v385 = vunpack.c.h.b16 %v83
  %v386 = vunpack.c.l.b16 %v84
  %v387 = vunpack.c.h.b16 %v84
  %v388 = vunpack.c.l.b16 %v85
  %v389 = vunpack.c.h.b16 %v85
  %v390 = vunpack.c.l.b16 %v86
  %v391 = vunpack.c.h.b16 %v86
  %v392 = vunpack.c.l.b16 %v87
  %v393 = vunpack.c.h.b16 %v87
  %v394 = vunpack.c.l.b16 %v88
  %v395 = vunpack.c.h.b16 %v88
  %v396 = vunpack.c.l.b16 %v89
  %v397 = vunpack.c.h.b16 %v89
  %v398 = vunpack.c.l.b16 %v90
  %v399 = vunpack.c.h.b16 %v90
  %v400 = vunpack.c.l.b16 %v91
  %v401 = vunpack.c.h.b16 %v91
  %v402 = vunpack.c.l.b16 %v92
  %v403 = vunpack.c.h.b16 %v92
  %v404 = vunpack.c.l.b16 %v93
  %v405 = vunpack.c.h.b16 %v93
  %v406 = vunpack.c.l.b16 %v94
  %v407 = vunpack.c.h.b16 %v94
  %v408 = vunpack.c.l.b16 %v95
  %v409 = vunpack.c.h.b16 %v95
  %v410 = vunpack.c.l.b16 %v96
  %v411 = vunpack.c.h.b16 %v96
  %v412 = vunpack.c.l.b16 %v97
  %v413 = vunpack.c.h.b16 %v97
  %v414 = vunpack.c.l.b16 %v98
  %v415 = vunpack.c.h.b16 %v98
  %v416 = vunpack.c.l.b16 %v99
  %v417 = vunpack.c.h.b16 %v99
  %v418 = vunpack.c.l.b16 %v100
  %v419 = vunpack.c.h.b16 %v100
  %v420 = vunpack.c.l.b16 %v101
  %v421 = vunpack.c.h.b16 %v101
  %v422 = vunpack.c.l.b16 %v102
  %v423 = vunpack.c.h.b16 %v102
  %v424 = vunpack.c.l.b16 %v103
  %v425 = vunpack.c.h.b16 %v103
  %v426 = vunpack.c.l.b16 %v104
  %v427 = vunpack.c.h.b16 %v104
  %v428 = vunpack.c.l.b16 %v105
  %v429 = vunpack.c.h.b16 %v105
  %v430 = vunpack.c.l.b16 %v106
  %v431 = vunpack.c.h.b16 %v106
  %v432 = vunpack.c.l.b16 %v107
  %v433 = vunpack.c.h.b16 %v107
  %v434 = vunpack.c.l.b16 %v108
  %v435 = vunpack.c.h.b16 %v108
  %v436 = vunpack.c.l.b16 %v109
  %v437 = vunpack.c.h.b16 %v109
  %v438 = vunpack.c.l.b16 %v110
  %v439 = vunpack.c.h.b16 %v110
  %v440 = vunpack.c.l.b16 %v111
  %v441 = vunpack.c.h.b16 %v111
  %v442 = vpack.c.b16 %v256, %v250
  %v443 = vpack.c.b16 %v257, %v251
  %v444 = vpack.c.b16 %v258, %v252
  %v445 = vpack.c.b16 %v259, %v253
  %v446 = vpack.c.b16 %v260, %v254
  %v447 = vpack.c.b16 %v261, %v255
  %v448 = vpack.c.b16 %v268, %v262
  %v449 = vpack.c.b16 %v269, %v263
  %v450 = vpack.c.b16 %v270, %v264
  %v451 = vpack.c.b16 %v271, %v265
  %v452 = vpack.c.b16 %v272, %v266
  %v453 = vpack.c.b16 %v273, %v267
  %v454 = vpack.c.b16 %v280, %v274
  %v455 = vpack.c.b16 %v281, %v275
  %v456 = vpack.c.b16 %v282, %v276
  %v457 = vpack.c.b16 %v283, %v277
  %v458 = vpack.c.b16 %v284, %v278
  %v459 = vpack.c.b16 %v285, %v279
  %v460 = vpack.c.b16 %v292, %v286
  %v461 = vpack.c.b16 %v293, %v287
  %v462 = vpack.c.b16 %v294, %v288
  %v463 = vpack.c.b16 %v295, %v289
  %v464 = vpack.c.b16 %v296, %v290
  %v465 = vpack.c.b16 %v297, %v291
  %v466 = vpack.c.b16 %v304, %v298
  %v467 = vpack.c.b16 %v305, %v299
  %v468 = vpack.c.b16 %v306, %v300
  %v469 = vpack.c.b16 %v307, %v301
  %v470 = vpack.c.b16 %v308, %v302
  %v471 = vpack.c.b16 %v309, %v303
  %v472 = vpack.c.b16 %v316, %v310
  %v473 = vpack.c.b16 %v317, %v311
  %v474 = vpack.c.b16 %v318, %v312
  %v475 = vpack.c.b16 %v319, %v313
  %v476 = vpack.c.b16 %v320, %v314
  %v477 = vpack.c.b16 %v321, %v315
  %v478 = vpack.c.b16 %v328, %v322
  %v479 = vpack.c.b16 %v329, %v323
  %v480 = vpack.c.b16 %v330, %v324
  %v481 = vpack.c.b16 %v331, %v325
  %v482 = vpack.c.b16 %v332, %v326
  %v483 = vpack.c.b16 %v333, %v327
  %v484 = vpack.c.b16 %v340, %v334
  %v485 = vpack.c.b16 %v341, %v335
  %v486 = vpack.c.b16 %v342, %v336
  %v487 = vpack.c.b16 %v343, %v337
  %v488 = vpack.c.b16 %v344, %v338
  %v489 = vpack.c.b16 %v345, %v339
  %v490 = vpack.c.b16 %v352, %v346
  %v491 = vpack.c.b16 %v353, %v347
  %v492 = vpack.c.b16 %v354, %v348
  %v493 = vpack.c.b16 %v355, %v349
  %v494 = vpack.c.b16 %v356, %v350
  %v495 = vpack.c.b16 %v357, %v351
  %v496 = vpack.c.b16 %v364, %v358
  %v497 = vpack.c.b16 %v365, %v359
  %v498 = vpack.c.b16 %v366, %v360
  %v499 = vpack.c.b16 %v367, %v361
  %v500 = vpack.c.b16 %v368, %v362
  %v501 = vpack.c.b16 %v369, %v363
  %v502 = vpack.c.b16 %v376, %v370
  %v503 = vpack.c.b16 %v377, %v371
  %v504 = vpack.c.b16 %v378, %v372
  %v505 = vpack.c.b16 %v379, %v373
  %v506 = vpack.c.b16 %v380, %v374
  %v507 = vpack.c.b16 %v381, %v375
  %v508 = vpack.c.b16 %v388, %v382
  %v509 = vpack.c.b16 %v389, %v383
  %v510 = vpack.c.b16 %v390, %v384
  %v511 = vpack.c.b16 %v391, %v385
  %v512 = vpack.c.b16 %v392, %v386
  %v513 = vpack.c.b16 %v393, %v387
  %v514 = vpack.c.b16 %v400, %v394
  %v515 = vpack.c.b16 %v401, %v395
  %v516 = vpack.c.b16 %v402, %v396
  %v517 = vpack.c.b16 %v403, %v397
  %v518 = vpack.c.b16 %v404, %v398
  %v519 = vpack.c.b16 %v405, %v399
  %v520 = vpack.c.b16 %v412, %v406
  %v521 = vpack.c.b16 %v413, %v407
  %v522 = vpack.c.b16 %v414, %v408
  %v523 = vpack.c.b16 %v415, %v409
  %v524 = vpack.c.b16 %v416, %v410
  %v525 = vpack.c.b16 %v417, %v411
  %v526 = vpack.c.b16 %v424, %v418
  %v527 = vpack.c.b16 %v425, %v419
  %v528 = vpack.c.b16 %v426, %v420
  %v529 = vpack.c.b16 %v427, %v421
  %v530 = vpack.c.b16 %v428, %v422
  %v531 = vpack.c.b16 %v429, %v423
  %v532 = vpack.c.b16 %v436, %v430
  %v533 = vpack.c.b16 %v437, %v431
  %v534 = vpack.c.b16 %v438, %v432
  %v535 = vpack.c.b16 %v439, %v433
  %v536 = vpack.c.b16 %v440, %v434
  %v537 = vpack.c.b16 %v441, %v435
  %634 = vmatprep.subr.bf16.mxu0 %v485
  %635 = vmatpush1.bf16.msra.mxu0 %v484
  %636 = vmatprep.subr.bf16.mxu0 %v479
  %637 = vmatpush1.bf16.msra.mxu0 %v478
  %638 = vmatprep.subr.bf16.mxu0 %v473
  %639 = vmatpush1.bf16.msra.mxu0 %v472
  %640 = vmatprep.subr.bf16.mxu0 %v467
  %641 = vmatpush1.bf16.msra.mxu0 %v466
  %642 = vmatprep.subr.bf16.mxu0 %v461
  %643 = vmatpush1.bf16.msra.mxu0 %v460
  %644 = vmatprep.subr.bf16.mxu0 %v455
  %645 = vmatpush1.bf16.msra.mxu0 %v454
  %646 = vmatprep.subr.bf16.mxu0 %v449
  %647 = vmatpush1.bf16.msra.mxu0 %v448
  %648 = vmatprep.subr.bf16.mxu0 %v443
  %649 = vmatpush1.bf16.msra.mxu0 %v442
  %650 = vmatprep.subr.bf16.mxu0 %v533
  %651 = vmatpush2.bf16.msra.mxu0 %v532
  %652 = vmatprep.subr.bf16.mxu0 %v527
  %653 = vmatpush2.bf16.msra.mxu0 %v526
  %654 = vmatprep.subr.bf16.mxu0 %v521
  %655 = vmatpush2.bf16.msra.mxu0 %v520
  %656 = vmatprep.subr.bf16.mxu0 %v515
  %657 = vmatpush2.bf16.msra.mxu0 %v514
  %658 = vmatprep.subr.bf16.mxu0 %v509
  %659 = vmatpush2.bf16.msra.mxu0 %v508
  %660 = vmatprep.subr.bf16.mxu0 %v503
  %661 = vmatpush2.bf16.msra.mxu0 %v502
  %662 = vmatprep.subr.bf16.mxu0 %v497
  %663 = vmatpush2.bf16.msra.mxu0 %v496
  %664 = vmatprep.subr.bf16.mxu0 %v491
  %665 = vmatpush2.bf16.msra.mxu0 %v490
  %666 = vmatprep.mubr.bf16.mxu0 %v151
  %667 = vmatmul.mubr.bf16.gmra.mxu0 %v150
  %v668 = vpop.f32.mrf.mxu0
  %v669 = vadd.f32 %v117, %v668
  %v670 = vpop.f32.mrf.mxu0
  %v671 = vadd.f32 %v121, %v670
  %v672 = vpop.f32.mrf.mxu0
  %v673 = vadd.f32 %v117, %v672
  %v674 = vpop.f32.mrf.mxu0
  %v675 = vadd.f32 %v121, %v674
  %676 = vdwg.mxu0
  %677 = vmatprep.subr.bf16.mxu0 %v487
  %678 = vmatpush1.bf16.msra.mxu0 %v486
  %679 = vmatprep.subr.bf16.mxu0 %v481
  %680 = vmatpush1.bf16.msra.mxu0 %v480
  %681 = vmatprep.subr.bf16.mxu0 %v475
  %682 = vmatpush1.bf16.msra.mxu0 %v474
  %683 = vmatprep.subr.bf16.mxu0 %v469
  %684 = vmatpush1.bf16.msra.mxu0 %v468
  %685 = vmatprep.subr.bf16.mxu0 %v463
  %686 = vmatpush1.bf16.msra.mxu0 %v462
  %687 = vmatprep.subr.bf16.mxu0 %v457
  %688 = vmatpush1.bf16.msra.mxu0 %v456
  %689 = vmatprep.subr.bf16.mxu0 %v451
  %690 = vmatpush1.bf16.msra.mxu0 %v450
  %691 = vmatprep.subr.bf16.mxu0 %v445
  %692 = vmatpush1.bf16.msra.mxu0 %v444
  %693 = vmatprep.subr.bf16.mxu0 %v535
  %694 = vmatpush2.bf16.msra.mxu0 %v534
  %695 = vmatprep.subr.bf16.mxu0 %v529
  %696 = vmatpush2.bf16.msra.mxu0 %v528
  %697 = vmatprep.subr.bf16.mxu0 %v523
  %698 = vmatpush2.bf16.msra.mxu0 %v522
  %699 = vmatprep.subr.bf16.mxu0 %v517
  %700 = vmatpush2.bf16.msra.mxu0 %v516
  %701 = vmatprep.subr.bf16.mxu0 %v511
  %702 = vmatpush2.bf16.msra.mxu0 %v510
  %703 = vmatprep.subr.bf16.mxu0 %v505
  %704 = vmatpush2.bf16.msra.mxu0 %v504
  %705 = vmatprep.subr.bf16.mxu0 %v499
  %706 = vmatpush2.bf16.msra.mxu0 %v498
  %707 = vmatprep.subr.bf16.mxu0 %v493
  %708 = vmatpush2.bf16.msra.mxu0 %v492
  %709 = vmatprep.mubr.bf16.mxu0 %v151
  %710 = vmatmul.mubr.bf16.gmra.mxu0 %v150
  %v711 = vpop.f32.mrf.mxu0
  %v712 = vadd.f32 %v125, %v711
  %v713 = vpop.f32.mrf.mxu0
  %v714 = vadd.f32 %v129, %v713
  %v715 = vpop.f32.mrf.mxu0
  %v716 = vadd.f32 %v125, %v715
  %v717 = vpop.f32.mrf.mxu0
  %v718 = vadd.f32 %v129, %v717
  %719 = vdwg.mxu0
  %720 = vmatprep.subr.bf16.mxu0 %v489
  %721 = vmatpush1.bf16.msra.mxu0 %v488
  %722 = vmatprep.subr.bf16.mxu0 %v483
  %723 = vmatpush1.bf16.msra.mxu0 %v482
  %724 = vmatprep.subr.bf16.mxu0 %v477
  %725 = vmatpush1.bf16.msra.mxu0 %v476
  %726 = vmatprep.subr.bf16.mxu0 %v471
  %727 = vmatpush1.bf16.msra.mxu0 %v470
  %728 = vmatprep.subr.bf16.mxu0 %v465
  %729 = vmatpush1.bf16.msra.mxu0 %v464
  %730 = vmatprep.subr.bf16.mxu0 %v459
  %731 = vmatpush1.bf16.msra.mxu0 %v458
  %732 = vmatprep.subr.bf16.mxu0 %v453
  %733 = vmatpush1.bf16.msra.mxu0 %v452
  %734 = vmatprep.subr.bf16.mxu0 %v447
  %735 = vmatpush1.bf16.msra.mxu0 %v446
  %736 = vmatprep.subr.bf16.mxu0 %v537
  %737 = vmatpush2.bf16.msra.mxu0 %v536
  %738 = vmatprep.subr.bf16.mxu0 %v531
  %739 = vmatpush2.bf16.msra.mxu0 %v530
  %740 = vmatprep.subr.bf16.mxu0 %v525
  %741 = vmatpush2.bf16.msra.mxu0 %v524
  %742 = vmatprep.subr.bf16.mxu0 %v519
  %743 = vmatpush2.bf16.msra.mxu0 %v518
  %744 = vmatprep.subr.bf16.mxu0 %v513
  %745 = vmatpush2.bf16.msra.mxu0 %v512
  %746 = vmatprep.subr.bf16.mxu0 %v507
  %747 = vmatpush2.bf16.msra.mxu0 %v506
  %748 = vmatprep.subr.bf16.mxu0 %v501
  %749 = vmatpush2.bf16.msra.mxu0 %v500
  %750 = vmatprep.subr.bf16.mxu0 %v495
  %751 = vmatpush2.bf16.msra.mxu0 %v494
  %752 = vmatprep.mubr.bf16.mxu0 %v151
  %753 = vmatmul.mubr.bf16.gmra.mxu0 %v150
  %v754 = vpop.f32.mrf.mxu0
  %v755 = vadd.f32 %v133, %v754
  %v756 = vpop.f32.mrf.mxu0
  %v757 = vadd.f32 %v137, %v756
  %v758 = vpop.f32.mrf.mxu0
  %v759 = vadd.f32 %v133, %v758
  %v760 = vpop.f32.mrf.mxu0
  %v761 = vadd.f32 %v137, %v760
  %762 = vdwg.mxu0
  %v763 = vpack.c.bf16 %v673, %v669
  %v764 = vpack.c.bf16 %v675, %v671
  %v765 = vpack.c.bf16 %v716, %v712
  %v766 = vpack.c.bf16 %v718, %v714
  %v767 = vpack.c.bf16 %v759, %v755
  %v768 = vpack.c.bf16 %v761, %v757
  %v775 = vunpack.c.l.b16 %v763
  %v776 = vunpack.c.l.b16 %v764
  %v777 = vunpack.c.l.b16 %v765
  %v778 = vunpack.c.l.b16 %v766
  %v779 = vunpack.c.l.b16 %v767
  %v780 = vunpack.c.l.b16 %v768
  %v781 = vunpack.c.h.b16 %v763
  %v782 = vunpack.c.h.b16 %v764
  %v783 = vunpack.c.h.b16 %v765
  %v784 = vunpack.c.h.b16 %v766
  %v785 = vunpack.c.h.b16 %v767
  %v786 = vunpack.c.h.b16 %v768
  %v787 = vpack.c.b16 %v776, %v775
  %v788 = vpack.c.b16 %v778, %v777
  %v789 = vpack.c.b16 %v780, %v779
  %v790 = vpack.c.b16 %v782, %v781
  %v791 = vpack.c.b16 %v784, %v783
  %v792 = vpack.c.b16 %v786, %v785
  %799 = vst [vmem:[%s3] sm:$0xff] %v787
  %800 = vst [vmem:[%s3 + $0x8] sm:$0xff] %v788
  %801 = vst [vmem:[%s3 + $0x10] sm:$0xff] %v789
  %802 = vst [vmem:[%s3 + $0x18] sm:$0xff] %v790
  %803 = vst [vmem:[%s3 + $0x20] sm:$0xff] %v791
  %804 = vst [vmem:[%s3 + $0x28] sm:$0xff] %v792
  // Predicated region
  $region14: #{model_forward.18} parent=0 // pred_check
    _
  $region15: #{model_forward.18} parent=0 // pred_check_branch
    %806 = sbr.rel (0) target = $region17
  $region16: #{model_forward.18} parent=0 // pred_region
    _
  $region17: #{model_forward.18} parent=0 // pred_fallthru
    _
  // Predicated region
  $region18: #{model_forward.18} parent=0 // pred_check
    _
  $region19: #{model_forward.18} parent=0 // pred_check_branch
    %808 = sbr.rel (0) target = $region21
  $region20: #{model_forward.18} parent=0 // pred_region
    _
  $region21: #{model_forward.18} parent=0 // pred_fallthru
    _

</llo_original>
